<compile_context>
chip_gen: v7x
topology: tpu7x:2x2x1
jax: 0.10.0
libtpu: 0.0.40
codegen_flags: <defaults>
</compile_context>

<pallas_src>
import functools
import math

import jax
import jax.numpy as jnp
from jax.experimental import pallas as pl
from jax.experimental.pallas import tpu as pltpu

MIN_STD = 0.01
LN_EPS = 1e-5
HEAD_PAD = 128  # lane-dense padded width of the fused mean|sigma head output


def _layer_norm(x, g, b, eps=LN_EPS):
    mu = jnp.mean(x, axis=-1, keepdims=True)
    var = jnp.mean((x - mu) ** 2, axis=-1, keepdims=True)
    return (x - mu) * jax.lax.rsqrt(var + eps) * g + b


# ----------------------------- fused Pallas kernel -----------------------------

def _fused_reformer_kernel(
    x_ref, w_emb_ref, b_emb_ref,
    ln1_g_ref, ln1_b_ref, wqkv_ref, bqkv_ref, wo_ref, bo_ref,
    ln2_g_ref, ln2_b_ref, w1_ref, b1_ref, w2_ref, b2_ref,
    lnf_g_ref, lnf_b_ref, w_head_ref, b_head_ref,
    out_ref, *, depth, heads, hidden, y_dim, min_std):
    """One grid step = one batch element; whole model runs in VMEM."""
    H = hidden
    dh = H // heads
    scale = 1.0 / math.sqrt(dh)

    # Embedding Linear (tiny K=E matmul, kept in f32).
    x = x_ref[...].astype(jnp.float32)                                # (S, E)
    h = jnp.dot(x, w_emb_ref[...],
                preferred_element_type=jnp.float32) + b_emb_ref[...]  # (S, H)

    for d in range(depth):  # static unroll; weights stay resident in VMEM
        # ------------------ attention sub-block (pre-norm + residual) ----------
        xn = _layer_norm(h, ln1_g_ref[d], ln1_b_ref[d]).astype(jnp.bfloat16)
        qkv = jnp.dot(xn, wqkv_ref[d],
                      preferred_element_type=jnp.float32) + bqkv_ref[d]  # (S, 3H)
        q = qkv[:, :H]
        k = qkv[:, H:2 * H]
        v = qkv[:, 2 * H:]

        head_outs = []
        for hd in range(heads):  # static unroll over heads
            lo = hd * dh
            qh = q[:, lo:lo + dh].astype(jnp.bfloat16)
            kh = k[:, lo:lo + dh].astype(jnp.bfloat16)
            vh = v[:, lo:lo + dh].astype(jnp.bfloat16)
            s = jax.lax.dot_general(qh, kh, (((1,), (1,)), ((), ())),
                                    preferred_element_type=jnp.float32) * scale
            s = s - jnp.max(s, axis=-1, keepdims=True)
            p = jnp.exp(s)
            p = p * pl.reciprocal(jnp.sum(p, axis=-1, keepdims=True), approx=True)
            head_outs.append(jnp.dot(p.astype(jnp.bfloat16), vh,
                                     preferred_element_type=jnp.float32))
        o = jnp.concatenate(head_outs, axis=-1).astype(jnp.bfloat16)   # (S, H)
        o = jnp.dot(o, wo_ref[d],
                    preferred_element_type=jnp.float32) + bo_ref[d]
        h = h + o

        # ------------------ feed-forward sub-block (pre-norm + residual) -------
        xn = _layer_norm(h, ln2_g_ref[d], ln2_b_ref[d]).astype(jnp.bfloat16)
        f = jnp.dot(xn, w1_ref[d],
                    preferred_element_type=jnp.float32) + b1_ref[d]
        f = jax.nn.gelu(f, approximate=True).astype(jnp.bfloat16)      # tanh-GELU
        f = jnp.dot(f, w2_ref[d],
                    preferred_element_type=jnp.float32) + b2_ref[d]
        h = h + f

    # ---------------- final norm + fused lane-dense mean/std head --------------
    xn = _layer_norm(h, lnf_g_ref[...], lnf_b_ref[...]).astype(jnp.bfloat16)
    head = jnp.dot(xn, w_head_ref[...],
                   preferred_element_type=jnp.float32) + b_head_ref[...]  # (S, 128)
    # softplus(x) = max(x, 0) + log1p(exp(-|x|))
    sp = jnp.maximum(head, 0.0) + jnp.log1p(jnp.exp(-jnp.abs(head)))
    sigma = min_std + (1.0 - min_std) * sp
    col = jax.lax.broadcasted_iota(jnp.int32, head.shape, 1)
    is_sigma = jnp.logical_and(col >= y_dim, col < 2 * y_dim)
    # cols [0, Y) = mean, cols [Y, 2Y) = sigma, rest = don't-care padding.
    out_ref[...] = jnp.where(is_sigma, sigma, head).astype(out_ref.dtype)


def _const_spec(a):
    """Full-array block, constant across the batch grid (weights stay resident)."""
    n = a.ndim
    return pl.BlockSpec(a.shape, lambda b, n=n: (0,) * n)


# ----------------------------- model wrapper -----------------------------

class ReformerPallas:
    """Pallas re-implementation of seq2seq_time Reformer.forward (hidden_size == dim)."""

    def __init__(self, x_dim, y_dim, num_tokens, max_seq_len, dim, depth, heads,
                 min_std=MIN_STD, key=None):
        # num_tokens / max_seq_len kept for signature parity; the encoder here
        # consumes continuous embeddings, so they are unused.
        del num_tokens, max_seq_len
        self.min_std = float(min_std)
        self.heads = heads
        self.hidden = dim
        self.depth = depth
        self.y_dim = y_dim
        H, E, F = dim, x_dim + y_dim, 4 * dim
        key = jax.random.PRNGKey(0) if key is None else key

        def dense(k, din, dout):
            w = jax.random.normal(k, (din, dout), jnp.float32) * 0.02
            return w, jnp.zeros((1, dout), jnp.float32)

        keys = jax.random.split(key, 3 + depth)
        self.w_emb, self.b_emb = dense(keys[0], E, H)      # f32 (tiny, K=E)

        wqkv, bqkv, wo, bo, w1, b1, w2, b2 = ([] for _ in range(8))
        for d in range(depth):
            ks = jax.random.split(keys[1 + d], 6)
            wq, bq_ = dense(ks[0], H, H)
            wk, bk_ = dense(ks[1], H, H)
            wv, bv_ = dense(ks[2], H, H)
            wo_d, bo_d = dense(ks[3], H, H)
            w1_d, b1_d = dense(ks[4], H, F)
            w2_d, b2_d = dense(ks[5], F, H)
            wqkv.append(jnp.concatenate([wq, wk, wv], axis=1))     # (H, 3H)
            bqkv.append(jnp.concatenate([bq_, bk_, bv_], axis=1))  # (1, 3H)
            wo.append(wo_d); bo.append(bo_d)
            w1.append(w1_d); b1.append(b1_d)
            w2.append(w2_d); b2.append(b2_d)

        bf16 = jnp.bfloat16
        # Stacked per-depth weights (bf16 MXU inputs; biases / LN params f32).
        self.wqkv = jnp.stack(wqkv).astype(bf16)           # (depth, H, 3H)
        self.bqkv = jnp.stack(bqkv)                        # (depth, 1, 3H)
        self.wo = jnp.stack(wo).astype(bf16)               # (depth, H, H)
        self.bo = jnp.stack(bo)                            # (depth, 1, H)
        self.w1 = jnp.stack(w1).astype(bf16)               # (depth, H, F)
        self.b1 = jnp.stack(b1)                            # (depth, 1, F)
        self.w2 = jnp.stack(w2).astype(bf16)               # (depth, F, H)
        self.b2 = jnp.stack(b2)                            # (depth, 1, H)
        self.ln1_g = jnp.ones((depth, 1, H), jnp.float32)
        self.ln1_b = jnp.zeros((depth, 1, H), jnp.float32)
        self.ln2_g = jnp.ones((depth, 1, H), jnp.float32)
        self.ln2_b = jnp.zeros((depth, 1, H), jnp.float32)
        self.lnf_g = jnp.ones((1, H), jnp.float32)
        self.lnf_b = jnp.zeros((1, H), jnp.float32)

        # Fused, lane-dense head: mean in cols [0, Y), log_sigma in cols [Y, 2Y),
        # zero-padded out to 128 lanes.
        w_mean, b_mean = dense(keys[1 + depth], H, y_dim)
        w_std, b_std = dense(keys[2 + depth], H, y_dim)
        w_head = jnp.zeros((H, HEAD_PAD), jnp.float32)
        w_head = w_head.at[:, :y_dim].set(w_mean).at[:, y_dim:2 * y_dim].set(w_std)
        b_head = jnp.zeros((1, HEAD_PAD), jnp.float32)
        b_head = b_head.at[:, :y_dim].set(b_mean).at[:, y_dim:2 * y_dim].set(b_std)
        self.w_head = w_head.astype(bf16)
        self.b_head = b_head

    def __call__(self, past_x, past_y, future_x):
        B, S, _ = future_x.shape
        future_y_fake = jnp.repeat(past_y[:, -1:, :], S, axis=1)
        context = jnp.concatenate([past_x, past_y], axis=-1)
        target = jnp.concatenate([future_x, future_y_fake], axis=-1)
        x = jnp.concatenate([context, target * 1], axis=1)          # (B, S_tot, E)
        Bt, St, E = x.shape

        weights = (self.w_emb, self.b_emb,
                   self.ln1_g, self.ln1_b, self.wqkv, self.bqkv, self.wo, self.bo,
                   self.ln2_g, self.ln2_b, self.w1, self.b1, self.w2, self.b2,
                   self.lnf_g, self.lnf_b, self.w_head, self.b_head)

        out = pl.pallas_call(
            functools.partial(_fused_reformer_kernel,
                              depth=self.depth, heads=self.heads,
                              hidden=self.hidden, y_dim=self.y_dim,
                              min_std=self.min_std),
            out_shape=jax.ShapeDtypeStruct((Bt, St, HEAD_PAD), jnp.float32),
            grid=(Bt,),
            in_specs=[pl.BlockSpec((None, St, E), lambda b: (b, 0, 0))]
                     + [_const_spec(w) for w in weights],
            out_specs=pl.BlockSpec((None, St, HEAD_PAD), lambda b: (b, 0, 0)),
            compiler_params=pltpu.CompilerParams(
                dimension_semantics=("parallel",)),   # megacore-friendly on v7x
        )(x, *weights)

        steps = past_y.shape[1]
        mean = out[:, steps:, :self.y_dim]
        sigma = out[:, steps:, self.y_dim:2 * self.y_dim]
        # (mean, sigma) parameterize torch.distributions.Normal in the reference.
        return mean, sigma


if __name__ == "__main__":
    B, S_past, S_future = 2, 8, 8
    x_dim, y_dim = 3, 2
    dim, depth, heads = 32, 2, 4

    model = ReformerPallas(x_dim, y_dim, num_tokens=256, max_seq_len=64,
                           dim=dim, depth=depth, heads=heads,
                           min_std=MIN_STD, key=jax.random.PRNGKey(0))

    k1, k2, k3 = jax.random.split(jax.random.PRNGKey(0), 3)
    past_x = jax.random.normal(k1, (B, S_past, x_dim), jnp.float32)
    past_y = jax.random.normal(k2, (B, S_past, y_dim), jnp.float32)
    future_x = jax.random.normal(k3, (B, S_future, x_dim), jnp.float32)

    mean, sigma = model(past_x, past_y, future_x)
    jax.block_until_ready((mean, sigma))

    assert mean.shape == (B, S_future, y_dim)
    assert sigma.shape == (B, S_future, y_dim)
    assert bool(jnp.all(sigma > 0.0))
    assert bool(jnp.all(jnp.isfinite(mean))) and bool(jnp.all(jnp.isfinite(sigma)))
    print("KERNEL_OK")
</pallas_src>

<mosaic_0001>
module attributes {stable_mosaic.version = 11 : i64} {
  func.func @_fused_reformer_kernel(%arg0: i32, %arg1: memref<1x16x5xf32, #tpu.memory_space<vmem>>, %arg2: memref<5x32xf32, #tpu.memory_space<vmem>>, %arg3: memref<1x32xf32, #tpu.memory_space<vmem>>, %arg4: memref<2x1x32xf32, #tpu.memory_space<vmem>>, %arg5: memref<2x1x32xf32, #tpu.memory_space<vmem>>, %arg6: memref<2x32x96xbf16, #tpu.memory_space<vmem>>, %arg7: memref<2x1x96xf32, #tpu.memory_space<vmem>>, %arg8: memref<2x32x32xbf16, #tpu.memory_space<vmem>>, %arg9: memref<2x1x32xf32, #tpu.memory_space<vmem>>, %arg10: memref<2x1x32xf32, #tpu.memory_space<vmem>>, %arg11: memref<2x1x32xf32, #tpu.memory_space<vmem>>, %arg12: memref<2x32x128xbf16, #tpu.memory_space<vmem>>, %arg13: memref<2x1x128xf32, #tpu.memory_space<vmem>>, %arg14: memref<2x128x32xbf16, #tpu.memory_space<vmem>>, %arg15: memref<2x1x32xf32, #tpu.memory_space<vmem>>, %arg16: memref<1x32xf32, #tpu.memory_space<vmem>>, %arg17: memref<1x32xf32, #tpu.memory_space<vmem>>, %arg18: memref<32x128xbf16, #tpu.memory_space<vmem>>, %arg19: memref<1x128xf32, #tpu.memory_space<vmem>>, %arg20: memref<1x16x128xf32, #tpu.memory_space<vmem>>) attributes {dimension_semantics = [#tpu.dimension_semantics<parallel>], iteration_bounds = array<i64: 2>, scalar_prefetch = 0 : i64, scratch_operands = 0 : i64, tpu.core_type = #tpu.core_type<tc>, window_params = [{transform_indices = @transform_0, window_bounds = array<i64: 1, 16, 5>}, {pipeline_mode = #tpu.pipeline_mode<synchronous>, transform_indices = @transform_1, window_bounds = array<i64: 5, 32>}, {pipeline_mode = #tpu.pipeline_mode<synchronous>, transform_indices = @transform_2, window_bounds = array<i64: 1, 32>}, {pipeline_mode = #tpu.pipeline_mode<synchronous>, transform_indices = @transform_3, window_bounds = array<i64: 2, 1, 32>}, {pipeline_mode = #tpu.pipeline_mode<synchronous>, transform_indices = @transform_4, window_bounds = array<i64: 2, 1, 32>}, {pipeline_mode = #tpu.pipeline_mode<synchronous>, transform_indices = @transform_5, window_bounds = array<i64: 2, 32, 96>}, {pipeline_mode = #tpu.pipeline_mode<synchronous>, transform_indices = @transform_6, window_bounds = array<i64: 2, 1, 96>}, {pipeline_mode = #tpu.pipeline_mode<synchronous>, transform_indices = @transform_7, window_bounds = array<i64: 2, 32, 32>}, {pipeline_mode = #tpu.pipeline_mode<synchronous>, transform_indices = @transform_8, window_bounds = array<i64: 2, 1, 32>}, {pipeline_mode = #tpu.pipeline_mode<synchronous>, transform_indices = @transform_9, window_bounds = array<i64: 2, 1, 32>}, {pipeline_mode = #tpu.pipeline_mode<synchronous>, transform_indices = @transform_10, window_bounds = array<i64: 2, 1, 32>}, {pipeline_mode = #tpu.pipeline_mode<synchronous>, transform_indices = @transform_11, window_bounds = array<i64: 2, 32, 128>}, {pipeline_mode = #tpu.pipeline_mode<synchronous>, transform_indices = @transform_12, window_bounds = array<i64: 2, 1, 128>}, {pipeline_mode = #tpu.pipeline_mode<synchronous>, transform_indices = @transform_13, window_bounds = array<i64: 2, 128, 32>}, {pipeline_mode = #tpu.pipeline_mode<synchronous>, transform_indices = @transform_14, window_bounds = array<i64: 2, 1, 32>}, {pipeline_mode = #tpu.pipeline_mode<synchronous>, transform_indices = @transform_15, window_bounds = array<i64: 1, 32>}, {pipeline_mode = #tpu.pipeline_mode<synchronous>, transform_indices = @transform_16, window_bounds = array<i64: 1, 32>}, {pipeline_mode = #tpu.pipeline_mode<synchronous>, transform_indices = @transform_17, window_bounds = array<i64: 32, 128>}, {pipeline_mode = #tpu.pipeline_mode<synchronous>, transform_indices = @transform_18, window_bounds = array<i64: 1, 128>}, {transform_indices = @transform_19, window_bounds = array<i64: 1, 16, 128>}]} {
    %c0 = arith.constant 0 : index
    %c0_0 = arith.constant 0 : index
    %c0_1 = arith.constant 0 : index
    %0 = vector.load %arg1[%c0, %c0_0, %c0_1] : memref<1x16x5xf32, #tpu.memory_space<vmem>>, vector<1x16x5xf32>
    %1 = vector.shape_cast %0 : vector<1x16x5xf32> to vector<16x5xf32>
    %c0_2 = arith.constant 0 : index
    %c0_3 = arith.constant 0 : index
    %2 = vector.load %arg2[%c0_2, %c0_3] : memref<5x32xf32, #tpu.memory_space<vmem>>, vector<5x32xf32>
    %cst = arith.constant dense<0.000000e+00> : vector<16x32xf32>
    %3 = tpu.matmul %1, %2, %cst {dimension_numbers = #tpu.dot_dimension_numbers<[1], [0], [0], [1], [0, 0, 1, 1], [], []>} : vector<16x5xf32>, vector<5x32xf32>, vector<16x32xf32> -> vector<16x32xf32>
    %c0_4 = arith.constant 0 : index
    %c0_5 = arith.constant 0 : index
    %4 = vector.load %arg3[%c0_4, %c0_5] : memref<1x32xf32, #tpu.memory_space<vmem>>, vector<1x32xf32>
    %5 = vector.broadcast %4 : vector<1x32xf32> to vector<16x32xf32>
    %6 = arith.addf %3, %5 : vector<16x32xf32>
    %c0_6 = arith.constant 0 : index
    %c0_7 = arith.constant 0 : index
    %c0_8 = arith.constant 0 : index
    %7 = vector.load %arg4[%c0_6, %c0_7, %c0_8] : memref<2x1x32xf32, #tpu.memory_space<vmem>>, vector<1x1x32xf32>
    %8 = vector.shape_cast %7 : vector<1x1x32xf32> to vector<1x32xf32>
    %c0_9 = arith.constant 0 : index
    %c0_10 = arith.constant 0 : index
    %c0_11 = arith.constant 0 : index
    %9 = vector.load %arg5[%c0_9, %c0_10, %c0_11] : memref<2x1x32xf32, #tpu.memory_space<vmem>>, vector<1x1x32xf32>
    %10 = vector.shape_cast %9 : vector<1x1x32xf32> to vector<1x32xf32>
    %cst_12 = arith.constant dense<0.000000e+00> : vector<16xf32>
    %11 = vector.multi_reduction <add>, %6, %cst_12 [1] : vector<16x32xf32> to vector<16xf32>
    %12 = vector.shape_cast %11 : vector<16xf32> to vector<16x1xf32>
    %cst_13 = arith.constant 3.200000e+01 : f32
    %13 = vector.broadcast %cst_13 : f32 to vector<16x1xf32>
    %14 = arith.divf %12, %13 : vector<16x1xf32>
    %15 = vector.broadcast %14 : vector<16x1xf32> to vector<16x32xf32>
    %16 = arith.subf %6, %15 : vector<16x32xf32>
    %17 = arith.mulf %16, %16 : vector<16x32xf32>
    %cst_14 = arith.constant dense<0.000000e+00> : vector<16xf32>
    %18 = vector.multi_reduction <add>, %17, %cst_14 [1] : vector<16x32xf32> to vector<16xf32>
    %19 = vector.shape_cast %18 : vector<16xf32> to vector<16x1xf32>
    %cst_15 = arith.constant 3.200000e+01 : f32
    %20 = vector.broadcast %cst_15 : f32 to vector<16x1xf32>
    %21 = arith.divf %19, %20 : vector<16x1xf32>
    %22 = vector.broadcast %14 : vector<16x1xf32> to vector<16x32xf32>
    %23 = arith.subf %6, %22 : vector<16x32xf32>
    %cst_16 = arith.constant 9.99999974E-6 : f32
    %24 = vector.broadcast %cst_16 : f32 to vector<16x1xf32>
    %25 = arith.addf %21, %24 : vector<16x1xf32>
    %26 = math.rsqrt %25 : vector<16x1xf32>
    %27 = vector.broadcast %26 : vector<16x1xf32> to vector<16x32xf32>
    %28 = arith.mulf %23, %27 : vector<16x32xf32>
    %29 = vector.broadcast %8 : vector<1x32xf32> to vector<16x32xf32>
    %30 = arith.mulf %28, %29 : vector<16x32xf32>
    %31 = vector.broadcast %10 : vector<1x32xf32> to vector<16x32xf32>
    %32 = arith.addf %30, %31 : vector<16x32xf32>
    %33 = arith.truncf %32 : vector<16x32xf32> to vector<16x32xbf16>
    %c0_17 = arith.constant 0 : index
    %c0_18 = arith.constant 0 : index
    %c0_19 = arith.constant 0 : index
    %34 = vector.load %arg6[%c0_17, %c0_18, %c0_19] : memref<2x32x96xbf16, #tpu.memory_space<vmem>>, vector<1x32x96xbf16>
    %35 = vector.shape_cast %34 : vector<1x32x96xbf16> to vector<32x96xbf16>
    %cst_20 = arith.constant dense<0.000000e+00> : vector<16x96xf32>
    %36 = tpu.matmul %33, %35, %cst_20 {dimension_numbers = #tpu.dot_dimension_numbers<[1], [0], [0], [1], [0, 0, 1, 1], [], []>} : vector<16x32xbf16>, vector<32x96xbf16>, vector<16x96xf32> -> vector<16x96xf32>
    %c0_21 = arith.constant 0 : index
    %c0_22 = arith.constant 0 : index
    %c0_23 = arith.constant 0 : index
    %37 = vector.load %arg7[%c0_21, %c0_22, %c0_23] : memref<2x1x96xf32, #tpu.memory_space<vmem>>, vector<1x1x96xf32>
    %38 = vector.shape_cast %37 : vector<1x1x96xf32> to vector<1x96xf32>
    %39 = vector.broadcast %38 : vector<1x96xf32> to vector<16x96xf32>
    %40 = arith.addf %36, %39 : vector<16x96xf32>
    %41 = vector.extract_strided_slice %40 {offsets = [0, 0], sizes = [16, 32], strides = [1, 1]} : vector<16x96xf32> to vector<16x32xf32>
    %42 = vector.extract_strided_slice %40 {offsets = [0, 32], sizes = [16, 32], strides = [1, 1]} : vector<16x96xf32> to vector<16x32xf32>
    %43 = vector.extract_strided_slice %40 {offsets = [0, 64], sizes = [16, 32], strides = [1, 1]} : vector<16x96xf32> to vector<16x32xf32>
    %44 = vector.extract_strided_slice %41 {offsets = [0, 0], sizes = [16, 8], strides = [1, 1]} : vector<16x32xf32> to vector<16x8xf32>
    %45 = arith.truncf %44 : vector<16x8xf32> to vector<16x8xbf16>
    %46 = vector.extract_strided_slice %42 {offsets = [0, 0], sizes = [16, 8], strides = [1, 1]} : vector<16x32xf32> to vector<16x8xf32>
    %47 = arith.truncf %46 : vector<16x8xf32> to vector<16x8xbf16>
    %48 = vector.extract_strided_slice %43 {offsets = [0, 0], sizes = [16, 8], strides = [1, 1]} : vector<16x32xf32> to vector<16x8xf32>
    %49 = arith.truncf %48 : vector<16x8xf32> to vector<16x8xbf16>
    %cst_24 = arith.constant dense<0.000000e+00> : vector<16x16xf32>
    %50 = tpu.matmul %45, %47, %cst_24 {dimension_numbers = #tpu.dot_dimension_numbers<[1], [1], [0], [0], [0, 0, 1, 0], [], []>} : vector<16x8xbf16>, vector<16x8xbf16>, vector<16x16xf32> -> vector<16x16xf32>
    %cst_25 = arith.constant 0.353553385 : f32
    %51 = vector.broadcast %cst_25 : f32 to vector<16x16xf32>
    %52 = arith.mulf %50, %51 : vector<16x16xf32>
    %cst_26 = arith.constant dense<0xFF800000> : vector<16xf32>
    %53 = vector.multi_reduction <maximumf>, %52, %cst_26 [1] : vector<16x16xf32> to vector<16xf32>
    %54 = vector.shape_cast %53 : vector<16xf32> to vector<16x1xf32>
    %55 = vector.broadcast %54 : vector<16x1xf32> to vector<16x16xf32>
    %56 = arith.subf %52, %55 : vector<16x16xf32>
    %57 = math.exp %56 : vector<16x16xf32>
    %cst_27 = arith.constant dense<0.000000e+00> : vector<16xf32>
    %58 = vector.multi_reduction <add>, %57, %cst_27 [1] : vector<16x16xf32> to vector<16xf32>
    %59 = vector.shape_cast %58 : vector<16xf32> to vector<16x1xf32>
    %60 = tpu.reciprocal %59 {approx = true} : vector<16x1xf32> -> vector<16x1xf32>
    %61 = vector.broadcast %60 : vector<16x1xf32> to vector<16x16xf32>
    %62 = arith.mulf %57, %61 : vector<16x16xf32>
    %63 = arith.truncf %62 : vector<16x16xf32> to vector<16x16xbf16>
    %cst_28 = arith.constant dense<0.000000e+00> : vector<16x8xf32>
    %64 = tpu.matmul %63, %49, %cst_28 {dimension_numbers = #tpu.dot_dimension_numbers<[1], [0], [0], [1], [0, 0, 1, 1], [], []>} : vector<16x16xbf16>, vector<16x8xbf16>, vector<16x8xf32> -> vector<16x8xf32>
    %65 = vector.extract_strided_slice %41 {offsets = [0, 8], sizes = [16, 8], strides = [1, 1]} : vector<16x32xf32> to vector<16x8xf32>
    %66 = arith.truncf %65 : vector<16x8xf32> to vector<16x8xbf16>
    %67 = vector.extract_strided_slice %42 {offsets = [0, 8], sizes = [16, 8], strides = [1, 1]} : vector<16x32xf32> to vector<16x8xf32>
    %68 = arith.truncf %67 : vector<16x8xf32> to vector<16x8xbf16>
    %69 = vector.extract_strided_slice %43 {offsets = [0, 8], sizes = [16, 8], strides = [1, 1]} : vector<16x32xf32> to vector<16x8xf32>
    %70 = arith.truncf %69 : vector<16x8xf32> to vector<16x8xbf16>
    %cst_29 = arith.constant dense<0.000000e+00> : vector<16x16xf32>
    %71 = tpu.matmul %66, %68, %cst_29 {dimension_numbers = #tpu.dot_dimension_numbers<[1], [1], [0], [0], [0, 0, 1, 0], [], []>} : vector<16x8xbf16>, vector<16x8xbf16>, vector<16x16xf32> -> vector<16x16xf32>
    %cst_30 = arith.constant 0.353553385 : f32
    %72 = vector.broadcast %cst_30 : f32 to vector<16x16xf32>
    %73 = arith.mulf %71, %72 : vector<16x16xf32>
    %cst_31 = arith.constant dense<0xFF800000> : vector<16xf32>
    %74 = vector.multi_reduction <maximumf>, %73, %cst_31 [1] : vector<16x16xf32> to vector<16xf32>
    %75 = vector.shape_cast %74 : vector<16xf32> to vector<16x1xf32>
    %76 = vector.broadcast %75 : vector<16x1xf32> to vector<16x16xf32>
    %77 = arith.subf %73, %76 : vector<16x16xf32>
    %78 = math.exp %77 : vector<16x16xf32>
    %cst_32 = arith.constant dense<0.000000e+00> : vector<16xf32>
    %79 = vector.multi_reduction <add>, %78, %cst_32 [1] : vector<16x16xf32> to vector<16xf32>
    %80 = vector.shape_cast %79 : vector<16xf32> to vector<16x1xf32>
    %81 = tpu.reciprocal %80 {approx = true} : vector<16x1xf32> -> vector<16x1xf32>
    %82 = vector.broadcast %81 : vector<16x1xf32> to vector<16x16xf32>
    %83 = arith.mulf %78, %82 : vector<16x16xf32>
    %84 = arith.truncf %83 : vector<16x16xf32> to vector<16x16xbf16>
    %cst_33 = arith.constant dense<0.000000e+00> : vector<16x8xf32>
    %85 = tpu.matmul %84, %70, %cst_33 {dimension_numbers = #tpu.dot_dimension_numbers<[1], [0], [0], [1], [0, 0, 1, 1], [], []>} : vector<16x16xbf16>, vector<16x8xbf16>, vector<16x8xf32> -> vector<16x8xf32>
    %86 = vector.extract_strided_slice %41 {offsets = [0, 16], sizes = [16, 8], strides = [1, 1]} : vector<16x32xf32> to vector<16x8xf32>
    %87 = arith.truncf %86 : vector<16x8xf32> to vector<16x8xbf16>
    %88 = vector.extract_strided_slice %42 {offsets = [0, 16], sizes = [16, 8], strides = [1, 1]} : vector<16x32xf32> to vector<16x8xf32>
    %89 = arith.truncf %88 : vector<16x8xf32> to vector<16x8xbf16>
    %90 = vector.extract_strided_slice %43 {offsets = [0, 16], sizes = [16, 8], strides = [1, 1]} : vector<16x32xf32> to vector<16x8xf32>
    %91 = arith.truncf %90 : vector<16x8xf32> to vector<16x8xbf16>
    %cst_34 = arith.constant dense<0.000000e+00> : vector<16x16xf32>
    %92 = tpu.matmul %87, %89, %cst_34 {dimension_numbers = #tpu.dot_dimension_numbers<[1], [1], [0], [0], [0, 0, 1, 0], [], []>} : vector<16x8xbf16>, vector<16x8xbf16>, vector<16x16xf32> -> vector<16x16xf32>
    %cst_35 = arith.constant 0.353553385 : f32
    %93 = vector.broadcast %cst_35 : f32 to vector<16x16xf32>
    %94 = arith.mulf %92, %93 : vector<16x16xf32>
    %cst_36 = arith.constant dense<0xFF800000> : vector<16xf32>
    %95 = vector.multi_reduction <maximumf>, %94, %cst_36 [1] : vector<16x16xf32> to vector<16xf32>
    %96 = vector.shape_cast %95 : vector<16xf32> to vector<16x1xf32>
    %97 = vector.broadcast %96 : vector<16x1xf32> to vector<16x16xf32>
    %98 = arith.subf %94, %97 : vector<16x16xf32>
    %99 = math.exp %98 : vector<16x16xf32>
    %cst_37 = arith.constant dense<0.000000e+00> : vector<16xf32>
    %100 = vector.multi_reduction <add>, %99, %cst_37 [1] : vector<16x16xf32> to vector<16xf32>
    %101 = vector.shape_cast %100 : vector<16xf32> to vector<16x1xf32>
    %102 = tpu.reciprocal %101 {approx = true} : vector<16x1xf32> -> vector<16x1xf32>
    %103 = vector.broadcast %102 : vector<16x1xf32> to vector<16x16xf32>
    %104 = arith.mulf %99, %103 : vector<16x16xf32>
    %105 = arith.truncf %104 : vector<16x16xf32> to vector<16x16xbf16>
    %cst_38 = arith.constant dense<0.000000e+00> : vector<16x8xf32>
    %106 = tpu.matmul %105, %91, %cst_38 {dimension_numbers = #tpu.dot_dimension_numbers<[1], [0], [0], [1], [0, 0, 1, 1], [], []>} : vector<16x16xbf16>, vector<16x8xbf16>, vector<16x8xf32> -> vector<16x8xf32>
    %107 = vector.extract_strided_slice %41 {offsets = [0, 24], sizes = [16, 8], strides = [1, 1]} : vector<16x32xf32> to vector<16x8xf32>
    %108 = arith.truncf %107 : vector<16x8xf32> to vector<16x8xbf16>
    %109 = vector.extract_strided_slice %42 {offsets = [0, 24], sizes = [16, 8], strides = [1, 1]} : vector<16x32xf32> to vector<16x8xf32>
    %110 = arith.truncf %109 : vector<16x8xf32> to vector<16x8xbf16>
    %111 = vector.extract_strided_slice %43 {offsets = [0, 24], sizes = [16, 8], strides = [1, 1]} : vector<16x32xf32> to vector<16x8xf32>
    %112 = arith.truncf %111 : vector<16x8xf32> to vector<16x8xbf16>
    %cst_39 = arith.constant dense<0.000000e+00> : vector<16x16xf32>
    %113 = tpu.matmul %108, %110, %cst_39 {dimension_numbers = #tpu.dot_dimension_numbers<[1], [1], [0], [0], [0, 0, 1, 0], [], []>} : vector<16x8xbf16>, vector<16x8xbf16>, vector<16x16xf32> -> vector<16x16xf32>
    %cst_40 = arith.constant 0.353553385 : f32
    %114 = vector.broadcast %cst_40 : f32 to vector<16x16xf32>
    %115 = arith.mulf %113, %114 : vector<16x16xf32>
    %cst_41 = arith.constant dense<0xFF800000> : vector<16xf32>
    %116 = vector.multi_reduction <maximumf>, %115, %cst_41 [1] : vector<16x16xf32> to vector<16xf32>
    %117 = vector.shape_cast %116 : vector<16xf32> to vector<16x1xf32>
    %118 = vector.broadcast %117 : vector<16x1xf32> to vector<16x16xf32>
    %119 = arith.subf %115, %118 : vector<16x16xf32>
    %120 = math.exp %119 : vector<16x16xf32>
    %cst_42 = arith.constant dense<0.000000e+00> : vector<16xf32>
    %121 = vector.multi_reduction <add>, %120, %cst_42 [1] : vector<16x16xf32> to vector<16xf32>
    %122 = vector.shape_cast %121 : vector<16xf32> to vector<16x1xf32>
    %123 = tpu.reciprocal %122 {approx = true} : vector<16x1xf32> -> vector<16x1xf32>
    %124 = vector.broadcast %123 : vector<16x1xf32> to vector<16x16xf32>
    %125 = arith.mulf %120, %124 : vector<16x16xf32>
    %126 = arith.truncf %125 : vector<16x16xf32> to vector<16x16xbf16>
    %cst_43 = arith.constant dense<0.000000e+00> : vector<16x8xf32>
    %127 = tpu.matmul %126, %112, %cst_43 {dimension_numbers = #tpu.dot_dimension_numbers<[1], [0], [0], [1], [0, 0, 1, 1], [], []>} : vector<16x16xbf16>, vector<16x8xbf16>, vector<16x8xf32> -> vector<16x8xf32>
    %128 = tpu.concatenate %64, %85, %106, %127 in 1 : vector<16x8xf32>, vector<16x8xf32>, vector<16x8xf32>, vector<16x8xf32> -> vector<16x32xf32>
    %129 = arith.truncf %128 : vector<16x32xf32> to vector<16x32xbf16>
    %c0_44 = arith.constant 0 : index
    %c0_45 = arith.constant 0 : index
    %c0_46 = arith.constant 0 : index
    %130 = vector.load %arg8[%c0_44, %c0_45, %c0_46] : memref<2x32x32xbf16, #tpu.memory_space<vmem>>, vector<1x32x32xbf16>
    %131 = vector.shape_cast %130 : vector<1x32x32xbf16> to vector<32x32xbf16>
    %cst_47 = arith.constant dense<0.000000e+00> : vector<16x32xf32>
    %132 = tpu.matmul %129, %131, %cst_47 {dimension_numbers = #tpu.dot_dimension_numbers<[1], [0], [0], [1], [0, 0, 1, 1], [], []>} : vector<16x32xbf16>, vector<32x32xbf16>, vector<16x32xf32> -> vector<16x32xf32>
    %c0_48 = arith.constant 0 : index
    %c0_49 = arith.constant 0 : index
    %c0_50 = arith.constant 0 : index
    %133 = vector.load %arg9[%c0_48, %c0_49, %c0_50] : memref<2x1x32xf32, #tpu.memory_space<vmem>>, vector<1x1x32xf32>
    %134 = vector.shape_cast %133 : vector<1x1x32xf32> to vector<1x32xf32>
    %135 = vector.broadcast %134 : vector<1x32xf32> to vector<16x32xf32>
    %136 = arith.addf %132, %135 : vector<16x32xf32>
    %137 = arith.addf %6, %136 : vector<16x32xf32>
    %c0_51 = arith.constant 0 : index
    %c0_52 = arith.constant 0 : index
    %c0_53 = arith.constant 0 : index
    %138 = vector.load %arg10[%c0_51, %c0_52, %c0_53] : memref<2x1x32xf32, #tpu.memory_space<vmem>>, vector<1x1x32xf32>
    %139 = vector.shape_cast %138 : vector<1x1x32xf32> to vector<1x32xf32>
    %c0_54 = arith.constant 0 : index
    %c0_55 = arith.constant 0 : index
    %c0_56 = arith.constant 0 : index
    %140 = vector.load %arg11[%c0_54, %c0_55, %c0_56] : memref<2x1x32xf32, #tpu.memory_space<vmem>>, vector<1x1x32xf32>
    %141 = vector.shape_cast %140 : vector<1x1x32xf32> to vector<1x32xf32>
    %cst_57 = arith.constant dense<0.000000e+00> : vector<16xf32>
    %142 = vector.multi_reduction <add>, %137, %cst_57 [1] : vector<16x32xf32> to vector<16xf32>
    %143 = vector.shape_cast %142 : vector<16xf32> to vector<16x1xf32>
    %cst_58 = arith.constant 3.200000e+01 : f32
    %144 = vector.broadcast %cst_58 : f32 to vector<16x1xf32>
    %145 = arith.divf %143, %144 : vector<16x1xf32>
    %146 = vector.broadcast %145 : vector<16x1xf32> to vector<16x32xf32>
    %147 = arith.subf %137, %146 : vector<16x32xf32>
    %148 = arith.mulf %147, %147 : vector<16x32xf32>
    %cst_59 = arith.constant dense<0.000000e+00> : vector<16xf32>
    %149 = vector.multi_reduction <add>, %148, %cst_59 [1] : vector<16x32xf32> to vector<16xf32>
    %150 = vector.shape_cast %149 : vector<16xf32> to vector<16x1xf32>
    %cst_60 = arith.constant 3.200000e+01 : f32
    %151 = vector.broadcast %cst_60 : f32 to vector<16x1xf32>
    %152 = arith.divf %150, %151 : vector<16x1xf32>
    %153 = vector.broadcast %145 : vector<16x1xf32> to vector<16x32xf32>
    %154 = arith.subf %137, %153 : vector<16x32xf32>
    %cst_61 = arith.constant 9.99999974E-6 : f32
    %155 = vector.broadcast %cst_61 : f32 to vector<16x1xf32>
    %156 = arith.addf %152, %155 : vector<16x1xf32>
    %157 = math.rsqrt %156 : vector<16x1xf32>
    %158 = vector.broadcast %157 : vector<16x1xf32> to vector<16x32xf32>
    %159 = arith.mulf %154, %158 : vector<16x32xf32>
    %160 = vector.broadcast %139 : vector<1x32xf32> to vector<16x32xf32>
    %161 = arith.mulf %159, %160 : vector<16x32xf32>
    %162 = vector.broadcast %141 : vector<1x32xf32> to vector<16x32xf32>
    %163 = arith.addf %161, %162 : vector<16x32xf32>
    %164 = arith.truncf %163 : vector<16x32xf32> to vector<16x32xbf16>
    %c0_62 = arith.constant 0 : index
    %c0_63 = arith.constant 0 : index
    %c0_64 = arith.constant 0 : index
    %165 = vector.load %arg12[%c0_62, %c0_63, %c0_64] : memref<2x32x128xbf16, #tpu.memory_space<vmem>>, vector<1x32x128xbf16>
    %166 = vector.shape_cast %165 : vector<1x32x128xbf16> to vector<32x128xbf16>
    %cst_65 = arith.constant dense<0.000000e+00> : vector<16x128xf32>
    %167 = tpu.matmul %164, %166, %cst_65 {dimension_numbers = #tpu.dot_dimension_numbers<[1], [0], [0], [1], [0, 0, 1, 1], [], []>} : vector<16x32xbf16>, vector<32x128xbf16>, vector<16x128xf32> -> vector<16x128xf32>
    %c0_66 = arith.constant 0 : index
    %c0_67 = arith.constant 0 : index
    %c0_68 = arith.constant 0 : index
    %168 = vector.load %arg13[%c0_66, %c0_67, %c0_68] : memref<2x1x128xf32, #tpu.memory_space<vmem>>, vector<1x1x128xf32>
    %169 = vector.shape_cast %168 : vector<1x1x128xf32> to vector<1x128xf32>
    %170 = vector.broadcast %169 : vector<1x128xf32> to vector<16x128xf32>
    %171 = arith.addf %167, %170 : vector<16x128xf32>
    %172 = arith.mulf %171, %171 : vector<16x128xf32>
    %173 = arith.mulf %171, %172 : vector<16x128xf32>
    %cst_69 = arith.constant 4.471500e-02 : f32
    %174 = vector.broadcast %cst_69 : f32 to vector<16x128xf32>
    %175 = arith.mulf %174, %173 : vector<16x128xf32>
    %176 = arith.addf %171, %175 : vector<16x128xf32>
    %cst_70 = arith.constant 0.797884583 : f32
    %177 = vector.broadcast %cst_70 : f32 to vector<16x128xf32>
    %178 = arith.mulf %177, %176 : vector<16x128xf32>
    %179 = math.tanh %178 : vector<16x128xf32>
    %cst_71 = arith.constant 1.000000e+00 : f32
    %180 = vector.broadcast %cst_71 : f32 to vector<16x128xf32>
    %181 = arith.addf %180, %179 : vector<16x128xf32>
    %cst_72 = arith.constant 5.000000e-01 : f32
    %182 = vector.broadcast %cst_72 : f32 to vector<16x128xf32>
    %183 = arith.mulf %182, %181 : vector<16x128xf32>
    %184 = arith.mulf %171, %183 : vector<16x128xf32>
    %185 = arith.truncf %184 : vector<16x128xf32> to vector<16x128xbf16>
    %c0_73 = arith.constant 0 : index
    %c0_74 = arith.constant 0 : index
    %c0_75 = arith.constant 0 : index
    %186 = vector.load %arg14[%c0_73, %c0_74, %c0_75] : memref<2x128x32xbf16, #tpu.memory_space<vmem>>, vector<1x128x32xbf16>
    %187 = vector.shape_cast %186 : vector<1x128x32xbf16> to vector<128x32xbf16>
    %cst_76 = arith.constant dense<0.000000e+00> : vector<16x32xf32>
    %188 = tpu.matmul %185, %187, %cst_76 {dimension_numbers = #tpu.dot_dimension_numbers<[1], [0], [0], [1], [0, 0, 1, 1], [], []>} : vector<16x128xbf16>, vector<128x32xbf16>, vector<16x32xf32> -> vector<16x32xf32>
    %c0_77 = arith.constant 0 : index
    %c0_78 = arith.constant 0 : index
    %c0_79 = arith.constant 0 : index
    %189 = vector.load %arg15[%c0_77, %c0_78, %c0_79] : memref<2x1x32xf32, #tpu.memory_space<vmem>>, vector<1x1x32xf32>
    %190 = vector.shape_cast %189 : vector<1x1x32xf32> to vector<1x32xf32>
    %191 = vector.broadcast %190 : vector<1x32xf32> to vector<16x32xf32>
    %192 = arith.addf %188, %191 : vector<16x32xf32>
    %193 = arith.addf %137, %192 : vector<16x32xf32>
    %c1 = arith.constant 1 : index
    %c0_80 = arith.constant 0 : index
    %c0_81 = arith.constant 0 : index
    %194 = vector.load %arg4[%c1, %c0_80, %c0_81] : memref<2x1x32xf32, #tpu.memory_space<vmem>>, vector<1x1x32xf32>
    %195 = vector.shape_cast %194 : vector<1x1x32xf32> to vector<1x32xf32>
    %c1_82 = arith.constant 1 : index
    %c0_83 = arith.constant 0 : index
    %c0_84 = arith.constant 0 : index
    %196 = vector.load %arg5[%c1_82, %c0_83, %c0_84] : memref<2x1x32xf32, #tpu.memory_space<vmem>>, vector<1x1x32xf32>
    %197 = vector.shape_cast %196 : vector<1x1x32xf32> to vector<1x32xf32>
    %cst_85 = arith.constant dense<0.000000e+00> : vector<16xf32>
    %198 = vector.multi_reduction <add>, %193, %cst_85 [1] : vector<16x32xf32> to vector<16xf32>
    %199 = vector.shape_cast %198 : vector<16xf32> to vector<16x1xf32>
    %cst_86 = arith.constant 3.200000e+01 : f32
    %200 = vector.broadcast %cst_86 : f32 to vector<16x1xf32>
    %201 = arith.divf %199, %200 : vector<16x1xf32>
    %202 = vector.broadcast %201 : vector<16x1xf32> to vector<16x32xf32>
    %203 = arith.subf %193, %202 : vector<16x32xf32>
    %204 = arith.mulf %203, %203 : vector<16x32xf32>
    %cst_87 = arith.constant dense<0.000000e+00> : vector<16xf32>
    %205 = vector.multi_reduction <add>, %204, %cst_87 [1] : vector<16x32xf32> to vector<16xf32>
    %206 = vector.shape_cast %205 : vector<16xf32> to vector<16x1xf32>
    %cst_88 = arith.constant 3.200000e+01 : f32
    %207 = vector.broadcast %cst_88 : f32 to vector<16x1xf32>
    %208 = arith.divf %206, %207 : vector<16x1xf32>
    %209 = vector.broadcast %201 : vector<16x1xf32> to vector<16x32xf32>
    %210 = arith.subf %193, %209 : vector<16x32xf32>
    %cst_89 = arith.constant 9.99999974E-6 : f32
    %211 = vector.broadcast %cst_89 : f32 to vector<16x1xf32>
    %212 = arith.addf %208, %211 : vector<16x1xf32>
    %213 = math.rsqrt %212 : vector<16x1xf32>
    %214 = vector.broadcast %213 : vector<16x1xf32> to vector<16x32xf32>
    %215 = arith.mulf %210, %214 : vector<16x32xf32>
    %216 = vector.broadcast %195 : vector<1x32xf32> to vector<16x32xf32>
    %217 = arith.mulf %215, %216 : vector<16x32xf32>
    %218 = vector.broadcast %197 : vector<1x32xf32> to vector<16x32xf32>
    %219 = arith.addf %217, %218 : vector<16x32xf32>
    %220 = arith.truncf %219 : vector<16x32xf32> to vector<16x32xbf16>
    %c1_90 = arith.constant 1 : index
    %c0_91 = arith.constant 0 : index
    %c0_92 = arith.constant 0 : index
    %221 = vector.load %arg6[%c1_90, %c0_91, %c0_92] : memref<2x32x96xbf16, #tpu.memory_space<vmem>>, vector<1x32x96xbf16>
    %222 = vector.shape_cast %221 : vector<1x32x96xbf16> to vector<32x96xbf16>
    %cst_93 = arith.constant dense<0.000000e+00> : vector<16x96xf32>
    %223 = tpu.matmul %220, %222, %cst_93 {dimension_numbers = #tpu.dot_dimension_numbers<[1], [0], [0], [1], [0, 0, 1, 1], [], []>} : vector<16x32xbf16>, vector<32x96xbf16>, vector<16x96xf32> -> vector<16x96xf32>
    %c1_94 = arith.constant 1 : index
    %c0_95 = arith.constant 0 : index
    %c0_96 = arith.constant 0 : index
    %224 = vector.load %arg7[%c1_94, %c0_95, %c0_96] : memref<2x1x96xf32, #tpu.memory_space<vmem>>, vector<1x1x96xf32>
    %225 = vector.shape_cast %224 : vector<1x1x96xf32> to vector<1x96xf32>
    %226 = vector.broadcast %225 : vector<1x96xf32> to vector<16x96xf32>
    %227 = arith.addf %223, %226 : vector<16x96xf32>
    %228 = vector.extract_strided_slice %227 {offsets = [0, 0], sizes = [16, 32], strides = [1, 1]} : vector<16x96xf32> to vector<16x32xf32>
    %229 = vector.extract_strided_slice %227 {offsets = [0, 32], sizes = [16, 32], strides = [1, 1]} : vector<16x96xf32> to vector<16x32xf32>
    %230 = vector.extract_strided_slice %227 {offsets = [0, 64], sizes = [16, 32], strides = [1, 1]} : vector<16x96xf32> to vector<16x32xf32>
    %231 = vector.extract_strided_slice %228 {offsets = [0, 0], sizes = [16, 8], strides = [1, 1]} : vector<16x32xf32> to vector<16x8xf32>
    %232 = arith.truncf %231 : vector<16x8xf32> to vector<16x8xbf16>
    %233 = vector.extract_strided_slice %229 {offsets = [0, 0], sizes = [16, 8], strides = [1, 1]} : vector<16x32xf32> to vector<16x8xf32>
    %234 = arith.truncf %233 : vector<16x8xf32> to vector<16x8xbf16>
    %235 = vector.extract_strided_slice %230 {offsets = [0, 0], sizes = [16, 8], strides = [1, 1]} : vector<16x32xf32> to vector<16x8xf32>
    %236 = arith.truncf %235 : vector<16x8xf32> to vector<16x8xbf16>
    %cst_97 = arith.constant dense<0.000000e+00> : vector<16x16xf32>
    %237 = tpu.matmul %232, %234, %cst_97 {dimension_numbers = #tpu.dot_dimension_numbers<[1], [1], [0], [0], [0, 0, 1, 0], [], []>} : vector<16x8xbf16>, vector<16x8xbf16>, vector<16x16xf32> -> vector<16x16xf32>
    %cst_98 = arith.constant 0.353553385 : f32
    %238 = vector.broadcast %cst_98 : f32 to vector<16x16xf32>
    %239 = arith.mulf %237, %238 : vector<16x16xf32>
    %cst_99 = arith.constant dense<0xFF800000> : vector<16xf32>
    %240 = vector.multi_reduction <maximumf>, %239, %cst_99 [1] : vector<16x16xf32> to vector<16xf32>
    %241 = vector.shape_cast %240 : vector<16xf32> to vector<16x1xf32>
    %242 = vector.broadcast %241 : vector<16x1xf32> to vector<16x16xf32>
    %243 = arith.subf %239, %242 : vector<16x16xf32>
    %244 = math.exp %243 : vector<16x16xf32>
    %cst_100 = arith.constant dense<0.000000e+00> : vector<16xf32>
    %245 = vector.multi_reduction <add>, %244, %cst_100 [1] : vector<16x16xf32> to vector<16xf32>
    %246 = vector.shape_cast %245 : vector<16xf32> to vector<16x1xf32>
    %247 = tpu.reciprocal %246 {approx = true} : vector<16x1xf32> -> vector<16x1xf32>
    %248 = vector.broadcast %247 : vector<16x1xf32> to vector<16x16xf32>
    %249 = arith.mulf %244, %248 : vector<16x16xf32>
    %250 = arith.truncf %249 : vector<16x16xf32> to vector<16x16xbf16>
    %cst_101 = arith.constant dense<0.000000e+00> : vector<16x8xf32>
    %251 = tpu.matmul %250, %236, %cst_101 {dimension_numbers = #tpu.dot_dimension_numbers<[1], [0], [0], [1], [0, 0, 1, 1], [], []>} : vector<16x16xbf16>, vector<16x8xbf16>, vector<16x8xf32> -> vector<16x8xf32>
    %252 = vector.extract_strided_slice %228 {offsets = [0, 8], sizes = [16, 8], strides = [1, 1]} : vector<16x32xf32> to vector<16x8xf32>
    %253 = arith.truncf %252 : vector<16x8xf32> to vector<16x8xbf16>
    %254 = vector.extract_strided_slice %229 {offsets = [0, 8], sizes = [16, 8], strides = [1, 1]} : vector<16x32xf32> to vector<16x8xf32>
    %255 = arith.truncf %254 : vector<16x8xf32> to vector<16x8xbf16>
    %256 = vector.extract_strided_slice %230 {offsets = [0, 8], sizes = [16, 8], strides = [1, 1]} : vector<16x32xf32> to vector<16x8xf32>
    %257 = arith.truncf %256 : vector<16x8xf32> to vector<16x8xbf16>
    %cst_102 = arith.constant dense<0.000000e+00> : vector<16x16xf32>
    %258 = tpu.matmul %253, %255, %cst_102 {dimension_numbers = #tpu.dot_dimension_numbers<[1], [1], [0], [0], [0, 0, 1, 0], [], []>} : vector<16x8xbf16>, vector<16x8xbf16>, vector<16x16xf32> -> vector<16x16xf32>
    %cst_103 = arith.constant 0.353553385 : f32
    %259 = vector.broadcast %cst_103 : f32 to vector<16x16xf32>
    %260 = arith.mulf %258, %259 : vector<16x16xf32>
    %cst_104 = arith.constant dense<0xFF800000> : vector<16xf32>
    %261 = vector.multi_reduction <maximumf>, %260, %cst_104 [1] : vector<16x16xf32> to vector<16xf32>
    %262 = vector.shape_cast %261 : vector<16xf32> to vector<16x1xf32>
    %263 = vector.broadcast %262 : vector<16x1xf32> to vector<16x16xf32>
    %264 = arith.subf %260, %263 : vector<16x16xf32>
    %265 = math.exp %264 : vector<16x16xf32>
    %cst_105 = arith.constant dense<0.000000e+00> : vector<16xf32>
    %266 = vector.multi_reduction <add>, %265, %cst_105 [1] : vector<16x16xf32> to vector<16xf32>
    %267 = vector.shape_cast %266 : vector<16xf32> to vector<16x1xf32>
    %268 = tpu.reciprocal %267 {approx = true} : vector<16x1xf32> -> vector<16x1xf32>
    %269 = vector.broadcast %268 : vector<16x1xf32> to vector<16x16xf32>
    %270 = arith.mulf %265, %269 : vector<16x16xf32>
    %271 = arith.truncf %270 : vector<16x16xf32> to vector<16x16xbf16>
    %cst_106 = arith.constant dense<0.000000e+00> : vector<16x8xf32>
    %272 = tpu.matmul %271, %257, %cst_106 {dimension_numbers = #tpu.dot_dimension_numbers<[1], [0], [0], [1], [0, 0, 1, 1], [], []>} : vector<16x16xbf16>, vector<16x8xbf16>, vector<16x8xf32> -> vector<16x8xf32>
    %273 = vector.extract_strided_slice %228 {offsets = [0, 16], sizes = [16, 8], strides = [1, 1]} : vector<16x32xf32> to vector<16x8xf32>
    %274 = arith.truncf %273 : vector<16x8xf32> to vector<16x8xbf16>
    %275 = vector.extract_strided_slice %229 {offsets = [0, 16], sizes = [16, 8], strides = [1, 1]} : vector<16x32xf32> to vector<16x8xf32>
    %276 = arith.truncf %275 : vector<16x8xf32> to vector<16x8xbf16>
    %277 = vector.extract_strided_slice %230 {offsets = [0, 16], sizes = [16, 8], strides = [1, 1]} : vector<16x32xf32> to vector<16x8xf32>
    %278 = arith.truncf %277 : vector<16x8xf32> to vector<16x8xbf16>
    %cst_107 = arith.constant dense<0.000000e+00> : vector<16x16xf32>
    %279 = tpu.matmul %274, %276, %cst_107 {dimension_numbers = #tpu.dot_dimension_numbers<[1], [1], [0], [0], [0, 0, 1, 0], [], []>} : vector<16x8xbf16>, vector<16x8xbf16>, vector<16x16xf32> -> vector<16x16xf32>
    %cst_108 = arith.constant 0.353553385 : f32
    %280 = vector.broadcast %cst_108 : f32 to vector<16x16xf32>
    %281 = arith.mulf %279, %280 : vector<16x16xf32>
    %cst_109 = arith.constant dense<0xFF800000> : vector<16xf32>
    %282 = vector.multi_reduction <maximumf>, %281, %cst_109 [1] : vector<16x16xf32> to vector<16xf32>
    %283 = vector.shape_cast %282 : vector<16xf32> to vector<16x1xf32>
    %284 = vector.broadcast %283 : vector<16x1xf32> to vector<16x16xf32>
    %285 = arith.subf %281, %284 : vector<16x16xf32>
    %286 = math.exp %285 : vector<16x16xf32>
    %cst_110 = arith.constant dense<0.000000e+00> : vector<16xf32>
    %287 = vector.multi_reduction <add>, %286, %cst_110 [1] : vector<16x16xf32> to vector<16xf32>
    %288 = vector.shape_cast %287 : vector<16xf32> to vector<16x1xf32>
    %289 = tpu.reciprocal %288 {approx = true} : vector<16x1xf32> -> vector<16x1xf32>
    %290 = vector.broadcast %289 : vector<16x1xf32> to vector<16x16xf32>
    %291 = arith.mulf %286, %290 : vector<16x16xf32>
    %292 = arith.truncf %291 : vector<16x16xf32> to vector<16x16xbf16>
    %cst_111 = arith.constant dense<0.000000e+00> : vector<16x8xf32>
    %293 = tpu.matmul %292, %278, %cst_111 {dimension_numbers = #tpu.dot_dimension_numbers<[1], [0], [0], [1], [0, 0, 1, 1], [], []>} : vector<16x16xbf16>, vector<16x8xbf16>, vector<16x8xf32> -> vector<16x8xf32>
    %294 = vector.extract_strided_slice %228 {offsets = [0, 24], sizes = [16, 8], strides = [1, 1]} : vector<16x32xf32> to vector<16x8xf32>
    %295 = arith.truncf %294 : vector<16x8xf32> to vector<16x8xbf16>
    %296 = vector.extract_strided_slice %229 {offsets = [0, 24], sizes = [16, 8], strides = [1, 1]} : vector<16x32xf32> to vector<16x8xf32>
    %297 = arith.truncf %296 : vector<16x8xf32> to vector<16x8xbf16>
    %298 = vector.extract_strided_slice %230 {offsets = [0, 24], sizes = [16, 8], strides = [1, 1]} : vector<16x32xf32> to vector<16x8xf32>
    %299 = arith.truncf %298 : vector<16x8xf32> to vector<16x8xbf16>
    %cst_112 = arith.constant dense<0.000000e+00> : vector<16x16xf32>
    %300 = tpu.matmul %295, %297, %cst_112 {dimension_numbers = #tpu.dot_dimension_numbers<[1], [1], [0], [0], [0, 0, 1, 0], [], []>} : vector<16x8xbf16>, vector<16x8xbf16>, vector<16x16xf32> -> vector<16x16xf32>
    %cst_113 = arith.constant 0.353553385 : f32
    %301 = vector.broadcast %cst_113 : f32 to vector<16x16xf32>
    %302 = arith.mulf %300, %301 : vector<16x16xf32>
    %cst_114 = arith.constant dense<0xFF800000> : vector<16xf32>
    %303 = vector.multi_reduction <maximumf>, %302, %cst_114 [1] : vector<16x16xf32> to vector<16xf32>
    %304 = vector.shape_cast %303 : vector<16xf32> to vector<16x1xf32>
    %305 = vector.broadcast %304 : vector<16x1xf32> to vector<16x16xf32>
    %306 = arith.subf %302, %305 : vector<16x16xf32>
    %307 = math.exp %306 : vector<16x16xf32>
    %cst_115 = arith.constant dense<0.000000e+00> : vector<16xf32>
    %308 = vector.multi_reduction <add>, %307, %cst_115 [1] : vector<16x16xf32> to vector<16xf32>
    %309 = vector.shape_cast %308 : vector<16xf32> to vector<16x1xf32>
    %310 = tpu.reciprocal %309 {approx = true} : vector<16x1xf32> -> vector<16x1xf32>
    %311 = vector.broadcast %310 : vector<16x1xf32> to vector<16x16xf32>
    %312 = arith.mulf %307, %311 : vector<16x16xf32>
    %313 = arith.truncf %312 : vector<16x16xf32> to vector<16x16xbf16>
    %cst_116 = arith.constant dense<0.000000e+00> : vector<16x8xf32>
    %314 = tpu.matmul %313, %299, %cst_116 {dimension_numbers = #tpu.dot_dimension_numbers<[1], [0], [0], [1], [0, 0, 1, 1], [], []>} : vector<16x16xbf16>, vector<16x8xbf16>, vector<16x8xf32> -> vector<16x8xf32>
    %315 = tpu.concatenate %251, %272, %293, %314 in 1 : vector<16x8xf32>, vector<16x8xf32>, vector<16x8xf32>, vector<16x8xf32> -> vector<16x32xf32>
    %316 = arith.truncf %315 : vector<16x32xf32> to vector<16x32xbf16>
    %c1_117 = arith.constant 1 : index
    %c0_118 = arith.constant 0 : index
    %c0_119 = arith.constant 0 : index
    %317 = vector.load %arg8[%c1_117, %c0_118, %c0_119] : memref<2x32x32xbf16, #tpu.memory_space<vmem>>, vector<1x32x32xbf16>
    %318 = vector.shape_cast %317 : vector<1x32x32xbf16> to vector<32x32xbf16>
    %cst_120 = arith.constant dense<0.000000e+00> : vector<16x32xf32>
    %319 = tpu.matmul %316, %318, %cst_120 {dimension_numbers = #tpu.dot_dimension_numbers<[1], [0], [0], [1], [0, 0, 1, 1], [], []>} : vector<16x32xbf16>, vector<32x32xbf16>, vector<16x32xf32> -> vector<16x32xf32>
    %c1_121 = arith.constant 1 : index
    %c0_122 = arith.constant 0 : index
    %c0_123 = arith.constant 0 : index
    %320 = vector.load %arg9[%c1_121, %c0_122, %c0_123] : memref<2x1x32xf32, #tpu.memory_space<vmem>>, vector<1x1x32xf32>
    %321 = vector.shape_cast %320 : vector<1x1x32xf32> to vector<1x32xf32>
    %322 = vector.broadcast %321 : vector<1x32xf32> to vector<16x32xf32>
    %323 = arith.addf %319, %322 : vector<16x32xf32>
    %324 = arith.addf %193, %323 : vector<16x32xf32>
    %c1_124 = arith.constant 1 : index
    %c0_125 = arith.constant 0 : index
    %c0_126 = arith.constant 0 : index
    %325 = vector.load %arg10[%c1_124, %c0_125, %c0_126] : memref<2x1x32xf32, #tpu.memory_space<vmem>>, vector<1x1x32xf32>
    %326 = vector.shape_cast %325 : vector<1x1x32xf32> to vector<1x32xf32>
    %c1_127 = arith.constant 1 : index
    %c0_128 = arith.constant 0 : index
    %c0_129 = arith.constant 0 : index
    %327 = vector.load %arg11[%c1_127, %c0_128, %c0_129] : memref<2x1x32xf32, #tpu.memory_space<vmem>>, vector<1x1x32xf32>
    %328 = vector.shape_cast %327 : vector<1x1x32xf32> to vector<1x32xf32>
    %cst_130 = arith.constant dense<0.000000e+00> : vector<16xf32>
    %329 = vector.multi_reduction <add>, %324, %cst_130 [1] : vector<16x32xf32> to vector<16xf32>
    %330 = vector.shape_cast %329 : vector<16xf32> to vector<16x1xf32>
    %cst_131 = arith.constant 3.200000e+01 : f32
    %331 = vector.broadcast %cst_131 : f32 to vector<16x1xf32>
    %332 = arith.divf %330, %331 : vector<16x1xf32>
    %333 = vector.broadcast %332 : vector<16x1xf32> to vector<16x32xf32>
    %334 = arith.subf %324, %333 : vector<16x32xf32>
    %335 = arith.mulf %334, %334 : vector<16x32xf32>
    %cst_132 = arith.constant dense<0.000000e+00> : vector<16xf32>
    %336 = vector.multi_reduction <add>, %335, %cst_132 [1] : vector<16x32xf32> to vector<16xf32>
    %337 = vector.shape_cast %336 : vector<16xf32> to vector<16x1xf32>
    %cst_133 = arith.constant 3.200000e+01 : f32
    %338 = vector.broadcast %cst_133 : f32 to vector<16x1xf32>
    %339 = arith.divf %337, %338 : vector<16x1xf32>
    %340 = vector.broadcast %332 : vector<16x1xf32> to vector<16x32xf32>
    %341 = arith.subf %324, %340 : vector<16x32xf32>
    %cst_134 = arith.constant 9.99999974E-6 : f32
    %342 = vector.broadcast %cst_134 : f32 to vector<16x1xf32>
    %343 = arith.addf %339, %342 : vector<16x1xf32>
    %344 = math.rsqrt %343 : vector<16x1xf32>
    %345 = vector.broadcast %344 : vector<16x1xf32> to vector<16x32xf32>
    %346 = arith.mulf %341, %345 : vector<16x32xf32>
    %347 = vector.broadcast %326 : vector<1x32xf32> to vector<16x32xf32>
    %348 = arith.mulf %346, %347 : vector<16x32xf32>
    %349 = vector.broadcast %328 : vector<1x32xf32> to vector<16x32xf32>
    %350 = arith.addf %348, %349 : vector<16x32xf32>
    %351 = arith.truncf %350 : vector<16x32xf32> to vector<16x32xbf16>
    %c1_135 = arith.constant 1 : index
    %c0_136 = arith.constant 0 : index
    %c0_137 = arith.constant 0 : index
    %352 = vector.load %arg12[%c1_135, %c0_136, %c0_137] : memref<2x32x128xbf16, #tpu.memory_space<vmem>>, vector<1x32x128xbf16>
    %353 = vector.shape_cast %352 : vector<1x32x128xbf16> to vector<32x128xbf16>
    %cst_138 = arith.constant dense<0.000000e+00> : vector<16x128xf32>
    %354 = tpu.matmul %351, %353, %cst_138 {dimension_numbers = #tpu.dot_dimension_numbers<[1], [0], [0], [1], [0, 0, 1, 1], [], []>} : vector<16x32xbf16>, vector<32x128xbf16>, vector<16x128xf32> -> vector<16x128xf32>
    %c1_139 = arith.constant 1 : index
    %c0_140 = arith.constant 0 : index
    %c0_141 = arith.constant 0 : index
    %355 = vector.load %arg13[%c1_139, %c0_140, %c0_141] : memref<2x1x128xf32, #tpu.memory_space<vmem>>, vector<1x1x128xf32>
    %356 = vector.shape_cast %355 : vector<1x1x128xf32> to vector<1x128xf32>
    %357 = vector.broadcast %356 : vector<1x128xf32> to vector<16x128xf32>
    %358 = arith.addf %354, %357 : vector<16x128xf32>
    %359 = arith.mulf %358, %358 : vector<16x128xf32>
    %360 = arith.mulf %358, %359 : vector<16x128xf32>
    %cst_142 = arith.constant 4.471500e-02 : f32
    %361 = vector.broadcast %cst_142 : f32 to vector<16x128xf32>
    %362 = arith.mulf %361, %360 : vector<16x128xf32>
    %363 = arith.addf %358, %362 : vector<16x128xf32>
    %cst_143 = arith.constant 0.797884583 : f32
    %364 = vector.broadcast %cst_143 : f32 to vector<16x128xf32>
    %365 = arith.mulf %364, %363 : vector<16x128xf32>
    %366 = math.tanh %365 : vector<16x128xf32>
    %cst_144 = arith.constant 1.000000e+00 : f32
    %367 = vector.broadcast %cst_144 : f32 to vector<16x128xf32>
    %368 = arith.addf %367, %366 : vector<16x128xf32>
    %cst_145 = arith.constant 5.000000e-01 : f32
    %369 = vector.broadcast %cst_145 : f32 to vector<16x128xf32>
    %370 = arith.mulf %369, %368 : vector<16x128xf32>
    %371 = arith.mulf %358, %370 : vector<16x128xf32>
    %372 = arith.truncf %371 : vector<16x128xf32> to vector<16x128xbf16>
    %c1_146 = arith.constant 1 : index
    %c0_147 = arith.constant 0 : index
    %c0_148 = arith.constant 0 : index
    %373 = vector.load %arg14[%c1_146, %c0_147, %c0_148] : memref<2x128x32xbf16, #tpu.memory_space<vmem>>, vector<1x128x32xbf16>
    %374 = vector.shape_cast %373 : vector<1x128x32xbf16> to vector<128x32xbf16>
    %cst_149 = arith.constant dense<0.000000e+00> : vector<16x32xf32>
    %375 = tpu.matmul %372, %374, %cst_149 {dimension_numbers = #tpu.dot_dimension_numbers<[1], [0], [0], [1], [0, 0, 1, 1], [], []>} : vector<16x128xbf16>, vector<128x32xbf16>, vector<16x32xf32> -> vector<16x32xf32>
    %c1_150 = arith.constant 1 : index
    %c0_151 = arith.constant 0 : index
    %c0_152 = arith.constant 0 : index
    %376 = vector.load %arg15[%c1_150, %c0_151, %c0_152] : memref<2x1x32xf32, #tpu.memory_space<vmem>>, vector<1x1x32xf32>
    %377 = vector.shape_cast %376 : vector<1x1x32xf32> to vector<1x32xf32>
    %378 = vector.broadcast %377 : vector<1x32xf32> to vector<16x32xf32>
    %379 = arith.addf %375, %378 : vector<16x32xf32>
    %380 = arith.addf %324, %379 : vector<16x32xf32>
    %c0_153 = arith.constant 0 : index
    %c0_154 = arith.constant 0 : index
    %381 = vector.load %arg16[%c0_153, %c0_154] : memref<1x32xf32, #tpu.memory_space<vmem>>, vector<1x32xf32>
    %c0_155 = arith.constant 0 : index
    %c0_156 = arith.constant 0 : index
    %382 = vector.load %arg17[%c0_155, %c0_156] : memref<1x32xf32, #tpu.memory_space<vmem>>, vector<1x32xf32>
    %cst_157 = arith.constant dense<0.000000e+00> : vector<16xf32>
    %383 = vector.multi_reduction <add>, %380, %cst_157 [1] : vector<16x32xf32> to vector<16xf32>
    %384 = vector.shape_cast %383 : vector<16xf32> to vector<16x1xf32>
    %cst_158 = arith.constant 3.200000e+01 : f32
    %385 = vector.broadcast %cst_158 : f32 to vector<16x1xf32>
    %386 = arith.divf %384, %385 : vector<16x1xf32>
    %387 = vector.broadcast %386 : vector<16x1xf32> to vector<16x32xf32>
    %388 = arith.subf %380, %387 : vector<16x32xf32>
    %389 = arith.mulf %388, %388 : vector<16x32xf32>
    %cst_159 = arith.constant dense<0.000000e+00> : vector<16xf32>
    %390 = vector.multi_reduction <add>, %389, %cst_159 [1] : vector<16x32xf32> to vector<16xf32>
    %391 = vector.shape_cast %390 : vector<16xf32> to vector<16x1xf32>
    %cst_160 = arith.constant 3.200000e+01 : f32
    %392 = vector.broadcast %cst_160 : f32 to vector<16x1xf32>
    %393 = arith.divf %391, %392 : vector<16x1xf32>
    %394 = vector.broadcast %386 : vector<16x1xf32> to vector<16x32xf32>
    %395 = arith.subf %380, %394 : vector<16x32xf32>
    %cst_161 = arith.constant 9.99999974E-6 : f32
    %396 = vector.broadcast %cst_161 : f32 to vector<16x1xf32>
    %397 = arith.addf %393, %396 : vector<16x1xf32>
    %398 = math.rsqrt %397 : vector<16x1xf32>
    %399 = vector.broadcast %398 : vector<16x1xf32> to vector<16x32xf32>
    %400 = arith.mulf %395, %399 : vector<16x32xf32>
    %401 = vector.broadcast %381 : vector<1x32xf32> to vector<16x32xf32>
    %402 = arith.mulf %400, %401 : vector<16x32xf32>
    %403 = vector.broadcast %382 : vector<1x32xf32> to vector<16x32xf32>
    %404 = arith.addf %402, %403 : vector<16x32xf32>
    %405 = arith.truncf %404 : vector<16x32xf32> to vector<16x32xbf16>
    %c0_162 = arith.constant 0 : index
    %c0_163 = arith.constant 0 : index
    %406 = vector.load %arg18[%c0_162, %c0_163] : memref<32x128xbf16, #tpu.memory_space<vmem>>, vector<32x128xbf16>
    %cst_164 = arith.constant dense<0.000000e+00> : vector<16x128xf32>
    %407 = tpu.matmul %405, %406, %cst_164 {dimension_numbers = #tpu.dot_dimension_numbers<[1], [0], [0], [1], [0, 0, 1, 1], [], []>} : vector<16x32xbf16>, vector<32x128xbf16>, vector<16x128xf32> -> vector<16x128xf32>
    %c0_165 = arith.constant 0 : index
    %c0_166 = arith.constant 0 : index
    %408 = vector.load %arg19[%c0_165, %c0_166] : memref<1x128xf32, #tpu.memory_space<vmem>>, vector<1x128xf32>
    %409 = vector.broadcast %408 : vector<1x128xf32> to vector<16x128xf32>
    %410 = arith.addf %407, %409 : vector<16x128xf32>
    %cst_167 = arith.constant 0.000000e+00 : f32
    %411 = vector.broadcast %cst_167 : f32 to vector<16x128xf32>
    %412 = arith.maximumf %410, %411 : vector<16x128xf32>
    %413 = math.absf %410 : vector<16x128xf32>
    %cst_168 = arith.constant 0.000000e+00 : f32
    %414 = vector.broadcast %cst_168 : f32 to vector<16x128xf32>
    %415 = arith.subf %414, %413 : vector<16x128xf32>
    %416 = math.exp %415 : vector<16x128xf32>
    %417 = math.log1p %416 : vector<16x128xf32>
    %418 = arith.addf %412, %417 : vector<16x128xf32>
    %cst_169 = arith.constant 9.900000e-01 : f32
    %419 = vector.broadcast %cst_169 : f32 to vector<16x128xf32>
    %420 = arith.mulf %419, %418 : vector<16x128xf32>
    %cst_170 = arith.constant 0.00999999977 : f32
    %421 = vector.broadcast %cst_170 : f32 to vector<16x128xf32>
    %422 = arith.addf %421, %420 : vector<16x128xf32>
    %423 = tpu.iota {dimensions = array<i32: 1>} : vector<16x128xi32>
    %c2_i32 = arith.constant 2 : i32
    %424 = vector.broadcast %c2_i32 : i32 to vector<16x128xi32>
    %425 = arith.cmpi sge, %423, %424 : vector<16x128xi32>
    %c4_i32 = arith.constant 4 : i32
    %426 = vector.broadcast %c4_i32 : i32 to vector<16x128xi32>
    %427 = arith.cmpi slt, %423, %426 : vector<16x128xi32>
    %428 = arith.andi %425, %427 : vector<16x128xi1>
    %429 = arith.select %428, %422, %410 : vector<16x128xi1>, vector<16x128xf32>
    %c0_171 = arith.constant 0 : index
    %c0_172 = arith.constant 0 : index
    %c0_173 = arith.constant 0 : index
    %430 = vector.load %arg20[%c0_171, %c0_172, %c0_173] : memref<1x16x128xf32, #tpu.memory_space<vmem>>, vector<1x16x128xf32>
    %431 = vector.shape_cast %430 : vector<1x16x128xf32> to vector<16x128xf32>
    %432 = vector.shape_cast %429 : vector<16x128xf32> to vector<1x16x128xf32>
    tpu.vector_store %arg20[%c0_171, %c0_172, %c0_173], %432 {strides = array<i32>} : memref<1x16x128xf32, #tpu.memory_space<vmem>>, vector<1x16x128xf32>,
    return
  }
  func.func @transform_0(%arg0: i32) -> (i32, i32, i32) {
    %c0_i32 = arith.constant 0 : i32
    %c0_i32_0 = arith.constant 0 : i32
    %c0_i32_1 = arith.constant 0 : i32
    return %arg0, %c0_i32, %c0_i32_0 : i32, i32, i32
  }
  func.func @transform_1(%arg0: i32) -> (i32, i32) {
    %c0_i32 = arith.constant 0 : i32
    %c0_i32_0 = arith.constant 0 : i32
    %c0_i32_1 = arith.constant 0 : i32
    return %c0_i32, %c0_i32_0 : i32, i32
  }
  func.func @transform_2(%arg0: i32) -> (i32, i32) {
    %c0_i32 = arith.constant 0 : i32
    %c0_i32_0 = arith.constant 0 : i32
    %c0_i32_1 = arith.constant 0 : i32
    return %c0_i32, %c0_i32_0 : i32, i32
  }
  func.func @transform_3(%arg0: i32) -> (i32, i32, i32) {
    %c0_i32 = arith.constant 0 : i32
    %c0_i32_0 = arith.constant 0 : i32
    %c0_i32_1 = arith.constant 0 : i32
    %c0_i32_2 = arith.constant 0 : i32
    return %c0_i32, %c0_i32_0, %c0_i32_1 : i32, i32, i32
  }
  func.func @transform_4(%arg0: i32) -> (i32, i32, i32) {
    %c0_i32 = arith.constant 0 : i32
    %c0_i32_0 = arith.constant 0 : i32
    %c0_i32_1 = arith.constant 0 : i32
    %c0_i32_2 = arith.constant 0 : i32
    return %c0_i32, %c0_i32_0, %c0_i32_1 : i32, i32, i32
  }
  func.func @transform_5(%arg0: i32) -> (i32, i32, i32) {
    %c0_i32 = arith.constant 0 : i32
    %c0_i32_0 = arith.constant 0 : i32
    %c0_i32_1 = arith.constant 0 : i32
    %c0_i32_2 = arith.constant 0 : i32
    return %c0_i32, %c0_i32_0, %c0_i32_1 : i32, i32, i32
  }
  func.func @transform_6(%arg0: i32) -> (i32, i32, i32) {
    %c0_i32 = arith.constant 0 : i32
    %c0_i32_0 = arith.constant 0 : i32
    %c0_i32_1 = arith.constant 0 : i32
    %c0_i32_2 = arith.constant 0 : i32
    return %c0_i32, %c0_i32_0, %c0_i32_1 : i32, i32, i32
  }
  func.func @transform_7(%arg0: i32) -> (i32, i32, i32) {
    %c0_i32 = arith.constant 0 : i32
    %c0_i32_0 = arith.constant 0 : i32
    %c0_i32_1 = arith.constant 0 : i32
    %c0_i32_2 = arith.constant 0 : i32
    return %c0_i32, %c0_i32_0, %c0_i32_1 : i32, i32, i32
  }
  func.func @transform_8(%arg0: i32) -> (i32, i32, i32) {
    %c0_i32 = arith.constant 0 : i32
    %c0_i32_0 = arith.constant 0 : i32
    %c0_i32_1 = arith.constant 0 : i32
    %c0_i32_2 = arith.constant 0 : i32
    return %c0_i32, %c0_i32_0, %c0_i32_1 : i32, i32, i32
  }
  func.func @transform_9(%arg0: i32) -> (i32, i32, i32) {
    %c0_i32 = arith.constant 0 : i32
    %c0_i32_0 = arith.constant 0 : i32
    %c0_i32_1 = arith.constant 0 : i32
    %c0_i32_2 = arith.constant 0 : i32
    return %c0_i32, %c0_i32_0, %c0_i32_1 : i32, i32, i32
  }
  func.func @transform_10(%arg0: i32) -> (i32, i32, i32) {
    %c0_i32 = arith.constant 0 : i32
    %c0_i32_0 = arith.constant 0 : i32
    %c0_i32_1 = arith.constant 0 : i32
    %c0_i32_2 = arith.constant 0 : i32
    return %c0_i32, %c0_i32_0, %c0_i32_1 : i32, i32, i32
  }
  func.func @transform_11(%arg0: i32) -> (i32, i32, i32) {
    %c0_i32 = arith.constant 0 : i32
    %c0_i32_0 = arith.constant 0 : i32
    %c0_i32_1 = arith.constant 0 : i32
    %c0_i32_2 = arith.constant 0 : i32
    return %c0_i32, %c0_i32_0, %c0_i32_1 : i32, i32, i32
  }
  func.func @transform_12(%arg0: i32) -> (i32, i32, i32) {
    %c0_i32 = arith.constant 0 : i32
    %c0_i32_0 = arith.constant 0 : i32
    %c0_i32_1 = arith.constant 0 : i32
    %c0_i32_2 = arith.constant 0 : i32
    return %c0_i32, %c0_i32_0, %c0_i32_1 : i32, i32, i32
  }
  func.func @transform_13(%arg0: i32) -> (i32, i32, i32) {
    %c0_i32 = arith.constant 0 : i32
    %c0_i32_0 = arith.constant 0 : i32
    %c0_i32_1 = arith.constant 0 : i32
    %c0_i32_2 = arith.constant 0 : i32
    return %c0_i32, %c0_i32_0, %c0_i32_1 : i32, i32, i32
  }
  func.func @transform_14(%arg0: i32) -> (i32, i32, i32) {
    %c0_i32 = arith.constant 0 : i32
    %c0_i32_0 = arith.constant 0 : i32
    %c0_i32_1 = arith.constant 0 : i32
    %c0_i32_2 = arith.constant 0 : i32
    return %c0_i32, %c0_i32_0, %c0_i32_1 : i32, i32, i32
  }
  func.func @transform_15(%arg0: i32) -> (i32, i32) {
    %c0_i32 = arith.constant 0 : i32
    %c0_i32_0 = arith.constant 0 : i32
    %c0_i32_1 = arith.constant 0 : i32
    return %c0_i32, %c0_i32_0 : i32, i32
  }
  func.func @transform_16(%arg0: i32) -> (i32, i32) {
    %c0_i32 = arith.constant 0 : i32
    %c0_i32_0 = arith.constant 0 : i32
    %c0_i32_1 = arith.constant 0 : i32
    return %c0_i32, %c0_i32_0 : i32, i32
  }
  func.func @transform_17(%arg0: i32) -> (i32, i32) {
    %c0_i32 = arith.constant 0 : i32
    %c0_i32_0 = arith.constant 0 : i32
    %c0_i32_1 = arith.constant 0 : i32
    return %c0_i32, %c0_i32_0 : i32, i32
  }
  func.func @transform_18(%arg0: i32) -> (i32, i32) {
    %c0_i32 = arith.constant 0 : i32
    %c0_i32_0 = arith.constant 0 : i32
    %c0_i32_1 = arith.constant 0 : i32
    return %c0_i32, %c0_i32_0 : i32, i32
  }
  func.func @transform_19(%arg0: i32) -> (i32, i32, i32) {
    %c0_i32 = arith.constant 0 : i32
    %c0_i32_0 = arith.constant 0 : i32
    %c0_i32_1 = arith.constant 0 : i32
    return %arg0, %c0_i32, %c0_i32_0 : i32, i32, i32
  }
}

</mosaic_0001>

<llo_original>
// kernel: tpu_custom_call.1
$region0: #{tpu_custom_call.1}
  #allocation0 [shape = 'u32[]', space=smem, size = 0x4, offset = 0x4, fixed_abs, tag = 'smem constant byte address 0x4 - core index']
  #allocation1 [shape = 'u32[144,128]{1,0:T(1,128)}', space=vmem, size = 0x12000, scoped, tag = 'internal scratch']
  %s0 = inlined_call_operand.vmem [shape: f32[2,16,5], index: 0, kind: input, shape index: {}]
  %s1 = inlined_call_operand.vmem [shape: f32[5,32], index: 1, kind: input, shape index: {}]
  %s2 = inlined_call_operand.vmem [shape: f32[1,32], index: 2, kind: input, shape index: {}]
  %s3 = inlined_call_operand.vmem [shape: f32[2,1,32], index: 3, kind: input, shape index: {}]
  %s4 = inlined_call_operand.vmem [shape: f32[2,1,32], index: 4, kind: input, shape index: {}]
  %s5 = inlined_call_operand.vmem [shape: bf16[2,32,96], index: 5, kind: input, shape index: {}]
  %s6 = inlined_call_operand.vmem [shape: f32[2,1,96], index: 6, kind: input, shape index: {}]
  %s7 = inlined_call_operand.vmem [shape: bf16[2,32,32], index: 7, kind: input, shape index: {}]
  %s8 = inlined_call_operand.vmem [shape: f32[2,1,32], index: 8, kind: input, shape index: {}]
  %s9 = inlined_call_operand.vmem [shape: f32[2,1,32], index: 9, kind: input, shape index: {}]
  %s10 = inlined_call_operand.vmem [shape: f32[2,1,32], index: 10, kind: input, shape index: {}]
  %s11 = inlined_call_operand.vmem [shape: bf16[2,32,128], index: 11, kind: input, shape index: {}]
  %s12 = inlined_call_operand.vmem [shape: f32[2,1,128], index: 12, kind: input, shape index: {}]
  %s13 = inlined_call_operand.vmem [shape: bf16[2,128,32], index: 13, kind: input, shape index: {}]
  %s14 = inlined_call_operand.vmem [shape: f32[2,1,32], index: 14, kind: input, shape index: {}]
  %s15 = inlined_call_operand.vmem [shape: f32[1,32], index: 15, kind: input, shape index: {}]
  %s16 = inlined_call_operand.vmem [shape: f32[1,32], index: 16, kind: input, shape index: {}]
  %s17 = inlined_call_operand.vmem [shape: bf16[32,128], index: 17, kind: input, shape index: {}]
  %s18 = inlined_call_operand.vmem [shape: f32[1,128], index: 18, kind: input, shape index: {}]
  %s19 = inlined_call_operand.hbm [shape: f32[2,16,128], index: 19, kind: output, shape index: {}]
  %s20 = sld [smem:[#allocation0]]
  $region109: #{tpu_custom_call.1} parent=0
    _
  %s22 = ssub.s32 1, %s20
  %s23 = scalar_select 0, %s22, %s20
  $region1: #{tpu_custom_call.1} parent=0
    #allocation2 [shape = 'u8[16384]{0}', space=vmem, size = 0x4000, scoped, tag = 'output window, operand 0']
    #allocation3 [shape = 's32[2]{0}', space=sflag, size = 0x8, scoped, tag = 'scoped memory for tpu_custom_call.1']
    %24 = vsyncpa [#allocation3], 0
    %s25 = scalar_lea.sflag [#allocation3], 1
    %26 = vsyncpa %s25, 0
    loop: start=0, step=1, limit=4
    $region2: #{tpu_custom_call.1} parent=1 // loop_pre_header
      _
    $region3: #{tpu_custom_call.1} parent=1 // loop_header
      %s28 = sphi 0, %s32
      %p29 = scmp.ge.s32.totalorder %s28, 4
      %s38 = sphi 0, %s40
      %s41 = sphi 0, %s38
      %s42 = sphi 0, %s41
      %s58 = sphi 0, %s42
      %s62 = sphi 0, %s62
      %s64 = sphi 0, %s62
      %s65 = sphi 0, %s64
      %s79 = sphi 0, %s65
      %s83 = sphi 0, %s83
      %s85 = sphi 0, %s83
      %s86 = sphi 0, %s85
      %s100 = sphi 0, %s86
      %s104 = sphi 0, %s104
      %s106 = sphi 0, %s104
      %s107 = sphi 0, %s106
      %s121 = sphi 0, %s107
      %s125 = sphi 0, %s125
      %s127 = sphi 0, %s125
      %s128 = sphi 0, %s127
      %s142 = sphi 0, %s128
      %s146 = sphi 0, %s146
      %s148 = sphi 0, %s146
      %s149 = sphi 0, %s148
      %s163 = sphi 0, %s149
      %s167 = sphi 0, %s167
      %s169 = sphi 0, %s167
      %s170 = sphi 0, %s169
      %s184 = sphi 0, %s170
      %s188 = sphi 0, %s188
      %s190 = sphi 0, %s188
      %s191 = sphi 0, %s190
      %s205 = sphi 0, %s191
      %s209 = sphi 0, %s209
      %s211 = sphi 0, %s209
      %s212 = sphi 0, %s211
      %s226 = sphi 0, %s212
      %s230 = sphi 0, %s230
      %s232 = sphi 0, %s230
      %s233 = sphi 0, %s232
      %s247 = sphi 0, %s233
      %s251 = sphi 0, %s251
      %s253 = sphi 0, %s251
      %s254 = sphi 0, %s253
      %s268 = sphi 0, %s254
      %s272 = sphi 0, %s272
      %s274 = sphi 0, %s272
      %s275 = sphi 0, %s274
      %s289 = sphi 0, %s275
      %s293 = sphi 0, %s293
      %s295 = sphi 0, %s293
      %s296 = sphi 0, %s295
      %s310 = sphi 0, %s296
      %s314 = sphi 0, %s314
      %s316 = sphi 0, %s314
      %s317 = sphi 0, %s316
      %s331 = sphi 0, %s317
      %s335 = sphi 0, %s335
      %s337 = sphi 0, %s335
      %s338 = sphi 0, %s337
      %s352 = sphi 0, %s338
      %s356 = sphi 0, %s356
      %s358 = sphi 0, %s356
      %s359 = sphi 0, %s358
      %s373 = sphi 0, %s359
      %s377 = sphi 0, %s377
      %s379 = sphi 0, %s377
      %s380 = sphi 0, %s379
      %s394 = sphi 0, %s380
      %s398 = sphi 0, %s398
      %s400 = sphi 0, %s398
      %s401 = sphi 0, %s400
      %s415 = sphi 0, %s401
      %s419 = sphi 0, %s419
      %s421 = sphi 0, %s419
      %s422 = sphi 0, %s421
      %s436 = sphi 0, %s422
      %s442 = sphi 0, %s444
      %s445 = sphi 0, %s442
      %s446 = sphi 0, %s445
      %s462 = sphi 0, %s446
    $region4: #{tpu_custom_call.1} parent=1 // loop_header_branch
      %31 = sbr.rel (%p29) target = $region8
    $region5: #{tpu_custom_call.1} parent=1 // loop_body
      %s33 = ssub.s32 %s28, 1
      %s34 = ssub.s32 %s28, 2
      %s35 = sadd.s32 %s28, 1
      %s36 = ssub.s32 %s28, %s35
      %p37 = scmp.eq.s32.totalorder %s36, 0
      %s39 = sadd.s32 %s38, 1
      %s40 = scalar_select %p37, %s38, %s39
      %p43 = pneg %p37
      %p44 = scmp.eq.s32.totalorder %s28, 1
      %p45 = por %p43, %p44
      %p46 = scmp.ne.s32.totalorder %s38, %s41
      %p47 = scmp.eq.s32.totalorder %s28, 0
      %p48 = por %p46, %p47
      %p49 = scmp.ne.s32.totalorder %s38, %s41
      %p50 = scmp.eq.s32.totalorder %s33, 1
      %p51 = por %p49, %p50
      %p52 = scmp.ne.s32.totalorder %s41, %s42
      %p53 = scmp.eq.s32.totalorder %s33, 0
      %p54 = por %p52, %p53
      %p55 = scmp.ne.s32.totalorder %s41, %s42
      %p56 = scmp.eq.s32.totalorder %s34, 1
      %p57 = por %p55, %p56
      %p59 = scmp.ne.s32.totalorder %s42, %s58
      %p60 = scmp.eq.s32.totalorder %s34, 0
      %p61 = por %p59, %p60
      %s63 = sadd.s32 %s62, 1
      %p66 = scmp.eq.s32.totalorder %s28, 1
      %p67 = scmp.ne.s32.totalorder %s62, %s64
      %p68 = scmp.eq.s32.totalorder %s28, 0
      %p69 = por %p67, %p68
      %p70 = scmp.ne.s32.totalorder %s62, %s64
      %p71 = scmp.eq.s32.totalorder %s33, 1
      %p72 = por %p70, %p71
      %p73 = scmp.ne.s32.totalorder %s64, %s65
      %p74 = scmp.eq.s32.totalorder %s33, 0
      %p75 = por %p73, %p74
      %p76 = scmp.ne.s32.totalorder %s64, %s65
      %p77 = scmp.eq.s32.totalorder %s34, 1
      %p78 = por %p76, %p77
      %p80 = scmp.ne.s32.totalorder %s65, %s79
      %p81 = scmp.eq.s32.totalorder %s34, 0
      %p82 = por %p80, %p81
      %s84 = sadd.s32 %s83, 1
      %p87 = scmp.eq.s32.totalorder %s28, 1
      %p88 = scmp.ne.s32.totalorder %s83, %s85
      %p89 = scmp.eq.s32.totalorder %s28, 0
      %p90 = por %p88, %p89
      %p91 = scmp.ne.s32.totalorder %s83, %s85
      %p92 = scmp.eq.s32.totalorder %s33, 1
      %p93 = por %p91, %p92
      %p94 = scmp.ne.s32.totalorder %s85, %s86
      %p95 = scmp.eq.s32.totalorder %s33, 0
      %p96 = por %p94, %p95
      %p97 = scmp.ne.s32.totalorder %s85, %s86
      %p98 = scmp.eq.s32.totalorder %s34, 1
      %p99 = por %p97, %p98
      %p101 = scmp.ne.s32.totalorder %s86, %s100
      %p102 = scmp.eq.s32.totalorder %s34, 0
      %p103 = por %p101, %p102
      %s105 = sadd.s32 %s104, 1
      %p108 = scmp.eq.s32.totalorder %s28, 1
      %p109 = scmp.ne.s32.totalorder %s104, %s106
      %p110 = scmp.eq.s32.totalorder %s28, 0
      %p111 = por %p109, %p110
      %p112 = scmp.ne.s32.totalorder %s104, %s106
      %p113 = scmp.eq.s32.totalorder %s33, 1
      %p114 = por %p112, %p113
      %p115 = scmp.ne.s32.totalorder %s106, %s107
      %p116 = scmp.eq.s32.totalorder %s33, 0
      %p117 = por %p115, %p116
      %p118 = scmp.ne.s32.totalorder %s106, %s107
      %p119 = scmp.eq.s32.totalorder %s34, 1
      %p120 = por %p118, %p119
      %p122 = scmp.ne.s32.totalorder %s107, %s121
      %p123 = scmp.eq.s32.totalorder %s34, 0
      %p124 = por %p122, %p123
      %s126 = sadd.s32 %s125, 1
      %p129 = scmp.eq.s32.totalorder %s28, 1
      %p130 = scmp.ne.s32.totalorder %s125, %s127
      %p131 = scmp.eq.s32.totalorder %s28, 0
      %p132 = por %p130, %p131
      %p133 = scmp.ne.s32.totalorder %s125, %s127
      %p134 = scmp.eq.s32.totalorder %s33, 1
      %p135 = por %p133, %p134
      %p136 = scmp.ne.s32.totalorder %s127, %s128
      %p137 = scmp.eq.s32.totalorder %s33, 0
      %p138 = por %p136, %p137
      %p139 = scmp.ne.s32.totalorder %s127, %s128
      %p140 = scmp.eq.s32.totalorder %s34, 1
      %p141 = por %p139, %p140
      %p143 = scmp.ne.s32.totalorder %s128, %s142
      %p144 = scmp.eq.s32.totalorder %s34, 0
      %p145 = por %p143, %p144
      %s147 = sadd.s32 %s146, 1
      %p150 = scmp.eq.s32.totalorder %s28, 1
      %p151 = scmp.ne.s32.totalorder %s146, %s148
      %p152 = scmp.eq.s32.totalorder %s28, 0
      %p153 = por %p151, %p152
      %p154 = scmp.ne.s32.totalorder %s146, %s148
      %p155 = scmp.eq.s32.totalorder %s33, 1
      %p156 = por %p154, %p155
      %p157 = scmp.ne.s32.totalorder %s148, %s149
      %p158 = scmp.eq.s32.totalorder %s33, 0
      %p159 = por %p157, %p158
      %p160 = scmp.ne.s32.totalorder %s148, %s149
      %p161 = scmp.eq.s32.totalorder %s34, 1
      %p162 = por %p160, %p161
      %p164 = scmp.ne.s32.totalorder %s149, %s163
      %p165 = scmp.eq.s32.totalorder %s34, 0
      %p166 = por %p164, %p165
      %s168 = sadd.s32 %s167, 1
      %p171 = scmp.eq.s32.totalorder %s28, 1
      %p172 = scmp.ne.s32.totalorder %s167, %s169
      %p173 = scmp.eq.s32.totalorder %s28, 0
      %p174 = por %p172, %p173
      %p175 = scmp.ne.s32.totalorder %s167, %s169
      %p176 = scmp.eq.s32.totalorder %s33, 1
      %p177 = por %p175, %p176
      %p178 = scmp.ne.s32.totalorder %s169, %s170
      %p179 = scmp.eq.s32.totalorder %s33, 0
      %p180 = por %p178, %p179
      %p181 = scmp.ne.s32.totalorder %s169, %s170
      %p182 = scmp.eq.s32.totalorder %s34, 1
      %p183 = por %p181, %p182
      %p185 = scmp.ne.s32.totalorder %s170, %s184
      %p186 = scmp.eq.s32.totalorder %s34, 0
      %p187 = por %p185, %p186
      %s189 = sadd.s32 %s188, 1
      %p192 = scmp.eq.s32.totalorder %s28, 1
      %p193 = scmp.ne.s32.totalorder %s188, %s190
      %p194 = scmp.eq.s32.totalorder %s28, 0
      %p195 = por %p193, %p194
      %p196 = scmp.ne.s32.totalorder %s188, %s190
      %p197 = scmp.eq.s32.totalorder %s33, 1
      %p198 = por %p196, %p197
      %p199 = scmp.ne.s32.totalorder %s190, %s191
      %p200 = scmp.eq.s32.totalorder %s33, 0
      %p201 = por %p199, %p200
      %p202 = scmp.ne.s32.totalorder %s190, %s191
      %p203 = scmp.eq.s32.totalorder %s34, 1
      %p204 = por %p202, %p203
      %p206 = scmp.ne.s32.totalorder %s191, %s205
      %p207 = scmp.eq.s32.totalorder %s34, 0
      %p208 = por %p206, %p207
      %s210 = sadd.s32 %s209, 1
      %p213 = scmp.eq.s32.totalorder %s28, 1
      %p214 = scmp.ne.s32.totalorder %s209, %s211
      %p215 = scmp.eq.s32.totalorder %s28, 0
      %p216 = por %p214, %p215
      %p217 = scmp.ne.s32.totalorder %s209, %s211
      %p218 = scmp.eq.s32.totalorder %s33, 1
      %p219 = por %p217, %p218
      %p220 = scmp.ne.s32.totalorder %s211, %s212
      %p221 = scmp.eq.s32.totalorder %s33, 0
      %p222 = por %p220, %p221
      %p223 = scmp.ne.s32.totalorder %s211, %s212
      %p224 = scmp.eq.s32.totalorder %s34, 1
      %p225 = por %p223, %p224
      %p227 = scmp.ne.s32.totalorder %s212, %s226
      %p228 = scmp.eq.s32.totalorder %s34, 0
      %p229 = por %p227, %p228
      %s231 = sadd.s32 %s230, 1
      %p234 = scmp.eq.s32.totalorder %s28, 1
      %p235 = scmp.ne.s32.totalorder %s230, %s232
      %p236 = scmp.eq.s32.totalorder %s28, 0
      %p237 = por %p235, %p236
      %p238 = scmp.ne.s32.totalorder %s230, %s232
      %p239 = scmp.eq.s32.totalorder %s33, 1
      %p240 = por %p238, %p239
      %p241 = scmp.ne.s32.totalorder %s232, %s233
      %p242 = scmp.eq.s32.totalorder %s33, 0
      %p243 = por %p241, %p242
      %p244 = scmp.ne.s32.totalorder %s232, %s233
      %p245 = scmp.eq.s32.totalorder %s34, 1
      %p246 = por %p244, %p245
      %p248 = scmp.ne.s32.totalorder %s233, %s247
      %p249 = scmp.eq.s32.totalorder %s34, 0
      %p250 = por %p248, %p249
      %s252 = sadd.s32 %s251, 1
      %p255 = scmp.eq.s32.totalorder %s28, 1
      %p256 = scmp.ne.s32.totalorder %s251, %s253
      %p257 = scmp.eq.s32.totalorder %s28, 0
      %p258 = por %p256, %p257
      %p259 = scmp.ne.s32.totalorder %s251, %s253
      %p260 = scmp.eq.s32.totalorder %s33, 1
      %p261 = por %p259, %p260
      %p262 = scmp.ne.s32.totalorder %s253, %s254
      %p263 = scmp.eq.s32.totalorder %s33, 0
      %p264 = por %p262, %p263
      %p265 = scmp.ne.s32.totalorder %s253, %s254
      %p266 = scmp.eq.s32.totalorder %s34, 1
      %p267 = por %p265, %p266
      %p269 = scmp.ne.s32.totalorder %s254, %s268
      %p270 = scmp.eq.s32.totalorder %s34, 0
      %p271 = por %p269, %p270
      %s273 = sadd.s32 %s272, 1
      %p276 = scmp.eq.s32.totalorder %s28, 1
      %p277 = scmp.ne.s32.totalorder %s272, %s274
      %p278 = scmp.eq.s32.totalorder %s28, 0
      %p279 = por %p277, %p278
      %p280 = scmp.ne.s32.totalorder %s272, %s274
      %p281 = scmp.eq.s32.totalorder %s33, 1
      %p282 = por %p280, %p281
      %p283 = scmp.ne.s32.totalorder %s274, %s275
      %p284 = scmp.eq.s32.totalorder %s33, 0
      %p285 = por %p283, %p284
      %p286 = scmp.ne.s32.totalorder %s274, %s275
      %p287 = scmp.eq.s32.totalorder %s34, 1
      %p288 = por %p286, %p287
      %p290 = scmp.ne.s32.totalorder %s275, %s289
      %p291 = scmp.eq.s32.totalorder %s34, 0
      %p292 = por %p290, %p291
      %s294 = sadd.s32 %s293, 1
      %p297 = scmp.eq.s32.totalorder %s28, 1
      %p298 = scmp.ne.s32.totalorder %s293, %s295
      %p299 = scmp.eq.s32.totalorder %s28, 0
      %p300 = por %p298, %p299
      %p301 = scmp.ne.s32.totalorder %s293, %s295
      %p302 = scmp.eq.s32.totalorder %s33, 1
      %p303 = por %p301, %p302
      %p304 = scmp.ne.s32.totalorder %s295, %s296
      %p305 = scmp.eq.s32.totalorder %s33, 0
      %p306 = por %p304, %p305
      %p307 = scmp.ne.s32.totalorder %s295, %s296
      %p308 = scmp.eq.s32.totalorder %s34, 1
      %p309 = por %p307, %p308
      %p311 = scmp.ne.s32.totalorder %s296, %s310
      %p312 = scmp.eq.s32.totalorder %s34, 0
      %p313 = por %p311, %p312
      %s315 = sadd.s32 %s314, 1
      %p318 = scmp.eq.s32.totalorder %s28, 1
      %p319 = scmp.ne.s32.totalorder %s314, %s316
      %p320 = scmp.eq.s32.totalorder %s28, 0
      %p321 = por %p319, %p320
      %p322 = scmp.ne.s32.totalorder %s314, %s316
      %p323 = scmp.eq.s32.totalorder %s33, 1
      %p324 = por %p322, %p323
      %p325 = scmp.ne.s32.totalorder %s316, %s317
      %p326 = scmp.eq.s32.totalorder %s33, 0
      %p327 = por %p325, %p326
      %p328 = scmp.ne.s32.totalorder %s316, %s317
      %p329 = scmp.eq.s32.totalorder %s34, 1
      %p330 = por %p328, %p329
      %p332 = scmp.ne.s32.totalorder %s317, %s331
      %p333 = scmp.eq.s32.totalorder %s34, 0
      %p334 = por %p332, %p333
      %s336 = sadd.s32 %s335, 1
      %p339 = scmp.eq.s32.totalorder %s28, 1
      %p340 = scmp.ne.s32.totalorder %s335, %s337
      %p341 = scmp.eq.s32.totalorder %s28, 0
      %p342 = por %p340, %p341
      %p343 = scmp.ne.s32.totalorder %s335, %s337
      %p344 = scmp.eq.s32.totalorder %s33, 1
      %p345 = por %p343, %p344
      %p346 = scmp.ne.s32.totalorder %s337, %s338
      %p347 = scmp.eq.s32.totalorder %s33, 0
      %p348 = por %p346, %p347
      %p349 = scmp.ne.s32.totalorder %s337, %s338
      %p350 = scmp.eq.s32.totalorder %s34, 1
      %p351 = por %p349, %p350
      %p353 = scmp.ne.s32.totalorder %s338, %s352
      %p354 = scmp.eq.s32.totalorder %s34, 0
      %p355 = por %p353, %p354
      %s357 = sadd.s32 %s356, 1
      %p360 = scmp.eq.s32.totalorder %s28, 1
      %p361 = scmp.ne.s32.totalorder %s356, %s358
      %p362 = scmp.eq.s32.totalorder %s28, 0
      %p363 = por %p361, %p362
      %p364 = scmp.ne.s32.totalorder %s356, %s358
      %p365 = scmp.eq.s32.totalorder %s33, 1
      %p366 = por %p364, %p365
      %p367 = scmp.ne.s32.totalorder %s358, %s359
      %p368 = scmp.eq.s32.totalorder %s33, 0
      %p369 = por %p367, %p368
      %p370 = scmp.ne.s32.totalorder %s358, %s359
      %p371 = scmp.eq.s32.totalorder %s34, 1
      %p372 = por %p370, %p371
      %p374 = scmp.ne.s32.totalorder %s359, %s373
      %p375 = scmp.eq.s32.totalorder %s34, 0
      %p376 = por %p374, %p375
      %s378 = sadd.s32 %s377, 1
      %p381 = scmp.eq.s32.totalorder %s28, 1
      %p382 = scmp.ne.s32.totalorder %s377, %s379
      %p383 = scmp.eq.s32.totalorder %s28, 0
      %p384 = por %p382, %p383
      %p385 = scmp.ne.s32.totalorder %s377, %s379
      %p386 = scmp.eq.s32.totalorder %s33, 1
      %p387 = por %p385, %p386
      %p388 = scmp.ne.s32.totalorder %s379, %s380
      %p389 = scmp.eq.s32.totalorder %s33, 0
      %p390 = por %p388, %p389
      %p391 = scmp.ne.s32.totalorder %s379, %s380
      %p392 = scmp.eq.s32.totalorder %s34, 1
      %p393 = por %p391, %p392
      %p395 = scmp.ne.s32.totalorder %s380, %s394
      %p396 = scmp.eq.s32.totalorder %s34, 0
      %p397 = por %p395, %p396
      %s399 = sadd.s32 %s398, 1
      %p402 = scmp.eq.s32.totalorder %s28, 1
      %p403 = scmp.ne.s32.totalorder %s398, %s400
      %p404 = scmp.eq.s32.totalorder %s28, 0
      %p405 = por %p403, %p404
      %p406 = scmp.ne.s32.totalorder %s398, %s400
      %p407 = scmp.eq.s32.totalorder %s33, 1
      %p408 = por %p406, %p407
      %p409 = scmp.ne.s32.totalorder %s400, %s401
      %p410 = scmp.eq.s32.totalorder %s33, 0
      %p411 = por %p409, %p410
      %p412 = scmp.ne.s32.totalorder %s400, %s401
      %p413 = scmp.eq.s32.totalorder %s34, 1
      %p414 = por %p412, %p413
      %p416 = scmp.ne.s32.totalorder %s401, %s415
      %p417 = scmp.eq.s32.totalorder %s34, 0
      %p418 = por %p416, %p417
      %s420 = sadd.s32 %s419, 1
      %p423 = scmp.eq.s32.totalorder %s28, 1
      %p424 = scmp.ne.s32.totalorder %s419, %s421
      %p425 = scmp.eq.s32.totalorder %s28, 0
      %p426 = por %p424, %p425
      %p427 = scmp.ne.s32.totalorder %s419, %s421
      %p428 = scmp.eq.s32.totalorder %s33, 1
      %p429 = por %p427, %p428
      %p430 = scmp.ne.s32.totalorder %s421, %s422
      %p431 = scmp.eq.s32.totalorder %s33, 0
      %p432 = por %p430, %p431
      %p433 = scmp.ne.s32.totalorder %s421, %s422
      %p434 = scmp.eq.s32.totalorder %s34, 1
      %p435 = por %p433, %p434
      %p437 = scmp.ne.s32.totalorder %s422, %s436
      %p438 = scmp.eq.s32.totalorder %s34, 0
      %p439 = por %p437, %p438
      %s440 = ssub.s32 %s28, %s35
      %p441 = scmp.eq.s32.totalorder %s440, 0
      %s443 = sadd.s32 %s442, 1
      %s444 = scalar_select %p441, %s442, %s443
      %p447 = pneg %p441
      %p448 = scmp.eq.s32.totalorder %s28, 1
      %p449 = por %p447, %p448
      %p450 = scmp.ne.s32.totalorder %s442, %s445
      %p451 = scmp.eq.s32.totalorder %s28, 0
      %p452 = por %p450, %p451
      %p453 = scmp.ne.s32.totalorder %s442, %s445
      %p454 = scmp.eq.s32.totalorder %s33, 1
      %p455 = por %p453, %p454
      %p456 = scmp.ne.s32.totalorder %s445, %s446
      %p457 = scmp.eq.s32.totalorder %s33, 0
      %p458 = por %p456, %p457
      %p459 = scmp.ne.s32.totalorder %s445, %s446
      %p460 = scmp.eq.s32.totalorder %s34, 1
      %p461 = por %p459, %p460
      %p463 = scmp.ne.s32.totalorder %s446, %s462
      %p464 = scmp.eq.s32.totalorder %s34, 0
      %p465 = por %p463, %p464
      %p466 = scmp.le.s32.totalorder 1, %s28
      %p467 = scmp.lt.s32.totalorder %s28, 3
      %p468 = pnand %p466, %p467
      %p469 = pneg %p468
      // Predicated region
      $region9: #{tpu_custom_call.1} parent=5 // pred_check
        _
      $region10: #{tpu_custom_call.1} parent=5 // pred_check_branch
        %471 = sbr.rel (%p468) target = $region12
      $region11: #{tpu_custom_call.1} parent=5 // pred_region
        %s472 = ssub.s32 %s28, 1
        // Predicated region
        $region13: #{tpu_custom_call.1} parent=11 // pred_check
          %p473 = pneg %p75
        $region14: #{tpu_custom_call.1} parent=11 // pred_check_branch
          %475 = sbr.rel (%p473) target = $region16
        $region15: #{tpu_custom_call.1} parent=11 // pred_region
          _
        $region16: #{tpu_custom_call.1} parent=11 // pred_fallthru
          _
        // Predicated region
        $region17: #{tpu_custom_call.1} parent=11 // pred_check
          %p476 = pneg %p96
        $region18: #{tpu_custom_call.1} parent=11 // pred_check_branch
          %478 = sbr.rel (%p476) target = $region20
        $region19: #{tpu_custom_call.1} parent=11 // pred_region
          _
        $region20: #{tpu_custom_call.1} parent=11 // pred_fallthru
          _
        // Predicated region
        $region21: #{tpu_custom_call.1} parent=11 // pred_check
          %p479 = pneg %p117
        $region22: #{tpu_custom_call.1} parent=11 // pred_check_branch
          %481 = sbr.rel (%p479) target = $region24
        $region23: #{tpu_custom_call.1} parent=11 // pred_region
          _
        $region24: #{tpu_custom_call.1} parent=11 // pred_fallthru
          _
        // Predicated region
        $region25: #{tpu_custom_call.1} parent=11 // pred_check
          %p482 = pneg %p138
        $region26: #{tpu_custom_call.1} parent=11 // pred_check_branch
          %484 = sbr.rel (%p482) target = $region28
        $region27: #{tpu_custom_call.1} parent=11 // pred_region
          _
        $region28: #{tpu_custom_call.1} parent=11 // pred_fallthru
          _
        // Predicated region
        $region29: #{tpu_custom_call.1} parent=11 // pred_check
          %p485 = pneg %p159
        $region30: #{tpu_custom_call.1} parent=11 // pred_check_branch
          %487 = sbr.rel (%p485) target = $region32
        $region31: #{tpu_custom_call.1} parent=11 // pred_region
          _
        $region32: #{tpu_custom_call.1} parent=11 // pred_fallthru
          _
        // Predicated region
        $region33: #{tpu_custom_call.1} parent=11 // pred_check
          %p488 = pneg %p180
        $region34: #{tpu_custom_call.1} parent=11 // pred_check_branch
          %490 = sbr.rel (%p488) target = $region36
        $region35: #{tpu_custom_call.1} parent=11 // pred_region
          _
        $region36: #{tpu_custom_call.1} parent=11 // pred_fallthru
          _
        // Predicated region
        $region37: #{tpu_custom_call.1} parent=11 // pred_check
          %p491 = pneg %p201
        $region38: #{tpu_custom_call.1} parent=11 // pred_check_branch
          %493 = sbr.rel (%p491) target = $region40
        $region39: #{tpu_custom_call.1} parent=11 // pred_region
          _
        $region40: #{tpu_custom_call.1} parent=11 // pred_fallthru
          _
        // Predicated region
        $region41: #{tpu_custom_call.1} parent=11 // pred_check
          %p494 = pneg %p222
        $region42: #{tpu_custom_call.1} parent=11 // pred_check_branch
          %496 = sbr.rel (%p494) target = $region44
        $region43: #{tpu_custom_call.1} parent=11 // pred_region
          _
        $region44: #{tpu_custom_call.1} parent=11 // pred_fallthru
          _
        // Predicated region
        $region45: #{tpu_custom_call.1} parent=11 // pred_check
          %p497 = pneg %p243
        $region46: #{tpu_custom_call.1} parent=11 // pred_check_branch
          %499 = sbr.rel (%p497) target = $region48
        $region47: #{tpu_custom_call.1} parent=11 // pred_region
          _
        $region48: #{tpu_custom_call.1} parent=11 // pred_fallthru
          _
        // Predicated region
        $region49: #{tpu_custom_call.1} parent=11 // pred_check
          %p500 = pneg %p264
        $region50: #{tpu_custom_call.1} parent=11 // pred_check_branch
          %502 = sbr.rel (%p500) target = $region52
        $region51: #{tpu_custom_call.1} parent=11 // pred_region
          _
        $region52: #{tpu_custom_call.1} parent=11 // pred_fallthru
          _
        // Predicated region
        $region53: #{tpu_custom_call.1} parent=11 // pred_check
          %p503 = pneg %p285
        $region54: #{tpu_custom_call.1} parent=11 // pred_check_branch
          %505 = sbr.rel (%p503) target = $region56
        $region55: #{tpu_custom_call.1} parent=11 // pred_region
          _
        $region56: #{tpu_custom_call.1} parent=11 // pred_fallthru
          _
        // Predicated region
        $region57: #{tpu_custom_call.1} parent=11 // pred_check
          %p506 = pneg %p306
        $region58: #{tpu_custom_call.1} parent=11 // pred_check_branch
          %508 = sbr.rel (%p506) target = $region60
        $region59: #{tpu_custom_call.1} parent=11 // pred_region
          _
        $region60: #{tpu_custom_call.1} parent=11 // pred_fallthru
          _
        // Predicated region
        $region61: #{tpu_custom_call.1} parent=11 // pred_check
          %p509 = pneg %p327
        $region62: #{tpu_custom_call.1} parent=11 // pred_check_branch
          %511 = sbr.rel (%p509) target = $region64
        $region63: #{tpu_custom_call.1} parent=11 // pred_region
          _
        $region64: #{tpu_custom_call.1} parent=11 // pred_fallthru
          _
        // Predicated region
        $region65: #{tpu_custom_call.1} parent=11 // pred_check
          %p512 = pneg %p348
        $region66: #{tpu_custom_call.1} parent=11 // pred_check_branch
          %514 = sbr.rel (%p512) target = $region68
        $region67: #{tpu_custom_call.1} parent=11 // pred_region
          _
        $region68: #{tpu_custom_call.1} parent=11 // pred_fallthru
          _
        // Predicated region
        $region69: #{tpu_custom_call.1} parent=11 // pred_check
          %p515 = pneg %p369
        $region70: #{tpu_custom_call.1} parent=11 // pred_check_branch
          %517 = sbr.rel (%p515) target = $region72
        $region71: #{tpu_custom_call.1} parent=11 // pred_region
          _
        $region72: #{tpu_custom_call.1} parent=11 // pred_fallthru
          _
        // Predicated region
        $region73: #{tpu_custom_call.1} parent=11 // pred_check
          %p518 = pneg %p390
        $region74: #{tpu_custom_call.1} parent=11 // pred_check_branch
          %520 = sbr.rel (%p518) target = $region76
        $region75: #{tpu_custom_call.1} parent=11 // pred_region
          _
        $region76: #{tpu_custom_call.1} parent=11 // pred_fallthru
          _
        // Predicated region
        $region77: #{tpu_custom_call.1} parent=11 // pred_check
          %p521 = pneg %p411
        $region78: #{tpu_custom_call.1} parent=11 // pred_check_branch
          %523 = sbr.rel (%p521) target = $region80
        $region79: #{tpu_custom_call.1} parent=11 // pred_region
          _
        $region80: #{tpu_custom_call.1} parent=11 // pred_fallthru
          _
        // Predicated region
        $region81: #{tpu_custom_call.1} parent=11 // pred_check
          %p524 = pneg %p432
        $region82: #{tpu_custom_call.1} parent=11 // pred_check_branch
          %526 = sbr.rel (%p524) target = $region84
        $region83: #{tpu_custom_call.1} parent=11 // pred_region
          _
        $region84: #{tpu_custom_call.1} parent=11 // pred_fallthru
          _
      $region12: #{tpu_custom_call.1} parent=5 // pred_fallthru
        _
      %p527 = scmp.lt.s32.totalorder %s28, 2
      // Predicated region
      $region85: #{tpu_custom_call.1} parent=5 // pred_check
        %p528 = pneg %p527
      $region86: #{tpu_custom_call.1} parent=5 // pred_check_branch
        %530 = sbr.rel (%p528) target = $region88
      $region87: #{tpu_custom_call.1} parent=5 // pred_region
        // Predicated region
        $region89: #{tpu_custom_call.1} parent=87 // pred_check
          %p531 = pneg %p48
        $region90: #{tpu_custom_call.1} parent=87 // pred_check_branch
          %533 = sbr.rel (%p531) target = $region92
        $region91: #{tpu_custom_call.1} parent=87 // pred_region
          %p534 = scmp.lt.s32.totalorder %s28, 1
          %s535 = scalar_select %p534, %s28, 1
          %s536 = smul.addr %s535, 2
          %s537 = smul.addr %s536, 8
          %s538 = scalar_lea.vmem %s0, %s537
        $region92: #{tpu_custom_call.1} parent=87 // pred_fallthru
          _
      $region88: #{tpu_custom_call.1} parent=5 // pred_fallthru
        _
      %p539 = scmp.le.s32.totalorder 1, %s28
      %p540 = scmp.lt.s32.totalorder %s28, 3
      %p541 = pnand %p539, %p540
      %p542 = pneg %p541
      // Predicated region
      $region93: #{tpu_custom_call.1} parent=5 // pred_check
        _
      $region94: #{tpu_custom_call.1} parent=5 // pred_check_branch
        %544 = sbr.rel (%p541) target = $region96
      $region95: #{tpu_custom_call.1} parent=5 // pred_region
        %s545 = ssub.s32 %s28, 1
        %p546 = scmp.lt.s32.totalorder %s33, 1
        %s547 = scalar_select %p546, %s33, 1
        %s548 = smul.addr %s547, 2
        %s549 = smul.addr %s548, 8
        %s550 = scalar_lea.vmem %s0, %s549
        %p551 = pneg %p54
        %p552 = pneg %p51
        %p553 = pneg %p75
        %p554 = pneg %p72
        %p555 = pneg %p96
        %p556 = pneg %p93
        %p557 = pneg %p117
        %p558 = pneg %p114
        %p559 = pneg %p138
        %p560 = pneg %p135
        %p561 = pneg %p159
        %p562 = pneg %p156
        %p563 = pneg %p180
        %p564 = pneg %p177
        %p565 = pneg %p201
        %p566 = pneg %p198
        %p567 = pneg %p222
        %p568 = pneg %p219
        %p569 = pneg %p243
        %p570 = pneg %p240
        %p571 = pneg %p264
        %p572 = pneg %p261
        %p573 = pneg %p285
        %p574 = pneg %p282
        %p575 = pneg %p306
        %p576 = pneg %p303
        %p577 = pneg %p327
        %p578 = pneg %p324
        %p579 = pneg %p348
        %p580 = pneg %p345
        %p581 = pneg %p369
        %p582 = pneg %p366
        %p583 = pneg %p390
        %p584 = pneg %p387
        %p585 = pneg %p411
        %p586 = pneg %p408
        %p587 = pneg %p432
        %p588 = pneg %p429
        %p589 = pneg %p458
        %p590 = pneg %p455
        %s591 = sand.u32 %s445, 1
        %s592 = scalar_lea.sflag [#allocation3], %s591
        %s593 = sand.u32 %s445, 1
        %s594 = smul.addr %s593, 16
        %s595 = scalar_lea.vmem [#allocation2], %s594
        %p596 = scmp.lt.s32.totalorder %s33, 1
        %s597 = scalar_select %p596, %s33, 1
        %s598 = smul.addr %s597, 2
        %s599 = smul.addr %s598, 8
        %s600 = scalar_lea.vmem %s0, %s599
        %v602 = vld [vmem:[%s600] sm:$0xff]
        %v603 = vld [vmem:[%s600 + $0x8] sm:$0xff]
        %v604 = vld [vmem:[%s1] sm:$0x1f]
        %v605 = vld [vmem:[%s2] sm:$0x1]
        %v607 = vlaneseq
        %v608 = vshrl.u32 %v607, 7
        %v609 = vsub.s32 0, %v608
        %v610 = vrot.slane %v605, %v609
        %vm612 = vcmask 39936
        %v614 = vsel %vm612, %v602, 0
        %v617 = vsel %vm612, %v603, 0
        %vm619 = vcmask 1044480
        %v621 = vsel %vm619, %v604, 0
        %623 = vmatprep.subr.mxu0 0.0
        %624 = vmatpush1.msra.mxu0 %v621
        %625 = vmatprep.subr.mxu0 0.0
        %626 = vmatpush1.msra.mxu0 0.0
        %627 = vmatprep.subr.mxu0 0.0
        %628 = vmatpush1.msra.mxu0 0.0
        %629 = vmatprep.subr.mxu0 0.0
        %630 = vmatpush1.msra.mxu0 0.0
        %631 = vmatprep.subr.mxu0 0.0
        %632 = vmatpush1.msra.mxu0 0.0
        %633 = vmatprep.subr.mxu0 0.0
        %634 = vmatpush1.msra.mxu0 0.0
        %635 = vmatprep.subr.mxu0 0.0
        %636 = vmatpush1.msra.mxu0 0.0
        %637 = vmatprep.subr.mxu0 0.0
        %638 = vmatpush1.msra.mxu0 0.0
        %639 = vmatprep.subr.mxu0 0.0
        %640 = vmatpush1.msra.mxu0 0.0
        %641 = vmatprep.subr.mxu0 0.0
        %642 = vmatpush1.msra.mxu0 0.0
        %643 = vmatprep.subr.mxu0 0.0
        %644 = vmatpush1.msra.mxu0 0.0
        %645 = vmatprep.subr.mxu0 0.0
        %646 = vmatpush1.msra.mxu0 0.0
        %647 = vmatprep.subr.mxu0 0.0
        %648 = vmatpush1.msra.mxu0 0.0
        %649 = vmatprep.subr.mxu0 0.0
        %650 = vmatpush1.msra.mxu0 0.0
        %651 = vmatprep.subr.mxu0 0.0
        %652 = vmatpush1.msra.mxu0 0.0
        %653 = vmatprep.subr.mxu0 0.0
        %654 = vmatpush1.msra.mxu0 0.0
        %655 = vmatprep.subr.mxu0 0.0
        %656 = vmatpush1.msra.mxu0 0.0
        %657 = vmatprep.subr.mxu0 0.0
        %658 = vmatpush1.msra.mxu0 0.0
        %659 = vmatprep.subr.mxu0 0.0
        %660 = vmatpush1.msra.mxu0 0.0
        %661 = vmatprep.subr.mxu0 0.0
        %662 = vmatpush1.msra.mxu0 0.0
        %663 = vmatprep.subr.mxu0 0.0
        %664 = vmatpush1.msra.mxu0 0.0
        %665 = vmatprep.subr.mxu0 0.0
        %666 = vmatpush1.msra.mxu0 0.0
        %667 = vmatprep.subr.mxu0 0.0
        %668 = vmatpush1.msra.mxu0 0.0
        %669 = vmatprep.subr.mxu0 0.0
        %670 = vmatpush1.msra.mxu0 0.0
        %671 = vmatprep.subr.mxu0 0.0
        %672 = vmatpush1.msra.mxu0 0.0
        %673 = vmatprep.subr.mxu0 0.0
        %674 = vmatpush1.msra.mxu0 0.0
        %675 = vmatprep.subr.mxu0 0.0
        %676 = vmatpush1.msra.mxu0 0.0
        %677 = vmatprep.subr.mxu0 0.0
        %678 = vmatpush1.msra.mxu0 0.0
        %679 = vmatprep.subr.mxu0 0.0
        %680 = vmatpush1.msra.mxu0 0.0
        %681 = vmatprep.subr.mxu0 0.0
        %682 = vmatpush1.msra.mxu0 0.0
        %683 = vmatprep.subr.mxu0 0.0
        %684 = vmatpush1.msra.mxu0 0.0
        %685 = vmatprep.subr.mxu0 0.0
        %686 = vmatpush1.msra.mxu0 0.0
        %687 = vmatprep.mubr.f32.mxu0 0.0
        %688 = vmatmul.mubr.f32.gmra.mrb[0].mxu0 %v614
        %v689 = vpop.f32.mrb[0].mxu0
        %v690 = vadd.f32 %v610, %v689
        %v691 = vpop.f32.mrb[0].mxu0
        %692 = vmatprep.mubr.f32.mxu0 0.0
        %693 = vmatmul.mubr.f32.gmra.mrb[0].mxu0 %v617
        %v694 = vpop.f32.mrb[0].mxu0
        %v695 = vadd.f32 %v610, %v694
        %v696 = vpop.f32.mrb[0].mxu0
        %697 = vdwg.mxu0
        %v698 = vld [vmem:[%s3] sm:$0x1]
        %v699 = vld [vmem:[%s4] sm:$0x1]
        %vm700 = vcmask 261120
        %v701 = vsel %vm700, %v690, 0.0
        %702 = vadd.xlane.f32.xlu0 %v701
        %v703 = vpop.xlane.xlu0 %702
        %v704 = vsel %vm700, %v695, 0.0
        %705 = vadd.xlane.f32.xlu0 %v704
        %v706 = vpop.xlane.xlu0 %705
        %v707 = vrcp.pop 32.0
        %v708 = vmul.f32 %v703, %v707
        %v709 = vmul.f32 %v706, %v707
        %v710 = vsub.f32 %v690, %v708
        %v711 = vsub.f32 %v695, %v709
        %v712 = vmul.f32 %v710, %v710
        %v713 = vmul.f32 %v711, %v711
        %v714 = vsel %vm700, %v712, 0.0
        %715 = vadd.xlane.f32.xlu0 %v714
        %v716 = vpop.xlane.xlu0 %715
        %v717 = vsel %vm700, %v713, 0.0
        %718 = vadd.xlane.f32.xlu0 %v717
        %v719 = vpop.xlane.xlu0 %718
        %v720 = vmul.f32 %v716, %v707
        %v721 = vmul.f32 %v719, %v707
        %v722 = vadd.f32 %v720, 1e-05
        %v723 = vadd.f32 %v721, 1e-05
        %v724 = vrsqrt.pop %v722
        %v725 = vrsqrt.pop %v723
        %v726 = vmul.f32 %v710, %v724
        %v727 = vmul.f32 %v711, %v725
        %v729 = vlaneseq
        %v730 = vshrl.u32 %v729, 7
        %v731 = vsub.s32 0, %v730
        %v732 = vrot.slane %v698, %v731
        %v734 = vmul.f32 %v726, %v732
        %v735 = vmul.f32 %v727, %v732
        %v737 = vlaneseq
        %v738 = vshrl.u32 %v737, 7
        %v739 = vsub.s32 0, %v738
        %v740 = vrot.slane %v699, %v739
        %v742 = vadd.f32 %v734, %v740
        %v743 = vadd.f32 %v735, %v740
        %v744 = vpack.c.bf16 %v743, %v742
        %v745 = vld [vmem:[%s5] sm:$0xf]
        %v746 = vld [vmem:[%s5 + $0x4] sm:$0xf]
        %v747 = vld [vmem:[%s5 + $0x8] sm:$0xf]
        %v748 = vld [vmem:[%s5 + $0xc] sm:$0xf]
        %v749 = vld [vmem:[%s6] sm:$0x1]
        %v751 = vlaneseq
        %v752 = vshrl.u32 %v751, 7
        %v753 = vsub.s32 0, %v752
        %v754 = vrot.slane %v749, %v753
        %v760 = vunpack.c.l.b16 %v745
        %v761 = vunpack.c.l.b16 %v746
        %v762 = vunpack.c.l.b16 %v747
        %v763 = vunpack.c.l.b16 %v748
        %v764 = vpack.c.b16 %v761, %v760
        %v765 = vpack.c.b16 %v763, %v762
        %v769 = vsel %vm700, %v744, 0
        %771 = vmatprep.subr.bf16.mxu0 0
        %772 = vmatpush1.bf16.msra.mxu0 %v764
        %773 = vmatprep.subr.bf16.mxu0 0
        %774 = vmatpush1.bf16.msra.mxu0 %v765
        %775 = vmatprep.subr.bf16.mxu0 0
        %776 = vmatpush1.bf16.msra.mxu0 0
        %777 = vmatprep.subr.bf16.mxu0 0
        %778 = vmatpush1.bf16.msra.mxu0 0
        %779 = vmatprep.subr.bf16.mxu0 0
        %780 = vmatpush1.bf16.msra.mxu0 0
        %781 = vmatprep.subr.bf16.mxu0 0
        %782 = vmatpush1.bf16.msra.mxu0 0
        %783 = vmatprep.subr.bf16.mxu0 0
        %784 = vmatpush1.bf16.msra.mxu0 0
        %785 = vmatprep.subr.bf16.mxu0 0
        %786 = vmatpush1.bf16.msra.mxu0 0
        %787 = vmatprep.subr.bf16.mxu0 0
        %788 = vmatpush1.bf16.msra.mxu0 0
        %789 = vmatprep.subr.bf16.mxu0 0
        %790 = vmatpush1.bf16.msra.mxu0 0
        %791 = vmatprep.subr.bf16.mxu0 0
        %792 = vmatpush1.bf16.msra.mxu0 0
        %793 = vmatprep.subr.bf16.mxu0 0
        %794 = vmatpush1.bf16.msra.mxu0 0
        %795 = vmatprep.subr.bf16.mxu0 0
        %796 = vmatpush1.bf16.msra.mxu0 0
        %797 = vmatprep.subr.bf16.mxu0 0
        %798 = vmatpush1.bf16.msra.mxu0 0
        %799 = vmatprep.subr.bf16.mxu0 0
        %800 = vmatpush1.bf16.msra.mxu0 0
        %801 = vmatprep.subr.bf16.mxu0 0
        %802 = vmatpush1.bf16.msra.mxu0 0
        %803 = vmatprep.mubr.bf16.mxu0 0
        %804 = vmatmul.mubr.bf16.gmra.mrb[0].mxu0 %v769
        %v805 = vpop.f32.mrb[0].mxu0
        %v806 = vadd.f32 %v754, %v805
        %v807 = vpop.f32.mrb[0].mxu0
        %v808 = vpop.f32.mrb[0].mxu0
        %v809 = vadd.f32 %v754, %v808
        %v810 = vpop.f32.mrb[0].mxu0
        %811 = vdwg.mxu0
        %v812 = vpack.c.bf16 %v809, %v806
        %814 = vrot.lane.b32.xlu0 %v812, 96
        %v815 = vpop.permute.xlu0 %814
        %vm816 = vcmask 64512
        %v818 = vsel %vm816, %v812, 0
        %v821 = vsel %vm816, %v815, 0
        %823 = vmatprep.subr.bf16.mxu0 0
        %824 = vmatpush1.bf16.xpose.msra.mxu0 %v821
        %825 = vmatprep.subr.bf16.mxu0 0
        %826 = vmatpush1.bf16.xpose.msra.mxu0 0
        %827 = vmatprep.subr.bf16.mxu0 0
        %828 = vmatpush1.bf16.xpose.msra.mxu0 0
        %829 = vmatprep.subr.bf16.mxu0 0
        %830 = vmatpush1.bf16.xpose.msra.mxu0 0
        %831 = vmatprep.subr.bf16.mxu0 0
        %832 = vmatpush1.bf16.xpose.msra.mxu0 0
        %833 = vmatprep.subr.bf16.mxu0 0
        %834 = vmatpush1.bf16.xpose.msra.mxu0 0
        %835 = vmatprep.subr.bf16.mxu0 0
        %836 = vmatpush1.bf16.xpose.msra.mxu0 0
        %837 = vmatprep.subr.bf16.mxu0 0
        %838 = vmatpush1.bf16.xpose.msra.mxu0 0
        %839 = vmatprep.subr.bf16.mxu0 0
        %840 = vmatpush1.bf16.xpose.msra.mxu0 0
        %841 = vmatprep.subr.bf16.mxu0 0
        %842 = vmatpush1.bf16.xpose.msra.mxu0 0
        %843 = vmatprep.subr.bf16.mxu0 0
        %844 = vmatpush1.bf16.xpose.msra.mxu0 0
        %845 = vmatprep.subr.bf16.mxu0 0
        %846 = vmatpush1.bf16.xpose.msra.mxu0 0
        %847 = vmatprep.subr.bf16.mxu0 0
        %848 = vmatpush1.bf16.xpose.msra.mxu0 0
        %849 = vmatprep.subr.bf16.mxu0 0
        %850 = vmatpush1.bf16.xpose.msra.mxu0 0
        %851 = vmatprep.subr.bf16.mxu0 0
        %852 = vmatpush1.bf16.xpose.msra.mxu0 0
        %853 = vmatprep.subr.bf16.mxu0 0
        %854 = vmatpush1.bf16.xpose.msra.mxu0 0
        %855 = vmatprep.mubr.bf16.mxu0 0
        %856 = vmatmul.mubr.bf16.gmra.mrb[0].mxu0 %v818
        %v857 = vpop.f32.mrb[0].mxu0
        %v858 = vadd.f32 0.0, %v857
        %v859 = vpop.f32.mrb[0].mxu0
        %v860 = vpop.f32.mrb[0].mxu0
        %v861 = vadd.f32 0.0, %v860
        %v862 = vpop.f32.mrb[0].mxu0
        %863 = vdwg.mxu0
        %v864 = vmul.f32 %v858, 0.35355338
        %v865 = vmul.f32 %v861, 0.35355338
        %vm866 = vcmask 130048
        %v867 = vsel %vm866, %v864, -inf
        %868 = vmax.xlane.f32.xlu0 %v867
        %v869 = vpop.xlane.xlu0 %868
        %v870 = vsel %vm866, %v865, -inf
        %871 = vmax.xlane.f32.xlu0 %v870
        %v872 = vpop.xlane.xlu0 %871
        %v873 = vsub.f32 %v864, %v869
        %v874 = vsub.f32 %v865, %v872
        %v875 = vmul.f32 %v873, 1.442695
        %v876 = vpow.pop %v875
        %v877 = vmul.f32 %v874, 1.442695
        %v878 = vpow.pop %v877
        %v879 = vsel %vm866, %v876, 0.0
        %880 = vadd.xlane.f32.xlu0 %v879
        %v881 = vpop.xlane.xlu0 %880
        %v882 = vsel %vm866, %v878, 0.0
        %883 = vadd.xlane.f32.xlu0 %v882
        %v884 = vpop.xlane.xlu0 %883
        %v885 = vrcp.pop %v881
        %v886 = vrcp.pop %v884
        %v887 = vmul.f32 %v876, %v885
        %v888 = vmul.f32 %v878, %v886
        %v889 = vpack.c.bf16 %v888, %v887
        %890 = vrot.lane.b32.xlu0 %v812, 64
        %v891 = vpop.permute.xlu0 %890
        %v894 = vsel %vm866, %v889, 0
        %896 = vmatprep.subr.bf16.mxu0 0
        %897 = vmatpush1.bf16.msra.mxu0 %v891
        %898 = vmatprep.subr.bf16.mxu0 0
        %899 = vmatpush1.bf16.msra.mxu0 0
        %900 = vmatprep.subr.bf16.mxu0 0
        %901 = vmatpush1.bf16.msra.mxu0 0
        %902 = vmatprep.subr.bf16.mxu0 0
        %903 = vmatpush1.bf16.msra.mxu0 0
        %904 = vmatprep.subr.bf16.mxu0 0
        %905 = vmatpush1.bf16.msra.mxu0 0
        %906 = vmatprep.subr.bf16.mxu0 0
        %907 = vmatpush1.bf16.msra.mxu0 0
        %908 = vmatprep.subr.bf16.mxu0 0
        %909 = vmatpush1.bf16.msra.mxu0 0
        %910 = vmatprep.subr.bf16.mxu0 0
        %911 = vmatpush1.bf16.msra.mxu0 0
        %912 = vmatprep.subr.bf16.mxu0 0
        %913 = vmatpush1.bf16.msra.mxu0 0
        %914 = vmatprep.subr.bf16.mxu0 0
        %915 = vmatpush1.bf16.msra.mxu0 0
        %916 = vmatprep.subr.bf16.mxu0 0
        %917 = vmatpush1.bf16.msra.mxu0 0
        %918 = vmatprep.subr.bf16.mxu0 0
        %919 = vmatpush1.bf16.msra.mxu0 0
        %920 = vmatprep.subr.bf16.mxu0 0
        %921 = vmatpush1.bf16.msra.mxu0 0
        %922 = vmatprep.subr.bf16.mxu0 0
        %923 = vmatpush1.bf16.msra.mxu0 0
        %924 = vmatprep.subr.bf16.mxu0 0
        %925 = vmatpush1.bf16.msra.mxu0 0
        %926 = vmatprep.subr.bf16.mxu0 0
        %927 = vmatpush1.bf16.msra.mxu0 0
        %928 = vmatprep.mubr.bf16.mxu0 0
        %929 = vmatmul.mubr.bf16.gmra.mrb[0].mxu0 %v894
        %v930 = vpop.f32.mrb[0].mxu0
        %v931 = vadd.f32 0.0, %v930
        %v932 = vpop.f32.mrb[0].mxu0
        %v933 = vpop.f32.mrb[0].mxu0
        %v934 = vadd.f32 0.0, %v933
        %v935 = vpop.f32.mrb[0].mxu0
        %936 = vdwg.mxu0
        %937 = vrot.lane.b32.xlu0 %v812, 120
        %v938 = vpop.permute.xlu0 %937
        %939 = vrot.lane.b32.xlu0 %v812, 88
        %v940 = vpop.permute.xlu0 %939
        %v942 = vsel %vm816, %v938, 0
        %v945 = vsel %vm816, %v940, 0
        %947 = vmatprep.subr.bf16.mxu0 0
        %948 = vmatpush1.bf16.xpose.msra.mxu0 %v945
        %949 = vmatprep.subr.bf16.mxu0 0
        %950 = vmatpush1.bf16.xpose.msra.mxu0 0
        %951 = vmatprep.subr.bf16.mxu0 0
        %952 = vmatpush1.bf16.xpose.msra.mxu0 0
        %953 = vmatprep.subr.bf16.mxu0 0
        %954 = vmatpush1.bf16.xpose.msra.mxu0 0
        %955 = vmatprep.subr.bf16.mxu0 0
        %956 = vmatpush1.bf16.xpose.msra.mxu0 0
        %957 = vmatprep.subr.bf16.mxu0 0
        %958 = vmatpush1.bf16.xpose.msra.mxu0 0
        %959 = vmatprep.subr.bf16.mxu0 0
        %960 = vmatpush1.bf16.xpose.msra.mxu0 0
        %961 = vmatprep.subr.bf16.mxu0 0
        %962 = vmatpush1.bf16.xpose.msra.mxu0 0
        %963 = vmatprep.subr.bf16.mxu0 0
        %964 = vmatpush1.bf16.xpose.msra.mxu0 0
        %965 = vmatprep.subr.bf16.mxu0 0
        %966 = vmatpush1.bf16.xpose.msra.mxu0 0
        %967 = vmatprep.subr.bf16.mxu0 0
        %968 = vmatpush1.bf16.xpose.msra.mxu0 0
        %969 = vmatprep.subr.bf16.mxu0 0
        %970 = vmatpush1.bf16.xpose.msra.mxu0 0
        %971 = vmatprep.subr.bf16.mxu0 0
        %972 = vmatpush1.bf16.xpose.msra.mxu0 0
        %973 = vmatprep.subr.bf16.mxu0 0
        %974 = vmatpush1.bf16.xpose.msra.mxu0 0
        %975 = vmatprep.subr.bf16.mxu0 0
        %976 = vmatpush1.bf16.xpose.msra.mxu0 0
        %977 = vmatprep.subr.bf16.mxu0 0
        %978 = vmatpush1.bf16.xpose.msra.mxu0 0
        %979 = vmatprep.mubr.bf16.mxu0 0
        %980 = vmatmul.mubr.bf16.gmra.mrb[0].mxu0 %v942
        %v981 = vpop.f32.mrb[0].mxu0
        %v982 = vadd.f32 0.0, %v981
        %v983 = vpop.f32.mrb[0].mxu0
        %v984 = vpop.f32.mrb[0].mxu0
        %v985 = vadd.f32 0.0, %v984
        %v986 = vpop.f32.mrb[0].mxu0
        %987 = vdwg.mxu0
        %v988 = vmul.f32 %v982, 0.35355338
        %v989 = vmul.f32 %v985, 0.35355338
        %v990 = vsel %vm866, %v988, -inf
        %991 = vmax.xlane.f32.xlu0 %v990
        %v992 = vpop.xlane.xlu0 %991
        %v993 = vsel %vm866, %v989, -inf
        %994 = vmax.xlane.f32.xlu0 %v993
        %v995 = vpop.xlane.xlu0 %994
        %v996 = vsub.f32 %v988, %v992
        %v997 = vsub.f32 %v989, %v995
        %v998 = vmul.f32 %v996, 1.442695
        %v999 = vpow.pop %v998
        %v1000 = vmul.f32 %v997, 1.442695
        %v1001 = vpow.pop %v1000
        %v1002 = vsel %vm866, %v999, 0.0
        %1003 = vadd.xlane.f32.xlu0 %v1002
        %v1004 = vpop.xlane.xlu0 %1003
        %v1005 = vsel %vm866, %v1001, 0.0
        %1006 = vadd.xlane.f32.xlu0 %v1005
        %v1007 = vpop.xlane.xlu0 %1006
        %v1008 = vrcp.pop %v1004
        %v1009 = vrcp.pop %v1007
        %v1010 = vmul.f32 %v999, %v1008
        %v1011 = vmul.f32 %v1001, %v1009
        %v1012 = vpack.c.bf16 %v1011, %v1010
        %1013 = vrot.lane.b32.xlu0 %v812, 56
        %v1014 = vpop.permute.xlu0 %1013
        %v1017 = vsel %vm866, %v1012, 0
        %1019 = vmatprep.subr.bf16.mxu0 0
        %1020 = vmatpush1.bf16.msra.mxu0 %v1014
        %1021 = vmatprep.subr.bf16.mxu0 0
        %1022 = vmatpush1.bf16.msra.mxu0 0
        %1023 = vmatprep.subr.bf16.mxu0 0
        %1024 = vmatpush1.bf16.msra.mxu0 0
        %1025 = vmatprep.subr.bf16.mxu0 0
        %1026 = vmatpush1.bf16.msra.mxu0 0
        %1027 = vmatprep.subr.bf16.mxu0 0
        %1028 = vmatpush1.bf16.msra.mxu0 0
        %1029 = vmatprep.subr.bf16.mxu0 0
        %1030 = vmatpush1.bf16.msra.mxu0 0
        %1031 = vmatprep.subr.bf16.mxu0 0
        %1032 = vmatpush1.bf16.msra.mxu0 0
        %1033 = vmatprep.subr.bf16.mxu0 0
        %1034 = vmatpush1.bf16.msra.mxu0 0
        %1035 = vmatprep.subr.bf16.mxu0 0
        %1036 = vmatpush1.bf16.msra.mxu0 0
        %1037 = vmatprep.subr.bf16.mxu0 0
        %1038 = vmatpush1.bf16.msra.mxu0 0
        %1039 = vmatprep.subr.bf16.mxu0 0
        %1040 = vmatpush1.bf16.msra.mxu0 0
        %1041 = vmatprep.subr.bf16.mxu0 0
        %1042 = vmatpush1.bf16.msra.mxu0 0
        %1043 = vmatprep.subr.bf16.mxu0 0
        %1044 = vmatpush1.bf16.msra.mxu0 0
        %1045 = vmatprep.subr.bf16.mxu0 0
        %1046 = vmatpush1.bf16.msra.mxu0 0
        %1047 = vmatprep.subr.bf16.mxu0 0
        %1048 = vmatpush1.bf16.msra.mxu0 0
        %1049 = vmatprep.subr.bf16.mxu0 0
        %1050 = vmatpush1.bf16.msra.mxu0 0
        %1051 = vmatprep.mubr.bf16.mxu0 0
        %1052 = vmatmul.mubr.bf16.gmra.mrb[0].mxu0 %v1017
        %v1053 = vpop.f32.mrb[0].mxu0
        %v1054 = vadd.f32 0.0, %v1053
        %v1055 = vpop.f32.mrb[0].mxu0
        %v1056 = vpop.f32.mrb[0].mxu0
        %v1057 = vadd.f32 0.0, %v1056
        %v1058 = vpop.f32.mrb[0].mxu0
        %1059 = vdwg.mxu0
        %1060 = vrot.lane.b32.xlu0 %v812, 112
        %v1061 = vpop.permute.xlu0 %1060
        %1062 = vrot.lane.b32.xlu0 %v812, 80
        %v1063 = vpop.permute.xlu0 %1062
        %v1065 = vsel %vm816, %v1061, 0
        %v1068 = vsel %vm816, %v1063, 0
        %1070 = vmatprep.subr.bf16.mxu0 0
        %1071 = vmatpush1.bf16.xpose.msra.mxu0 %v1068
        %1072 = vmatprep.subr.bf16.mxu0 0
        %1073 = vmatpush1.bf16.xpose.msra.mxu0 0
        %1074 = vmatprep.subr.bf16.mxu0 0
        %1075 = vmatpush1.bf16.xpose.msra.mxu0 0
        %1076 = vmatprep.subr.bf16.mxu0 0
        %1077 = vmatpush1.bf16.xpose.msra.mxu0 0
        %1078 = vmatprep.subr.bf16.mxu0 0
        %1079 = vmatpush1.bf16.xpose.msra.mxu0 0
        %1080 = vmatprep.subr.bf16.mxu0 0
        %1081 = vmatpush1.bf16.xpose.msra.mxu0 0
        %1082 = vmatprep.subr.bf16.mxu0 0
        %1083 = vmatpush1.bf16.xpose.msra.mxu0 0
        %1084 = vmatprep.subr.bf16.mxu0 0
        %1085 = vmatpush1.bf16.xpose.msra.mxu0 0
        %1086 = vmatprep.subr.bf16.mxu0 0
        %1087 = vmatpush1.bf16.xpose.msra.mxu0 0
        %1088 = vmatprep.subr.bf16.mxu0 0
        %1089 = vmatpush1.bf16.xpose.msra.mxu0 0
        %1090 = vmatprep.subr.bf16.mxu0 0
        %1091 = vmatpush1.bf16.xpose.msra.mxu0 0
        %1092 = vmatprep.subr.bf16.mxu0 0
        %1093 = vmatpush1.bf16.xpose.msra.mxu0 0
        %1094 = vmatprep.subr.bf16.mxu0 0
        %1095 = vmatpush1.bf16.xpose.msra.mxu0 0
        %1096 = vmatprep.subr.bf16.mxu0 0
        %1097 = vmatpush1.bf16.xpose.msra.mxu0 0
        %1098 = vmatprep.subr.bf16.mxu0 0
        %1099 = vmatpush1.bf16.xpose.msra.mxu0 0
        %1100 = vmatprep.subr.bf16.mxu0 0
        %1101 = vmatpush1.bf16.xpose.msra.mxu0 0
        %1102 = vmatprep.mubr.bf16.mxu0 0
        %1103 = vmatmul.mubr.bf16.gmra.mrb[0].mxu0 %v1065
        %v1104 = vpop.f32.mrb[0].mxu0
        %v1105 = vadd.f32 0.0, %v1104
        %v1106 = vpop.f32.mrb[0].mxu0
        %v1107 = vpop.f32.mrb[0].mxu0
        %v1108 = vadd.f32 0.0, %v1107
        %v1109 = vpop.f32.mrb[0].mxu0
        %1110 = vdwg.mxu0
        %v1111 = vmul.f32 %v1105, 0.35355338
        %v1112 = vmul.f32 %v1108, 0.35355338
        %v1113 = vsel %vm866, %v1111, -inf
        %1114 = vmax.xlane.f32.xlu0 %v1113
        %v1115 = vpop.xlane.xlu0 %1114
        %v1116 = vsel %vm866, %v1112, -inf
        %1117 = vmax.xlane.f32.xlu0 %v1116
        %v1118 = vpop.xlane.xlu0 %1117
        %v1119 = vsub.f32 %v1111, %v1115
        %v1120 = vsub.f32 %v1112, %v1118
        %v1121 = vmul.f32 %v1119, 1.442695
        %v1122 = vpow.pop %v1121
        %v1123 = vmul.f32 %v1120, 1.442695
        %v1124 = vpow.pop %v1123
        %v1125 = vsel %vm866, %v1122, 0.0
        %1126 = vadd.xlane.f32.xlu0 %v1125
        %v1127 = vpop.xlane.xlu0 %1126
        %v1128 = vsel %vm866, %v1124, 0.0
        %1129 = vadd.xlane.f32.xlu0 %v1128
        %v1130 = vpop.xlane.xlu0 %1129
        %v1131 = vrcp.pop %v1127
        %v1132 = vrcp.pop %v1130
        %v1133 = vmul.f32 %v1122, %v1131
        %v1134 = vmul.f32 %v1124, %v1132
        %v1135 = vpack.c.bf16 %v1134, %v1133
        %1136 = vrot.lane.b32.xlu0 %v812, 48
        %v1137 = vpop.permute.xlu0 %1136
        %v1140 = vsel %vm866, %v1135, 0
        %1142 = vmatprep.subr.bf16.mxu0 0
        %1143 = vmatpush1.bf16.msra.mxu0 %v1137
        %1144 = vmatprep.subr.bf16.mxu0 0
        %1145 = vmatpush1.bf16.msra.mxu0 0
        %1146 = vmatprep.subr.bf16.mxu0 0
        %1147 = vmatpush1.bf16.msra.mxu0 0
        %1148 = vmatprep.subr.bf16.mxu0 0
        %1149 = vmatpush1.bf16.msra.mxu0 0
        %1150 = vmatprep.subr.bf16.mxu0 0
        %1151 = vmatpush1.bf16.msra.mxu0 0
        %1152 = vmatprep.subr.bf16.mxu0 0
        %1153 = vmatpush1.bf16.msra.mxu0 0
        %1154 = vmatprep.subr.bf16.mxu0 0
        %1155 = vmatpush1.bf16.msra.mxu0 0
        %1156 = vmatprep.subr.bf16.mxu0 0
        %1157 = vmatpush1.bf16.msra.mxu0 0
        %1158 = vmatprep.subr.bf16.mxu0 0
        %1159 = vmatpush1.bf16.msra.mxu0 0
        %1160 = vmatprep.subr.bf16.mxu0 0
        %1161 = vmatpush1.bf16.msra.mxu0 0
        %1162 = vmatprep.subr.bf16.mxu0 0
        %1163 = vmatpush1.bf16.msra.mxu0 0
        %1164 = vmatprep.subr.bf16.mxu0 0
        %1165 = vmatpush1.bf16.msra.mxu0 0
        %1166 = vmatprep.subr.bf16.mxu0 0
        %1167 = vmatpush1.bf16.msra.mxu0 0
        %1168 = vmatprep.subr.bf16.mxu0 0
        %1169 = vmatpush1.bf16.msra.mxu0 0
        %1170 = vmatprep.subr.bf16.mxu0 0
        %1171 = vmatpush1.bf16.msra.mxu0 0
        %1172 = vmatprep.subr.bf16.mxu0 0
        %1173 = vmatpush1.bf16.msra.mxu0 0
        %1174 = vmatprep.mubr.bf16.mxu0 0
        %1175 = vmatmul.mubr.bf16.gmra.mrb[0].mxu0 %v1140
        %v1176 = vpop.f32.mrb[0].mxu0
        %v1177 = vadd.f32 0.0, %v1176
        %v1178 = vpop.f32.mrb[0].mxu0
        %v1179 = vpop.f32.mrb[0].mxu0
        %v1180 = vadd.f32 0.0, %v1179
        %v1181 = vpop.f32.mrb[0].mxu0
        %1182 = vdwg.mxu0
        %1183 = vrot.lane.b32.xlu0 %v812, 104
        %v1184 = vpop.permute.xlu0 %1183
        %1185 = vrot.lane.b32.xlu0 %v812, 72
        %v1186 = vpop.permute.xlu0 %1185
        %v1188 = vsel %vm816, %v1184, 0
        %v1191 = vsel %vm816, %v1186, 0
        %1193 = vmatprep.subr.bf16.mxu0 0
        %1194 = vmatpush1.bf16.xpose.msra.mxu0 %v1191
        %1195 = vmatprep.subr.bf16.mxu0 0
        %1196 = vmatpush1.bf16.xpose.msra.mxu0 0
        %1197 = vmatprep.subr.bf16.mxu0 0
        %1198 = vmatpush1.bf16.xpose.msra.mxu0 0
        %1199 = vmatprep.subr.bf16.mxu0 0
        %1200 = vmatpush1.bf16.xpose.msra.mxu0 0
        %1201 = vmatprep.subr.bf16.mxu0 0
        %1202 = vmatpush1.bf16.xpose.msra.mxu0 0
        %1203 = vmatprep.subr.bf16.mxu0 0
        %1204 = vmatpush1.bf16.xpose.msra.mxu0 0
        %1205 = vmatprep.subr.bf16.mxu0 0
        %1206 = vmatpush1.bf16.xpose.msra.mxu0 0
        %1207 = vmatprep.subr.bf16.mxu0 0
        %1208 = vmatpush1.bf16.xpose.msra.mxu0 0
        %1209 = vmatprep.subr.bf16.mxu0 0
        %1210 = vmatpush1.bf16.xpose.msra.mxu0 0
        %1211 = vmatprep.subr.bf16.mxu0 0
        %1212 = vmatpush1.bf16.xpose.msra.mxu0 0
        %1213 = vmatprep.subr.bf16.mxu0 0
        %1214 = vmatpush1.bf16.xpose.msra.mxu0 0
        %1215 = vmatprep.subr.bf16.mxu0 0
        %1216 = vmatpush1.bf16.xpose.msra.mxu0 0
        %1217 = vmatprep.subr.bf16.mxu0 0
        %1218 = vmatpush1.bf16.xpose.msra.mxu0 0
        %1219 = vmatprep.subr.bf16.mxu0 0
        %1220 = vmatpush1.bf16.xpose.msra.mxu0 0
        %1221 = vmatprep.subr.bf16.mxu0 0
        %1222 = vmatpush1.bf16.xpose.msra.mxu0 0
        %1223 = vmatprep.subr.bf16.mxu0 0
        %1224 = vmatpush1.bf16.xpose.msra.mxu0 0
        %1225 = vmatprep.mubr.bf16.mxu0 0
        %1226 = vmatmul.mubr.bf16.gmra.mrb[0].mxu0 %v1188
        %v1227 = vpop.f32.mrb[0].mxu0
        %v1228 = vadd.f32 0.0, %v1227
        %v1229 = vpop.f32.mrb[0].mxu0
        %v1230 = vpop.f32.mrb[0].mxu0
        %v1231 = vadd.f32 0.0, %v1230
        %v1232 = vpop.f32.mrb[0].mxu0
        %1233 = vdwg.mxu0
        %v1234 = vmul.f32 %v1228, 0.35355338
        %v1235 = vmul.f32 %v1231, 0.35355338
        %v1236 = vsel %vm866, %v1234, -inf
        %1237 = vmax.xlane.f32.xlu0 %v1236
        %v1238 = vpop.xlane.xlu0 %1237
        %v1239 = vsel %vm866, %v1235, -inf
        %1240 = vmax.xlane.f32.xlu0 %v1239
        %v1241 = vpop.xlane.xlu0 %1240
        %v1242 = vsub.f32 %v1234, %v1238
        %v1243 = vsub.f32 %v1235, %v1241
        %v1244 = vmul.f32 %v1242, 1.442695
        %v1245 = vpow.pop %v1244
        %v1246 = vmul.f32 %v1243, 1.442695
        %v1247 = vpow.pop %v1246
        %v1248 = vsel %vm866, %v1245, 0.0
        %1249 = vadd.xlane.f32.xlu0 %v1248
        %v1250 = vpop.xlane.xlu0 %1249
        %v1251 = vsel %vm866, %v1247, 0.0
        %1252 = vadd.xlane.f32.xlu0 %v1251
        %v1253 = vpop.xlane.xlu0 %1252
        %v1254 = vrcp.pop %v1250
        %v1255 = vrcp.pop %v1253
        %v1256 = vmul.f32 %v1245, %v1254
        %v1257 = vmul.f32 %v1247, %v1255
        %v1258 = vpack.c.bf16 %v1257, %v1256
        %1259 = vrot.lane.b32.xlu0 %v812, 40
        %v1260 = vpop.permute.xlu0 %1259
        %v1263 = vsel %vm866, %v1258, 0
        %1265 = vmatprep.subr.bf16.mxu0 0
        %1266 = vmatpush1.bf16.msra.mxu0 %v1260
        %1267 = vmatprep.subr.bf16.mxu0 0
        %1268 = vmatpush1.bf16.msra.mxu0 0
        %1269 = vmatprep.subr.bf16.mxu0 0
        %1270 = vmatpush1.bf16.msra.mxu0 0
        %1271 = vmatprep.subr.bf16.mxu0 0
        %1272 = vmatpush1.bf16.msra.mxu0 0
        %1273 = vmatprep.subr.bf16.mxu0 0
        %1274 = vmatpush1.bf16.msra.mxu0 0
        %1275 = vmatprep.subr.bf16.mxu0 0
        %1276 = vmatpush1.bf16.msra.mxu0 0
        %1277 = vmatprep.subr.bf16.mxu0 0
        %1278 = vmatpush1.bf16.msra.mxu0 0
        %1279 = vmatprep.subr.bf16.mxu0 0
        %1280 = vmatpush1.bf16.msra.mxu0 0
        %1281 = vmatprep.subr.bf16.mxu0 0
        %1282 = vmatpush1.bf16.msra.mxu0 0
        %1283 = vmatprep.subr.bf16.mxu0 0
        %1284 = vmatpush1.bf16.msra.mxu0 0
        %1285 = vmatprep.subr.bf16.mxu0 0
        %1286 = vmatpush1.bf16.msra.mxu0 0
        %1287 = vmatprep.subr.bf16.mxu0 0
        %1288 = vmatpush1.bf16.msra.mxu0 0
        %1289 = vmatprep.subr.bf16.mxu0 0
        %1290 = vmatpush1.bf16.msra.mxu0 0
        %1291 = vmatprep.subr.bf16.mxu0 0
        %1292 = vmatpush1.bf16.msra.mxu0 0
        %1293 = vmatprep.subr.bf16.mxu0 0
        %1294 = vmatpush1.bf16.msra.mxu0 0
        %1295 = vmatprep.subr.bf16.mxu0 0
        %1296 = vmatpush1.bf16.msra.mxu0 0
        %1297 = vmatprep.mubr.bf16.mxu0 0
        %1298 = vmatmul.mubr.bf16.gmra.mrb[0].mxu0 %v1263
        %v1299 = vpop.f32.mrb[0].mxu0
        %v1300 = vadd.f32 0.0, %v1299
        %v1301 = vpop.f32.mrb[0].mxu0
        %v1302 = vpop.f32.mrb[0].mxu0
        %v1303 = vadd.f32 0.0, %v1302
        %v1304 = vpop.f32.mrb[0].mxu0
        %1305 = vdwg.mxu0
        %1308 = vrot.lane.b32.xlu0 %v1054, 8
        %v1309 = vpop.permute.xlu0 %1308
        %1310 = vrot.lane.b32.xlu0 %v1057, 8
        %v1311 = vpop.permute.xlu0 %1310
        %1316 = vrot.lane.b32.xlu0 %v1177, 16
        %v1317 = vpop.permute.xlu0 %1316
        %1318 = vrot.lane.b32.xlu0 %v1180, 16
        %v1319 = vpop.permute.xlu0 %1318
        %1324 = vrot.lane.b32.xlu0 %v1300, 24
        %v1325 = vpop.permute.xlu0 %1324
        %1326 = vrot.lane.b32.xlu0 %v1303, 24
        %v1327 = vpop.permute.xlu0 %1326
        %v1330 = vsel %vm816, %v931, %v1309
        %v1331 = vsel %vm816, %v934, %v1311
        %v1332 = vsel %vm866, %v1330, %v1317
        %v1333 = vsel %vm866, %v1331, %v1319
        %vm1334 = vcmask 195584
        %v1335 = vsel %vm1334, %v1332, %v1325
        %v1336 = vsel %vm1334, %v1333, %v1327
        %v1337 = vpack.c.bf16 %v1336, %v1335
        %v1338 = vld [vmem:[%s7] sm:$0xf]
        %v1339 = vld [vmem:[%s7 + $0x4] sm:$0xf]
        %v1340 = vld [vmem:[%s7 + $0x8] sm:$0xf]
        %v1341 = vld [vmem:[%s7 + $0xc] sm:$0xf]
        %v1342 = vld [vmem:[%s8] sm:$0x1]
        %v1344 = vlaneseq
        %v1345 = vshrl.u32 %v1344, 7
        %v1346 = vsub.s32 0, %v1345
        %v1347 = vrot.slane %v1342, %v1346
        %v1353 = vunpack.c.l.b16 %v1338
        %v1354 = vunpack.c.l.b16 %v1339
        %v1355 = vunpack.c.l.b16 %v1340
        %v1356 = vunpack.c.l.b16 %v1341
        %v1357 = vpack.c.b16 %v1354, %v1353
        %v1358 = vpack.c.b16 %v1356, %v1355
        %v1362 = vsel %vm700, %v1337, 0
        %1364 = vmatprep.subr.bf16.mxu0 0
        %1365 = vmatpush1.bf16.msra.mxu0 %v1357
        %1366 = vmatprep.subr.bf16.mxu0 0
        %1367 = vmatpush1.bf16.msra.mxu0 %v1358
        %1368 = vmatprep.subr.bf16.mxu0 0
        %1369 = vmatpush1.bf16.msra.mxu0 0
        %1370 = vmatprep.subr.bf16.mxu0 0
        %1371 = vmatpush1.bf16.msra.mxu0 0
        %1372 = vmatprep.subr.bf16.mxu0 0
        %1373 = vmatpush1.bf16.msra.mxu0 0
        %1374 = vmatprep.subr.bf16.mxu0 0
        %1375 = vmatpush1.bf16.msra.mxu0 0
        %1376 = vmatprep.subr.bf16.mxu0 0
        %1377 = vmatpush1.bf16.msra.mxu0 0
        %1378 = vmatprep.subr.bf16.mxu0 0
        %1379 = vmatpush1.bf16.msra.mxu0 0
        %1380 = vmatprep.subr.bf16.mxu0 0
        %1381 = vmatpush1.bf16.msra.mxu0 0
        %1382 = vmatprep.subr.bf16.mxu0 0
        %1383 = vmatpush1.bf16.msra.mxu0 0
        %1384 = vmatprep.subr.bf16.mxu0 0
        %1385 = vmatpush1.bf16.msra.mxu0 0
        %1386 = vmatprep.subr.bf16.mxu0 0
        %1387 = vmatpush1.bf16.msra.mxu0 0
        %1388 = vmatprep.subr.bf16.mxu0 0
        %1389 = vmatpush1.bf16.msra.mxu0 0
        %1390 = vmatprep.subr.bf16.mxu0 0
        %1391 = vmatpush1.bf16.msra.mxu0 0
        %1392 = vmatprep.subr.bf16.mxu0 0
        %1393 = vmatpush1.bf16.msra.mxu0 0
        %1394 = vmatprep.subr.bf16.mxu0 0
        %1395 = vmatpush1.bf16.msra.mxu0 0
        %1396 = vmatprep.mubr.bf16.mxu0 0
        %1397 = vmatmul.mubr.bf16.gmra.mrb[0].mxu0 %v1362
        %v1398 = vpop.f32.mrb[0].mxu0
        %v1399 = vadd.f32 %v1347, %v1398
        %v1400 = vpop.f32.mrb[0].mxu0
        %v1401 = vpop.f32.mrb[0].mxu0
        %v1402 = vadd.f32 %v1347, %v1401
        %v1403 = vpop.f32.mrb[0].mxu0
        %1404 = vdwg.mxu0
        %v1405 = vadd.f32 %v690, %v1399
        %v1406 = vadd.f32 %v695, %v1402
        %v1407 = vld [vmem:[%s9] sm:$0x1]
        %v1408 = vld [vmem:[%s10] sm:$0x1]
        %v1409 = vsel %vm700, %v1405, 0.0
        %1410 = vadd.xlane.f32.xlu0 %v1409
        %v1411 = vpop.xlane.xlu0 %1410
        %v1412 = vsel %vm700, %v1406, 0.0
        %1413 = vadd.xlane.f32.xlu0 %v1412
        %v1414 = vpop.xlane.xlu0 %1413
        %v1415 = vmul.f32 %v1411, %v707
        %v1416 = vmul.f32 %v1414, %v707
        %v1417 = vsub.f32 %v1405, %v1415
        %v1418 = vsub.f32 %v1406, %v1416
        %v1419 = vmul.f32 %v1417, %v1417
        %v1420 = vmul.f32 %v1418, %v1418
        %v1421 = vsel %vm700, %v1419, 0.0
        %1422 = vadd.xlane.f32.xlu0 %v1421
        %v1423 = vpop.xlane.xlu0 %1422
        %v1424 = vsel %vm700, %v1420, 0.0
        %1425 = vadd.xlane.f32.xlu0 %v1424
        %v1426 = vpop.xlane.xlu0 %1425
        %v1427 = vmul.f32 %v1423, %v707
        %v1428 = vmul.f32 %v1426, %v707
        %v1429 = vadd.f32 %v1427, 1e-05
        %v1430 = vadd.f32 %v1428, 1e-05
        %v1431 = vrsqrt.pop %v1429
        %v1432 = vrsqrt.pop %v1430
        %v1433 = vmul.f32 %v1417, %v1431
        %v1434 = vmul.f32 %v1418, %v1432
        %v1436 = vlaneseq
        %v1437 = vshrl.u32 %v1436, 7
        %v1438 = vsub.s32 0, %v1437
        %v1439 = vrot.slane %v1407, %v1438
        %v1441 = vmul.f32 %v1433, %v1439
        %v1442 = vmul.f32 %v1434, %v1439
        %v1444 = vlaneseq
        %v1445 = vshrl.u32 %v1444, 7
        %v1446 = vsub.s32 0, %v1445
        %v1447 = vrot.slane %v1408, %v1446
        %v1449 = vadd.f32 %v1441, %v1447
        %v1450 = vadd.f32 %v1442, %v1447
        %v1451 = vpack.c.bf16 %v1450, %v1449
        %v1452 = vld [vmem:[%s11] sm:$0xf]
        %v1453 = vld [vmem:[%s11 + $0x4] sm:$0xf]
        %v1454 = vld [vmem:[%s11 + $0x8] sm:$0xf]
        %v1455 = vld [vmem:[%s11 + $0xc] sm:$0xf]
        %v1456 = vld [vmem:[%s12] sm:$0x1]
        %v1458 = vlaneseq
        %v1459 = vshrl.u32 %v1458, 7
        %v1460 = vsub.s32 0, %v1459
        %v1461 = vrot.slane %v1456, %v1460
        %v1467 = vunpack.c.l.b16 %v1452
        %v1468 = vunpack.c.l.b16 %v1453
        %v1469 = vunpack.c.l.b16 %v1454
        %v1470 = vunpack.c.l.b16 %v1455
        %v1471 = vpack.c.b16 %v1468, %v1467
        %v1472 = vpack.c.b16 %v1470, %v1469
        %v1476 = vsel %vm700, %v1451, 0
        %1478 = vmatprep.subr.bf16.mxu0 0
        %1479 = vmatpush1.bf16.msra.mxu0 %v1471
        %1480 = vmatprep.subr.bf16.mxu0 0
        %1481 = vmatpush1.bf16.msra.mxu0 %v1472
        %1482 = vmatprep.subr.bf16.mxu0 0
        %1483 = vmatpush1.bf16.msra.mxu0 0
        %1484 = vmatprep.subr.bf16.mxu0 0
        %1485 = vmatpush1.bf16.msra.mxu0 0
        %1486 = vmatprep.subr.bf16.mxu0 0
        %1487 = vmatpush1.bf16.msra.mxu0 0
        %1488 = vmatprep.subr.bf16.mxu0 0
        %1489 = vmatpush1.bf16.msra.mxu0 0
        %1490 = vmatprep.subr.bf16.mxu0 0
        %1491 = vmatpush1.bf16.msra.mxu0 0
        %1492 = vmatprep.subr.bf16.mxu0 0
        %1493 = vmatpush1.bf16.msra.mxu0 0
        %1494 = vmatprep.subr.bf16.mxu0 0
        %1495 = vmatpush1.bf16.msra.mxu0 0
        %1496 = vmatprep.subr.bf16.mxu0 0
        %1497 = vmatpush1.bf16.msra.mxu0 0
        %1498 = vmatprep.subr.bf16.mxu0 0
        %1499 = vmatpush1.bf16.msra.mxu0 0
        %1500 = vmatprep.subr.bf16.mxu0 0
        %1501 = vmatpush1.bf16.msra.mxu0 0
        %1502 = vmatprep.subr.bf16.mxu0 0
        %1503 = vmatpush1.bf16.msra.mxu0 0
        %1504 = vmatprep.subr.bf16.mxu0 0
        %1505 = vmatpush1.bf16.msra.mxu0 0
        %1506 = vmatprep.subr.bf16.mxu0 0
        %1507 = vmatpush1.bf16.msra.mxu0 0
        %1508 = vmatprep.subr.bf16.mxu0 0
        %1509 = vmatpush1.bf16.msra.mxu0 0
        %1510 = vmatprep.mubr.bf16.mxu0 0
        %1511 = vmatmul.mubr.bf16.gmra.mrb[0].mxu0 %v1476
        %v1512 = vpop.f32.mrb[0].mxu0
        %v1513 = vadd.f32 %v1461, %v1512
        %v1514 = vpop.f32.mrb[0].mxu0
        %v1515 = vpop.f32.mrb[0].mxu0
        %v1516 = vadd.f32 %v1461, %v1515
        %v1517 = vpop.f32.mrb[0].mxu0
        %1518 = vdwg.mxu0
        %v1519 = vmul.f32 %v1513, %v1513
        %v1520 = vmul.f32 %v1516, %v1516
        %v1521 = vmul.f32 %v1513, %v1519
        %v1522 = vmul.f32 %v1516, %v1520
        %v1523 = vmul.f32 %v1521, 0.044715
        %v1524 = vmul.f32 %v1522, 0.044715
        %v1525 = vadd.f32 %v1513, %v1523
        %v1526 = vadd.f32 %v1516, %v1524
        %v1527 = vmul.f32 %v1525, 0.7978846
        %v1528 = vmul.f32 %v1526, 0.7978846
        %v1529 = vtanh.pop %v1527
        %v1530 = vtanh.pop %v1528
        %v1531 = vadd.f32 %v1529, 1.0
        %v1532 = vadd.f32 %v1530, 1.0
        %v1533 = vmul.f32 %v1531, 0.5
        %v1534 = vmul.f32 %v1532, 0.5
        %v1535 = vmul.f32 %v1513, %v1533
        %v1536 = vmul.f32 %v1516, %v1534
        %v1537 = vpack.c.bf16 %v1536, %v1535
        %v1538 = vld [vmem:[%s13] sm:$0xf]
        %v1539 = vld [vmem:[%s13 + $0x4] sm:$0xf]
        %v1540 = vld [vmem:[%s13 + $0x8] sm:$0xf]
        %v1541 = vld [vmem:[%s13 + $0xc] sm:$0xf]
        %v1542 = vld [vmem:[%s13 + $0x10] sm:$0xf]
        %v1543 = vld [vmem:[%s13 + $0x14] sm:$0xf]
        %v1544 = vld [vmem:[%s13 + $0x18] sm:$0xf]
        %v1545 = vld [vmem:[%s13 + $0x1c] sm:$0xf]
        %v1546 = vld [vmem:[%s13 + $0x20] sm:$0xf]
        %v1547 = vld [vmem:[%s13 + $0x24] sm:$0xf]
        %v1548 = vld [vmem:[%s13 + $0x28] sm:$0xf]
        %v1549 = vld [vmem:[%s13 + $0x2c] sm:$0xf]
        %v1550 = vld [vmem:[%s13 + $0x30] sm:$0xf]
        %v1551 = vld [vmem:[%s13 + $0x34] sm:$0xf]
        %v1552 = vld [vmem:[%s13 + $0x38] sm:$0xf]
        %v1553 = vld [vmem:[%s13 + $0x3c] sm:$0xf]
        %v1554 = vld [vmem:[%s14] sm:$0x1]
        %v1556 = vlaneseq
        %v1557 = vshrl.u32 %v1556, 7
        %v1558 = vsub.s32 0, %v1557
        %v1559 = vrot.slane %v1554, %v1558
        %v1577 = vunpack.c.l.b16 %v1538
        %v1578 = vunpack.c.l.b16 %v1539
        %v1579 = vunpack.c.l.b16 %v1540
        %v1580 = vunpack.c.l.b16 %v1541
        %v1581 = vunpack.c.l.b16 %v1542
        %v1582 = vunpack.c.l.b16 %v1543
        %v1583 = vunpack.c.l.b16 %v1544
        %v1584 = vunpack.c.l.b16 %v1545
        %v1585 = vunpack.c.l.b16 %v1546
        %v1586 = vunpack.c.l.b16 %v1547
        %v1587 = vunpack.c.l.b16 %v1548
        %v1588 = vunpack.c.l.b16 %v1549
        %v1589 = vunpack.c.l.b16 %v1550
        %v1590 = vunpack.c.l.b16 %v1551
        %v1591 = vunpack.c.l.b16 %v1552
        %v1592 = vunpack.c.l.b16 %v1553
        %v1593 = vpack.c.b16 %v1578, %v1577
        %v1594 = vpack.c.b16 %v1580, %v1579
        %v1595 = vpack.c.b16 %v1582, %v1581
        %v1596 = vpack.c.b16 %v1584, %v1583
        %v1597 = vpack.c.b16 %v1586, %v1585
        %v1598 = vpack.c.b16 %v1588, %v1587
        %v1599 = vpack.c.b16 %v1590, %v1589
        %v1600 = vpack.c.b16 %v1592, %v1591
        %1609 = vmatprep.subr.bf16.mxu0 0
        %1610 = vmatpush1.bf16.msra.mxu0 %v1593
        %1611 = vmatprep.subr.bf16.mxu0 0
        %1612 = vmatpush1.bf16.msra.mxu0 %v1594
        %1613 = vmatprep.subr.bf16.mxu0 0
        %1614 = vmatpush1.bf16.msra.mxu0 %v1595
        %1615 = vmatprep.subr.bf16.mxu0 0
        %1616 = vmatpush1.bf16.msra.mxu0 %v1596
        %1617 = vmatprep.subr.bf16.mxu0 0
        %1618 = vmatpush1.bf16.msra.mxu0 %v1597
        %1619 = vmatprep.subr.bf16.mxu0 0
        %1620 = vmatpush1.bf16.msra.mxu0 %v1598
        %1621 = vmatprep.subr.bf16.mxu0 0
        %1622 = vmatpush1.bf16.msra.mxu0 %v1599
        %1623 = vmatprep.subr.bf16.mxu0 0
        %1624 = vmatpush1.bf16.msra.mxu0 %v1600
        %1625 = vmatprep.subr.bf16.mxu0 0
        %1626 = vmatpush1.bf16.msra.mxu0 0
        %1627 = vmatprep.subr.bf16.mxu0 0
        %1628 = vmatpush1.bf16.msra.mxu0 0
        %1629 = vmatprep.subr.bf16.mxu0 0
        %1630 = vmatpush1.bf16.msra.mxu0 0
        %1631 = vmatprep.subr.bf16.mxu0 0
        %1632 = vmatpush1.bf16.msra.mxu0 0
        %1633 = vmatprep.subr.bf16.mxu0 0
        %1634 = vmatpush1.bf16.msra.mxu0 0
        %1635 = vmatprep.subr.bf16.mxu0 0
        %1636 = vmatpush1.bf16.msra.mxu0 0
        %1637 = vmatprep.subr.bf16.mxu0 0
        %1638 = vmatpush1.bf16.msra.mxu0 0
        %1639 = vmatprep.subr.bf16.mxu0 0
        %1640 = vmatpush1.bf16.msra.mxu0 0
        %1641 = vmatprep.mubr.bf16.mxu0 0
        %1642 = vmatmul.mubr.bf16.gmra.mrb[0].mxu0 %v1537
        %v1643 = vpop.f32.mrb[0].mxu0
        %v1644 = vadd.f32 %v1559, %v1643
        %v1645 = vpop.f32.mrb[0].mxu0
        %v1646 = vpop.f32.mrb[0].mxu0
        %v1647 = vadd.f32 %v1559, %v1646
        %v1648 = vpop.f32.mrb[0].mxu0
        %1649 = vdwg.mxu0
        %v1650 = vadd.f32 %v1405, %v1644
        %v1651 = vadd.f32 %v1406, %v1647
        %s1652 = scalar_lea.vmem %s3, 1
        %v1653 = vld [vmem:[%s1652] sm:$0x1]
        %s1654 = scalar_lea.vmem %s4, 1
        %v1655 = vld [vmem:[%s1654] sm:$0x1]
        %v1656 = vsel %vm700, %v1650, 0.0
        %1657 = vadd.xlane.f32.xlu0 %v1656
        %v1658 = vpop.xlane.xlu0 %1657
        %v1659 = vsel %vm700, %v1651, 0.0
        %1660 = vadd.xlane.f32.xlu0 %v1659
        %v1661 = vpop.xlane.xlu0 %1660
        %v1662 = vmul.f32 %v1658, %v707
        %v1663 = vmul.f32 %v1661, %v707
        %v1664 = vsub.f32 %v1650, %v1662
        %v1665 = vsub.f32 %v1651, %v1663
        %v1666 = vmul.f32 %v1664, %v1664
        %v1667 = vmul.f32 %v1665, %v1665
        %v1668 = vsel %vm700, %v1666, 0.0
        %1669 = vadd.xlane.f32.xlu0 %v1668
        %v1670 = vpop.xlane.xlu0 %1669
        %v1671 = vsel %vm700, %v1667, 0.0
        %1672 = vadd.xlane.f32.xlu0 %v1671
        %v1673 = vpop.xlane.xlu0 %1672
        %v1674 = vmul.f32 %v1670, %v707
        %v1675 = vmul.f32 %v1673, %v707
        %v1676 = vadd.f32 %v1674, 1e-05
        %v1677 = vadd.f32 %v1675, 1e-05
        %v1678 = vrsqrt.pop %v1676
        %v1679 = vrsqrt.pop %v1677
        %v1680 = vmul.f32 %v1664, %v1678
        %v1681 = vmul.f32 %v1665, %v1679
        %v1683 = vlaneseq
        %v1684 = vshrl.u32 %v1683, 7
        %v1685 = vsub.s32 0, %v1684
        %v1686 = vrot.slane %v1653, %v1685
        %v1688 = vmul.f32 %v1680, %v1686
        %v1689 = vmul.f32 %v1681, %v1686
        %v1691 = vlaneseq
        %v1692 = vshrl.u32 %v1691, 7
        %v1693 = vsub.s32 0, %v1692
        %v1694 = vrot.slane %v1655, %v1693
        %v1696 = vadd.f32 %v1688, %v1694
        %v1697 = vadd.f32 %v1689, %v1694
        %v1698 = vpack.c.bf16 %v1697, %v1696
        %s1699 = scalar_lea.vmem %s5, 16
        %v1700 = vld [vmem:[%s1699] sm:$0xf]
        %v1701 = vld [vmem:[%s1699 + $0x4] sm:$0xf]
        %v1702 = vld [vmem:[%s1699 + $0x8] sm:$0xf]
        %v1703 = vld [vmem:[%s1699 + $0xc] sm:$0xf]
        %s1704 = scalar_lea.vmem %s6, 1
        %v1705 = vld [vmem:[%s1704] sm:$0x1]
        %v1707 = vlaneseq
        %v1708 = vshrl.u32 %v1707, 7
        %v1709 = vsub.s32 0, %v1708
        %v1710 = vrot.slane %v1705, %v1709
        %v1716 = vunpack.c.l.b16 %v1700
        %v1717 = vunpack.c.l.b16 %v1701
        %v1718 = vunpack.c.l.b16 %v1702
        %v1719 = vunpack.c.l.b16 %v1703
        %v1720 = vpack.c.b16 %v1717, %v1716
        %v1721 = vpack.c.b16 %v1719, %v1718
        %v1725 = vsel %vm700, %v1698, 0
        %1727 = vmatprep.subr.bf16.mxu0 0
        %1728 = vmatpush1.bf16.msra.mxu0 %v1720
        %1729 = vmatprep.subr.bf16.mxu0 0
        %1730 = vmatpush1.bf16.msra.mxu0 %v1721
        %1731 = vmatprep.subr.bf16.mxu0 0
        %1732 = vmatpush1.bf16.msra.mxu0 0
        %1733 = vmatprep.subr.bf16.mxu0 0
        %1734 = vmatpush1.bf16.msra.mxu0 0
        %1735 = vmatprep.subr.bf16.mxu0 0
        %1736 = vmatpush1.bf16.msra.mxu0 0
        %1737 = vmatprep.subr.bf16.mxu0 0
        %1738 = vmatpush1.bf16.msra.mxu0 0
        %1739 = vmatprep.subr.bf16.mxu0 0
        %1740 = vmatpush1.bf16.msra.mxu0 0
        %1741 = vmatprep.subr.bf16.mxu0 0
        %1742 = vmatpush1.bf16.msra.mxu0 0
        %1743 = vmatprep.subr.bf16.mxu0 0
        %1744 = vmatpush1.bf16.msra.mxu0 0
        %1745 = vmatprep.subr.bf16.mxu0 0
        %1746 = vmatpush1.bf16.msra.mxu0 0
        %1747 = vmatprep.subr.bf16.mxu0 0
        %1748 = vmatpush1.bf16.msra.mxu0 0
        %1749 = vmatprep.subr.bf16.mxu0 0
        %1750 = vmatpush1.bf16.msra.mxu0 0
        %1751 = vmatprep.subr.bf16.mxu0 0
        %1752 = vmatpush1.bf16.msra.mxu0 0
        %1753 = vmatprep.subr.bf16.mxu0 0
        %1754 = vmatpush1.bf16.msra.mxu0 0
        %1755 = vmatprep.subr.bf16.mxu0 0
        %1756 = vmatpush1.bf16.msra.mxu0 0
        %1757 = vmatprep.subr.bf16.mxu0 0
        %1758 = vmatpush1.bf16.msra.mxu0 0
        %1759 = vmatprep.mubr.bf16.mxu0 0
        %1760 = vmatmul.mubr.bf16.gmra.mrb[0].mxu0 %v1725
        %v1761 = vpop.f32.mrb[0].mxu0
        %v1762 = vadd.f32 %v1710, %v1761
        %v1763 = vpop.f32.mrb[0].mxu0
        %v1764 = vpop.f32.mrb[0].mxu0
        %v1765 = vadd.f32 %v1710, %v1764
        %v1766 = vpop.f32.mrb[0].mxu0
        %1767 = vdwg.mxu0
        %v1768 = vpack.c.bf16 %v1765, %v1762
        %1770 = vrot.lane.b32.xlu0 %v1768, 96
        %v1771 = vpop.permute.xlu0 %1770
        %v1773 = vsel %vm816, %v1768, 0
        %v1776 = vsel %vm816, %v1771, 0
        %1778 = vmatprep.subr.bf16.mxu0 0
        %1779 = vmatpush1.bf16.xpose.msra.mxu0 %v1776
        %1780 = vmatprep.subr.bf16.mxu0 0
        %1781 = vmatpush1.bf16.xpose.msra.mxu0 0
        %1782 = vmatprep.subr.bf16.mxu0 0
        %1783 = vmatpush1.bf16.xpose.msra.mxu0 0
        %1784 = vmatprep.subr.bf16.mxu0 0
        %1785 = vmatpush1.bf16.xpose.msra.mxu0 0
        %1786 = vmatprep.subr.bf16.mxu0 0
        %1787 = vmatpush1.bf16.xpose.msra.mxu0 0
        %1788 = vmatprep.subr.bf16.mxu0 0
        %1789 = vmatpush1.bf16.xpose.msra.mxu0 0
        %1790 = vmatprep.subr.bf16.mxu0 0
        %1791 = vmatpush1.bf16.xpose.msra.mxu0 0
        %1792 = vmatprep.subr.bf16.mxu0 0
        %1793 = vmatpush1.bf16.xpose.msra.mxu0 0
        %1794 = vmatprep.subr.bf16.mxu0 0
        %1795 = vmatpush1.bf16.xpose.msra.mxu0 0
        %1796 = vmatprep.subr.bf16.mxu0 0
        %1797 = vmatpush1.bf16.xpose.msra.mxu0 0
        %1798 = vmatprep.subr.bf16.mxu0 0
        %1799 = vmatpush1.bf16.xpose.msra.mxu0 0
        %1800 = vmatprep.subr.bf16.mxu0 0
        %1801 = vmatpush1.bf16.xpose.msra.mxu0 0
        %1802 = vmatprep.subr.bf16.mxu0 0
        %1803 = vmatpush1.bf16.xpose.msra.mxu0 0
        %1804 = vmatprep.subr.bf16.mxu0 0
        %1805 = vmatpush1.bf16.xpose.msra.mxu0 0
        %1806 = vmatprep.subr.bf16.mxu0 0
        %1807 = vmatpush1.bf16.xpose.msra.mxu0 0
        %1808 = vmatprep.subr.bf16.mxu0 0
        %1809 = vmatpush1.bf16.xpose.msra.mxu0 0
        %1810 = vmatprep.mubr.bf16.mxu0 0
        %1811 = vmatmul.mubr.bf16.gmra.mrb[0].mxu0 %v1773
        %v1812 = vpop.f32.mrb[0].mxu0
        %v1813 = vadd.f32 0.0, %v1812
        %v1814 = vpop.f32.mrb[0].mxu0
        %v1815 = vpop.f32.mrb[0].mxu0
        %v1816 = vadd.f32 0.0, %v1815
        %v1817 = vpop.f32.mrb[0].mxu0
        %1818 = vdwg.mxu0
        %v1819 = vmul.f32 %v1813, 0.35355338
        %v1820 = vmul.f32 %v1816, 0.35355338
        %v1821 = vsel %vm866, %v1819, -inf
        %1822 = vmax.xlane.f32.xlu0 %v1821
        %v1823 = vpop.xlane.xlu0 %1822
        %v1824 = vsel %vm866, %v1820, -inf
        %1825 = vmax.xlane.f32.xlu0 %v1824
        %v1826 = vpop.xlane.xlu0 %1825
        %v1827 = vsub.f32 %v1819, %v1823
        %v1828 = vsub.f32 %v1820, %v1826
        %v1829 = vmul.f32 %v1827, 1.442695
        %v1830 = vpow.pop %v1829
        %v1831 = vmul.f32 %v1828, 1.442695
        %v1832 = vpow.pop %v1831
        %v1833 = vsel %vm866, %v1830, 0.0
        %1834 = vadd.xlane.f32.xlu0 %v1833
        %v1835 = vpop.xlane.xlu0 %1834
        %v1836 = vsel %vm866, %v1832, 0.0
        %1837 = vadd.xlane.f32.xlu0 %v1836
        %v1838 = vpop.xlane.xlu0 %1837
        %v1839 = vrcp.pop %v1835
        %v1840 = vrcp.pop %v1838
        %v1841 = vmul.f32 %v1830, %v1839
        %v1842 = vmul.f32 %v1832, %v1840
        %v1843 = vpack.c.bf16 %v1842, %v1841
        %1844 = vrot.lane.b32.xlu0 %v1768, 64
        %v1845 = vpop.permute.xlu0 %1844
        %v1848 = vsel %vm866, %v1843, 0
        %1850 = vmatprep.subr.bf16.mxu0 0
        %1851 = vmatpush1.bf16.msra.mxu0 %v1845
        %1852 = vmatprep.subr.bf16.mxu0 0
        %1853 = vmatpush1.bf16.msra.mxu0 0
        %1854 = vmatprep.subr.bf16.mxu0 0
        %1855 = vmatpush1.bf16.msra.mxu0 0
        %1856 = vmatprep.subr.bf16.mxu0 0
        %1857 = vmatpush1.bf16.msra.mxu0 0
        %1858 = vmatprep.subr.bf16.mxu0 0
        %1859 = vmatpush1.bf16.msra.mxu0 0
        %1860 = vmatprep.subr.bf16.mxu0 0
        %1861 = vmatpush1.bf16.msra.mxu0 0
        %1862 = vmatprep.subr.bf16.mxu0 0
        %1863 = vmatpush1.bf16.msra.mxu0 0
        %1864 = vmatprep.subr.bf16.mxu0 0
        %1865 = vmatpush1.bf16.msra.mxu0 0
        %1866 = vmatprep.subr.bf16.mxu0 0
        %1867 = vmatpush1.bf16.msra.mxu0 0
        %1868 = vmatprep.subr.bf16.mxu0 0
        %1869 = vmatpush1.bf16.msra.mxu0 0
        %1870 = vmatprep.subr.bf16.mxu0 0
        %1871 = vmatpush1.bf16.msra.mxu0 0
        %1872 = vmatprep.subr.bf16.mxu0 0
        %1873 = vmatpush1.bf16.msra.mxu0 0
        %1874 = vmatprep.subr.bf16.mxu0 0
        %1875 = vmatpush1.bf16.msra.mxu0 0
        %1876 = vmatprep.subr.bf16.mxu0 0
        %1877 = vmatpush1.bf16.msra.mxu0 0
        %1878 = vmatprep.subr.bf16.mxu0 0
        %1879 = vmatpush1.bf16.msra.mxu0 0
        %1880 = vmatprep.subr.bf16.mxu0 0
        %1881 = vmatpush1.bf16.msra.mxu0 0
        %1882 = vmatprep.mubr.bf16.mxu0 0
        %1883 = vmatmul.mubr.bf16.gmra.mrb[0].mxu0 %v1848
        %v1884 = vpop.f32.mrb[0].mxu0
        %v1885 = vadd.f32 0.0, %v1884
        %v1886 = vpop.f32.mrb[0].mxu0
        %v1887 = vpop.f32.mrb[0].mxu0
        %v1888 = vadd.f32 0.0, %v1887
        %v1889 = vpop.f32.mrb[0].mxu0
        %1890 = vdwg.mxu0
        %1891 = vrot.lane.b32.xlu0 %v1768, 120
        %v1892 = vpop.permute.xlu0 %1891
        %1893 = vrot.lane.b32.xlu0 %v1768, 88
        %v1894 = vpop.permute.xlu0 %1893
        %v1896 = vsel %vm816, %v1892, 0
        %v1899 = vsel %vm816, %v1894, 0
        %1901 = vmatprep.subr.bf16.mxu0 0
        %1902 = vmatpush1.bf16.xpose.msra.mxu0 %v1899
        %1903 = vmatprep.subr.bf16.mxu0 0
        %1904 = vmatpush1.bf16.xpose.msra.mxu0 0
        %1905 = vmatprep.subr.bf16.mxu0 0
        %1906 = vmatpush1.bf16.xpose.msra.mxu0 0
        %1907 = vmatprep.subr.bf16.mxu0 0
        %1908 = vmatpush1.bf16.xpose.msra.mxu0 0
        %1909 = vmatprep.subr.bf16.mxu0 0
        %1910 = vmatpush1.bf16.xpose.msra.mxu0 0
        %1911 = vmatprep.subr.bf16.mxu0 0
        %1912 = vmatpush1.bf16.xpose.msra.mxu0 0
        %1913 = vmatprep.subr.bf16.mxu0 0
        %1914 = vmatpush1.bf16.xpose.msra.mxu0 0
        %1915 = vmatprep.subr.bf16.mxu0 0
        %1916 = vmatpush1.bf16.xpose.msra.mxu0 0
        %1917 = vmatprep.subr.bf16.mxu0 0
        %1918 = vmatpush1.bf16.xpose.msra.mxu0 0
        %1919 = vmatprep.subr.bf16.mxu0 0
        %1920 = vmatpush1.bf16.xpose.msra.mxu0 0
        %1921 = vmatprep.subr.bf16.mxu0 0
        %1922 = vmatpush1.bf16.xpose.msra.mxu0 0
        %1923 = vmatprep.subr.bf16.mxu0 0
        %1924 = vmatpush1.bf16.xpose.msra.mxu0 0
        %1925 = vmatprep.subr.bf16.mxu0 0
        %1926 = vmatpush1.bf16.xpose.msra.mxu0 0
        %1927 = vmatprep.subr.bf16.mxu0 0
        %1928 = vmatpush1.bf16.xpose.msra.mxu0 0
        %1929 = vmatprep.subr.bf16.mxu0 0
        %1930 = vmatpush1.bf16.xpose.msra.mxu0 0
        %1931 = vmatprep.subr.bf16.mxu0 0
        %1932 = vmatpush1.bf16.xpose.msra.mxu0 0
        %1933 = vmatprep.mubr.bf16.mxu0 0
        %1934 = vmatmul.mubr.bf16.gmra.mrb[0].mxu0 %v1896
        %v1935 = vpop.f32.mrb[0].mxu0
        %v1936 = vadd.f32 0.0, %v1935
        %v1937 = vpop.f32.mrb[0].mxu0
        %v1938 = vpop.f32.mrb[0].mxu0
        %v1939 = vadd.f32 0.0, %v1938
        %v1940 = vpop.f32.mrb[0].mxu0
        %1941 = vdwg.mxu0
        %v1942 = vmul.f32 %v1936, 0.35355338
        %v1943 = vmul.f32 %v1939, 0.35355338
        %v1944 = vsel %vm866, %v1942, -inf
        %1945 = vmax.xlane.f32.xlu0 %v1944
        %v1946 = vpop.xlane.xlu0 %1945
        %v1947 = vsel %vm866, %v1943, -inf
        %1948 = vmax.xlane.f32.xlu0 %v1947
        %v1949 = vpop.xlane.xlu0 %1948
        %v1950 = vsub.f32 %v1942, %v1946
        %v1951 = vsub.f32 %v1943, %v1949
        %v1952 = vmul.f32 %v1950, 1.442695
        %v1953 = vpow.pop %v1952
        %v1954 = vmul.f32 %v1951, 1.442695
        %v1955 = vpow.pop %v1954
        %v1956 = vsel %vm866, %v1953, 0.0
        %1957 = vadd.xlane.f32.xlu0 %v1956
        %v1958 = vpop.xlane.xlu0 %1957
        %v1959 = vsel %vm866, %v1955, 0.0
        %1960 = vadd.xlane.f32.xlu0 %v1959
        %v1961 = vpop.xlane.xlu0 %1960
        %v1962 = vrcp.pop %v1958
        %v1963 = vrcp.pop %v1961
        %v1964 = vmul.f32 %v1953, %v1962
        %v1965 = vmul.f32 %v1955, %v1963
        %v1966 = vpack.c.bf16 %v1965, %v1964
        %1967 = vrot.lane.b32.xlu0 %v1768, 56
        %v1968 = vpop.permute.xlu0 %1967
        %v1971 = vsel %vm866, %v1966, 0
        %1973 = vmatprep.subr.bf16.mxu0 0
        %1974 = vmatpush1.bf16.msra.mxu0 %v1968
        %1975 = vmatprep.subr.bf16.mxu0 0
        %1976 = vmatpush1.bf16.msra.mxu0 0
        %1977 = vmatprep.subr.bf16.mxu0 0
        %1978 = vmatpush1.bf16.msra.mxu0 0
        %1979 = vmatprep.subr.bf16.mxu0 0
        %1980 = vmatpush1.bf16.msra.mxu0 0
        %1981 = vmatprep.subr.bf16.mxu0 0
        %1982 = vmatpush1.bf16.msra.mxu0 0
        %1983 = vmatprep.subr.bf16.mxu0 0
        %1984 = vmatpush1.bf16.msra.mxu0 0
        %1985 = vmatprep.subr.bf16.mxu0 0
        %1986 = vmatpush1.bf16.msra.mxu0 0
        %1987 = vmatprep.subr.bf16.mxu0 0
        %1988 = vmatpush1.bf16.msra.mxu0 0
        %1989 = vmatprep.subr.bf16.mxu0 0
        %1990 = vmatpush1.bf16.msra.mxu0 0
        %1991 = vmatprep.subr.bf16.mxu0 0
        %1992 = vmatpush1.bf16.msra.mxu0 0
        %1993 = vmatprep.subr.bf16.mxu0 0
        %1994 = vmatpush1.bf16.msra.mxu0 0
        %1995 = vmatprep.subr.bf16.mxu0 0
        %1996 = vmatpush1.bf16.msra.mxu0 0
        %1997 = vmatprep.subr.bf16.mxu0 0
        %1998 = vmatpush1.bf16.msra.mxu0 0
        %1999 = vmatprep.subr.bf16.mxu0 0
        %2000 = vmatpush1.bf16.msra.mxu0 0
        %2001 = vmatprep.subr.bf16.mxu0 0
        %2002 = vmatpush1.bf16.msra.mxu0 0
        %2003 = vmatprep.subr.bf16.mxu0 0
        %2004 = vmatpush1.bf16.msra.mxu0 0
        %2005 = vmatprep.mubr.bf16.mxu0 0
        %2006 = vmatmul.mubr.bf16.gmra.mrb[0].mxu0 %v1971
        %v2007 = vpop.f32.mrb[0].mxu0
        %v2008 = vadd.f32 0.0, %v2007
        %v2009 = vpop.f32.mrb[0].mxu0
        %v2010 = vpop.f32.mrb[0].mxu0
        %v2011 = vadd.f32 0.0, %v2010
        %v2012 = vpop.f32.mrb[0].mxu0
        %2013 = vdwg.mxu0
        %2014 = vrot.lane.b32.xlu0 %v1768, 112
        %v2015 = vpop.permute.xlu0 %2014
        %2016 = vrot.lane.b32.xlu0 %v1768, 80
        %v2017 = vpop.permute.xlu0 %2016
        %v2019 = vsel %vm816, %v2015, 0
        %v2022 = vsel %vm816, %v2017, 0
        %2024 = vmatprep.subr.bf16.mxu0 0
        %2025 = vmatpush1.bf16.xpose.msra.mxu0 %v2022
        %2026 = vmatprep.subr.bf16.mxu0 0
        %2027 = vmatpush1.bf16.xpose.msra.mxu0 0
        %2028 = vmatprep.subr.bf16.mxu0 0
        %2029 = vmatpush1.bf16.xpose.msra.mxu0 0
        %2030 = vmatprep.subr.bf16.mxu0 0
        %2031 = vmatpush1.bf16.xpose.msra.mxu0 0
        %2032 = vmatprep.subr.bf16.mxu0 0
        %2033 = vmatpush1.bf16.xpose.msra.mxu0 0
        %2034 = vmatprep.subr.bf16.mxu0 0
        %2035 = vmatpush1.bf16.xpose.msra.mxu0 0
        %2036 = vmatprep.subr.bf16.mxu0 0
        %2037 = vmatpush1.bf16.xpose.msra.mxu0 0
        %2038 = vmatprep.subr.bf16.mxu0 0
        %2039 = vmatpush1.bf16.xpose.msra.mxu0 0
        %2040 = vmatprep.subr.bf16.mxu0 0
        %2041 = vmatpush1.bf16.xpose.msra.mxu0 0
        %2042 = vmatprep.subr.bf16.mxu0 0
        %2043 = vmatpush1.bf16.xpose.msra.mxu0 0
        %2044 = vmatprep.subr.bf16.mxu0 0
        %2045 = vmatpush1.bf16.xpose.msra.mxu0 0
        %2046 = vmatprep.subr.bf16.mxu0 0
        %2047 = vmatpush1.bf16.xpose.msra.mxu0 0
        %2048 = vmatprep.subr.bf16.mxu0 0
        %2049 = vmatpush1.bf16.xpose.msra.mxu0 0
        %2050 = vmatprep.subr.bf16.mxu0 0
        %2051 = vmatpush1.bf16.xpose.msra.mxu0 0
        %2052 = vmatprep.subr.bf16.mxu0 0
        %2053 = vmatpush1.bf16.xpose.msra.mxu0 0
        %2054 = vmatprep.subr.bf16.mxu0 0
        %2055 = vmatpush1.bf16.xpose.msra.mxu0 0
        %2056 = vmatprep.mubr.bf16.mxu0 0
        %2057 = vmatmul.mubr.bf16.gmra.mrb[0].mxu0 %v2019
        %v2058 = vpop.f32.mrb[0].mxu0
        %v2059 = vadd.f32 0.0, %v2058
        %v2060 = vpop.f32.mrb[0].mxu0
        %v2061 = vpop.f32.mrb[0].mxu0
        %v2062 = vadd.f32 0.0, %v2061
        %v2063 = vpop.f32.mrb[0].mxu0
        %2064 = vdwg.mxu0
        %v2065 = vmul.f32 %v2059, 0.35355338
        %v2066 = vmul.f32 %v2062, 0.35355338
        %v2067 = vsel %vm866, %v2065, -inf
        %2068 = vmax.xlane.f32.xlu0 %v2067
        %v2069 = vpop.xlane.xlu0 %2068
        %v2070 = vsel %vm866, %v2066, -inf
        %2071 = vmax.xlane.f32.xlu0 %v2070
        %v2072 = vpop.xlane.xlu0 %2071
        %v2073 = vsub.f32 %v2065, %v2069
        %v2074 = vsub.f32 %v2066, %v2072
        %v2075 = vmul.f32 %v2073, 1.442695
        %v2076 = vpow.pop %v2075
        %v2077 = vmul.f32 %v2074, 1.442695
        %v2078 = vpow.pop %v2077
        %v2079 = vsel %vm866, %v2076, 0.0
        %2080 = vadd.xlane.f32.xlu0 %v2079
        %v2081 = vpop.xlane.xlu0 %2080
        %v2082 = vsel %vm866, %v2078, 0.0
        %2083 = vadd.xlane.f32.xlu0 %v2082
        %v2084 = vpop.xlane.xlu0 %2083
        %v2085 = vrcp.pop %v2081
        %v2086 = vrcp.pop %v2084
        %v2087 = vmul.f32 %v2076, %v2085
        %v2088 = vmul.f32 %v2078, %v2086
        %v2089 = vpack.c.bf16 %v2088, %v2087
        %2090 = vrot.lane.b32.xlu0 %v1768, 48
        %v2091 = vpop.permute.xlu0 %2090
        %v2094 = vsel %vm866, %v2089, 0
        %2096 = vmatprep.subr.bf16.mxu0 0
        %2097 = vmatpush1.bf16.msra.mxu0 %v2091
        %2098 = vmatprep.subr.bf16.mxu0 0
        %2099 = vmatpush1.bf16.msra.mxu0 0
        %2100 = vmatprep.subr.bf16.mxu0 0
        %2101 = vmatpush1.bf16.msra.mxu0 0
        %2102 = vmatprep.subr.bf16.mxu0 0
        %2103 = vmatpush1.bf16.msra.mxu0 0
        %2104 = vmatprep.subr.bf16.mxu0 0
        %2105 = vmatpush1.bf16.msra.mxu0 0
        %2106 = vmatprep.subr.bf16.mxu0 0
        %2107 = vmatpush1.bf16.msra.mxu0 0
        %2108 = vmatprep.subr.bf16.mxu0 0
        %2109 = vmatpush1.bf16.msra.mxu0 0
        %2110 = vmatprep.subr.bf16.mxu0 0
        %2111 = vmatpush1.bf16.msra.mxu0 0
        %2112 = vmatprep.subr.bf16.mxu0 0
        %2113 = vmatpush1.bf16.msra.mxu0 0
        %2114 = vmatprep.subr.bf16.mxu0 0
        %2115 = vmatpush1.bf16.msra.mxu0 0
        %2116 = vmatprep.subr.bf16.mxu0 0
        %2117 = vmatpush1.bf16.msra.mxu0 0
        %2118 = vmatprep.subr.bf16.mxu0 0
        %2119 = vmatpush1.bf16.msra.mxu0 0
        %2120 = vmatprep.subr.bf16.mxu0 0
        %2121 = vmatpush1.bf16.msra.mxu0 0
        %2122 = vmatprep.subr.bf16.mxu0 0
        %2123 = vmatpush1.bf16.msra.mxu0 0
        %2124 = vmatprep.subr.bf16.mxu0 0
        %2125 = vmatpush1.bf16.msra.mxu0 0
        %2126 = vmatprep.subr.bf16.mxu0 0
        %2127 = vmatpush1.bf16.msra.mxu0 0
        %2128 = vmatprep.mubr.bf16.mxu0 0
        %2129 = vmatmul.mubr.bf16.gmra.mrb[0].mxu0 %v2094
        %v2130 = vpop.f32.mrb[0].mxu0
        %v2131 = vadd.f32 0.0, %v2130
        %v2132 = vpop.f32.mrb[0].mxu0
        %v2133 = vpop.f32.mrb[0].mxu0
        %v2134 = vadd.f32 0.0, %v2133
        %v2135 = vpop.f32.mrb[0].mxu0
        %2136 = vdwg.mxu0
        %2137 = vrot.lane.b32.xlu0 %v1768, 104
        %v2138 = vpop.permute.xlu0 %2137
        %2139 = vrot.lane.b32.xlu0 %v1768, 72
        %v2140 = vpop.permute.xlu0 %2139
        %v2142 = vsel %vm816, %v2138, 0
        %v2145 = vsel %vm816, %v2140, 0
        %2147 = vmatprep.subr.bf16.mxu0 0
        %2148 = vmatpush1.bf16.xpose.msra.mxu0 %v2145
        %2149 = vmatprep.subr.bf16.mxu0 0
        %2150 = vmatpush1.bf16.xpose.msra.mxu0 0
        %2151 = vmatprep.subr.bf16.mxu0 0
        %2152 = vmatpush1.bf16.xpose.msra.mxu0 0
        %2153 = vmatprep.subr.bf16.mxu0 0
        %2154 = vmatpush1.bf16.xpose.msra.mxu0 0
        %2155 = vmatprep.subr.bf16.mxu0 0
        %2156 = vmatpush1.bf16.xpose.msra.mxu0 0
        %2157 = vmatprep.subr.bf16.mxu0 0
        %2158 = vmatpush1.bf16.xpose.msra.mxu0 0
        %2159 = vmatprep.subr.bf16.mxu0 0
        %2160 = vmatpush1.bf16.xpose.msra.mxu0 0
        %2161 = vmatprep.subr.bf16.mxu0 0
        %2162 = vmatpush1.bf16.xpose.msra.mxu0 0
        %2163 = vmatprep.subr.bf16.mxu0 0
        %2164 = vmatpush1.bf16.xpose.msra.mxu0 0
        %2165 = vmatprep.subr.bf16.mxu0 0
        %2166 = vmatpush1.bf16.xpose.msra.mxu0 0
        %2167 = vmatprep.subr.bf16.mxu0 0
        %2168 = vmatpush1.bf16.xpose.msra.mxu0 0
        %2169 = vmatprep.subr.bf16.mxu0 0
        %2170 = vmatpush1.bf16.xpose.msra.mxu0 0
        %2171 = vmatprep.subr.bf16.mxu0 0
        %2172 = vmatpush1.bf16.xpose.msra.mxu0 0
        %2173 = vmatprep.subr.bf16.mxu0 0
        %2174 = vmatpush1.bf16.xpose.msra.mxu0 0
        %2175 = vmatprep.subr.bf16.mxu0 0
        %2176 = vmatpush1.bf16.xpose.msra.mxu0 0
        %2177 = vmatprep.subr.bf16.mxu0 0
        %2178 = vmatpush1.bf16.xpose.msra.mxu0 0
        %2179 = vmatprep.mubr.bf16.mxu0 0
        %2180 = vmatmul.mubr.bf16.gmra.mrb[0].mxu0 %v2142
        %v2181 = vpop.f32.mrb[0].mxu0
        %v2182 = vadd.f32 0.0, %v2181
        %v2183 = vpop.f32.mrb[0].mxu0
        %v2184 = vpop.f32.mrb[0].mxu0
        %v2185 = vadd.f32 0.0, %v2184
        %v2186 = vpop.f32.mrb[0].mxu0
        %2187 = vdwg.mxu0
        %v2188 = vmul.f32 %v2182, 0.35355338
        %v2189 = vmul.f32 %v2185, 0.35355338
        %v2190 = vsel %vm866, %v2188, -inf
        %2191 = vmax.xlane.f32.xlu0 %v2190
        %v2192 = vpop.xlane.xlu0 %2191
        %v2193 = vsel %vm866, %v2189, -inf
        %2194 = vmax.xlane.f32.xlu0 %v2193
        %v2195 = vpop.xlane.xlu0 %2194
        %v2196 = vsub.f32 %v2188, %v2192
        %v2197 = vsub.f32 %v2189, %v2195
        %v2198 = vmul.f32 %v2196, 1.442695
        %v2199 = vpow.pop %v2198
        %v2200 = vmul.f32 %v2197, 1.442695
        %v2201 = vpow.pop %v2200
        %v2202 = vsel %vm866, %v2199, 0.0
        %2203 = vadd.xlane.f32.xlu0 %v2202
        %v2204 = vpop.xlane.xlu0 %2203
        %v2205 = vsel %vm866, %v2201, 0.0
        %2206 = vadd.xlane.f32.xlu0 %v2205
        %v2207 = vpop.xlane.xlu0 %2206
        %v2208 = vrcp.pop %v2204
        %v2209 = vrcp.pop %v2207
        %v2210 = vmul.f32 %v2199, %v2208
        %v2211 = vmul.f32 %v2201, %v2209
        %v2212 = vpack.c.bf16 %v2211, %v2210
        %2213 = vrot.lane.b32.xlu0 %v1768, 40
        %v2214 = vpop.permute.xlu0 %2213
        %v2217 = vsel %vm866, %v2212, 0
        %2219 = vmatprep.subr.bf16.mxu0 0
        %2220 = vmatpush1.bf16.msra.mxu0 %v2214
        %2221 = vmatprep.subr.bf16.mxu0 0
        %2222 = vmatpush1.bf16.msra.mxu0 0
        %2223 = vmatprep.subr.bf16.mxu0 0
        %2224 = vmatpush1.bf16.msra.mxu0 0
        %2225 = vmatprep.subr.bf16.mxu0 0
        %2226 = vmatpush1.bf16.msra.mxu0 0
        %2227 = vmatprep.subr.bf16.mxu0 0
        %2228 = vmatpush1.bf16.msra.mxu0 0
        %2229 = vmatprep.subr.bf16.mxu0 0
        %2230 = vmatpush1.bf16.msra.mxu0 0
        %2231 = vmatprep.subr.bf16.mxu0 0
        %2232 = vmatpush1.bf16.msra.mxu0 0
        %2233 = vmatprep.subr.bf16.mxu0 0
        %2234 = vmatpush1.bf16.msra.mxu0 0
        %2235 = vmatprep.subr.bf16.mxu0 0
        %2236 = vmatpush1.bf16.msra.mxu0 0
        %2237 = vmatprep.subr.bf16.mxu0 0
        %2238 = vmatpush1.bf16.msra.mxu0 0
        %2239 = vmatprep.subr.bf16.mxu0 0
        %2240 = vmatpush1.bf16.msra.mxu0 0
        %2241 = vmatprep.subr.bf16.mxu0 0
        %2242 = vmatpush1.bf16.msra.mxu0 0
        %2243 = vmatprep.subr.bf16.mxu0 0
        %2244 = vmatpush1.bf16.msra.mxu0 0
        %2245 = vmatprep.subr.bf16.mxu0 0
        %2246 = vmatpush1.bf16.msra.mxu0 0
        %2247 = vmatprep.subr.bf16.mxu0 0
        %2248 = vmatpush1.bf16.msra.mxu0 0
        %2249 = vmatprep.subr.bf16.mxu0 0
        %2250 = vmatpush1.bf16.msra.mxu0 0
        %2251 = vmatprep.mubr.bf16.mxu0 0
        %2252 = vmatmul.mubr.bf16.gmra.mrb[0].mxu0 %v2217
        %v2253 = vpop.f32.mrb[0].mxu0
        %v2254 = vadd.f32 0.0, %v2253
        %v2255 = vpop.f32.mrb[0].mxu0
        %v2256 = vpop.f32.mrb[0].mxu0
        %v2257 = vadd.f32 0.0, %v2256
        %v2258 = vpop.f32.mrb[0].mxu0
        %2259 = vdwg.mxu0
        %2262 = vrot.lane.b32.xlu0 %v2008, 8
        %v2263 = vpop.permute.xlu0 %2262
        %2264 = vrot.lane.b32.xlu0 %v2011, 8
        %v2265 = vpop.permute.xlu0 %2264
        %2270 = vrot.lane.b32.xlu0 %v2131, 16
        %v2271 = vpop.permute.xlu0 %2270
        %2272 = vrot.lane.b32.xlu0 %v2134, 16
        %v2273 = vpop.permute.xlu0 %2272
        %2278 = vrot.lane.b32.xlu0 %v2254, 24
        %v2279 = vpop.permute.xlu0 %2278
        %2280 = vrot.lane.b32.xlu0 %v2257, 24
        %v2281 = vpop.permute.xlu0 %2280
        %v2284 = vsel %vm816, %v1885, %v2263
        %v2285 = vsel %vm816, %v1888, %v2265
        %v2286 = vsel %vm866, %v2284, %v2271
        %v2287 = vsel %vm866, %v2285, %v2273
        %v2288 = vsel %vm1334, %v2286, %v2279
        %v2289 = vsel %vm1334, %v2287, %v2281
        %v2290 = vpack.c.bf16 %v2289, %v2288
        %s2291 = scalar_lea.vmem %s7, 16
        %v2292 = vld [vmem:[%s2291] sm:$0xf]
        %v2293 = vld [vmem:[%s2291 + $0x4] sm:$0xf]
        %v2294 = vld [vmem:[%s2291 + $0x8] sm:$0xf]
        %v2295 = vld [vmem:[%s2291 + $0xc] sm:$0xf]
        %s2296 = scalar_lea.vmem %s8, 1
        %v2297 = vld [vmem:[%s2296] sm:$0x1]
        %v2299 = vlaneseq
        %v2300 = vshrl.u32 %v2299, 7
        %v2301 = vsub.s32 0, %v2300
        %v2302 = vrot.slane %v2297, %v2301
        %v2308 = vunpack.c.l.b16 %v2292
        %v2309 = vunpack.c.l.b16 %v2293
        %v2310 = vunpack.c.l.b16 %v2294
        %v2311 = vunpack.c.l.b16 %v2295
        %v2312 = vpack.c.b16 %v2309, %v2308
        %v2313 = vpack.c.b16 %v2311, %v2310
        %v2317 = vsel %vm700, %v2290, 0
        %2319 = vmatprep.subr.bf16.mxu0 0
        %2320 = vmatpush1.bf16.msra.mxu0 %v2312
        %2321 = vmatprep.subr.bf16.mxu0 0
        %2322 = vmatpush1.bf16.msra.mxu0 %v2313
        %2323 = vmatprep.subr.bf16.mxu0 0
        %2324 = vmatpush1.bf16.msra.mxu0 0
        %2325 = vmatprep.subr.bf16.mxu0 0
        %2326 = vmatpush1.bf16.msra.mxu0 0
        %2327 = vmatprep.subr.bf16.mxu0 0
        %2328 = vmatpush1.bf16.msra.mxu0 0
        %2329 = vmatprep.subr.bf16.mxu0 0
        %2330 = vmatpush1.bf16.msra.mxu0 0
        %2331 = vmatprep.subr.bf16.mxu0 0
        %2332 = vmatpush1.bf16.msra.mxu0 0
        %2333 = vmatprep.subr.bf16.mxu0 0
        %2334 = vmatpush1.bf16.msra.mxu0 0
        %2335 = vmatprep.subr.bf16.mxu0 0
        %2336 = vmatpush1.bf16.msra.mxu0 0
        %2337 = vmatprep.subr.bf16.mxu0 0
        %2338 = vmatpush1.bf16.msra.mxu0 0
        %2339 = vmatprep.subr.bf16.mxu0 0
        %2340 = vmatpush1.bf16.msra.mxu0 0
        %2341 = vmatprep.subr.bf16.mxu0 0
        %2342 = vmatpush1.bf16.msra.mxu0 0
        %2343 = vmatprep.subr.bf16.mxu0 0
        %2344 = vmatpush1.bf16.msra.mxu0 0
        %2345 = vmatprep.subr.bf16.mxu0 0
        %2346 = vmatpush1.bf16.msra.mxu0 0
        %2347 = vmatprep.subr.bf16.mxu0 0
        %2348 = vmatpush1.bf16.msra.mxu0 0
        %2349 = vmatprep.subr.bf16.mxu0 0
        %2350 = vmatpush1.bf16.msra.mxu0 0
        %2351 = vmatprep.mubr.bf16.mxu0 0
        %2352 = vmatmul.mubr.bf16.gmra.mrb[0].mxu0 %v2317
        %v2353 = vpop.f32.mrb[0].mxu0
        %v2354 = vadd.f32 %v2302, %v2353
        %v2355 = vpop.f32.mrb[0].mxu0
        %v2356 = vpop.f32.mrb[0].mxu0
        %v2357 = vadd.f32 %v2302, %v2356
        %v2358 = vpop.f32.mrb[0].mxu0
        %2359 = vdwg.mxu0
        %v2360 = vadd.f32 %v1650, %v2354
        %v2361 = vadd.f32 %v1651, %v2357
        %s2362 = scalar_lea.vmem %s9, 1
        %v2363 = vld [vmem:[%s2362] sm:$0x1]
        %s2364 = scalar_lea.vmem %s10, 1
        %v2365 = vld [vmem:[%s2364] sm:$0x1]
        %v2366 = vsel %vm700, %v2360, 0.0
        %2367 = vadd.xlane.f32.xlu0 %v2366
        %v2368 = vpop.xlane.xlu0 %2367
        %v2369 = vsel %vm700, %v2361, 0.0
        %2370 = vadd.xlane.f32.xlu0 %v2369
        %v2371 = vpop.xlane.xlu0 %2370
        %v2372 = vmul.f32 %v2368, %v707
        %v2373 = vmul.f32 %v2371, %v707
        %v2374 = vsub.f32 %v2360, %v2372
        %v2375 = vsub.f32 %v2361, %v2373
        %v2376 = vmul.f32 %v2374, %v2374
        %v2377 = vmul.f32 %v2375, %v2375
        %v2378 = vsel %vm700, %v2376, 0.0
        %2379 = vadd.xlane.f32.xlu0 %v2378
        %v2380 = vpop.xlane.xlu0 %2379
        %v2381 = vsel %vm700, %v2377, 0.0
        %2382 = vadd.xlane.f32.xlu0 %v2381
        %v2383 = vpop.xlane.xlu0 %2382
        %v2384 = vmul.f32 %v2380, %v707
        %v2385 = vmul.f32 %v2383, %v707
        %v2386 = vadd.f32 %v2384, 1e-05
        %v2387 = vadd.f32 %v2385, 1e-05
        %v2388 = vrsqrt.pop %v2386
        %v2389 = vrsqrt.pop %v2387
        %v2390 = vmul.f32 %v2374, %v2388
        %v2391 = vmul.f32 %v2375, %v2389
        %v2393 = vlaneseq
        %v2394 = vshrl.u32 %v2393, 7
        %v2395 = vsub.s32 0, %v2394
        %v2396 = vrot.slane %v2363, %v2395
        %v2398 = vmul.f32 %v2390, %v2396
        %v2399 = vmul.f32 %v2391, %v2396
        %v2401 = vlaneseq
        %v2402 = vshrl.u32 %v2401, 7
        %v2403 = vsub.s32 0, %v2402
        %v2404 = vrot.slane %v2365, %v2403
        %v2406 = vadd.f32 %v2398, %v2404
        %v2407 = vadd.f32 %v2399, %v2404
        %v2408 = vpack.c.bf16 %v2407, %v2406
        %s2409 = scalar_lea.vmem %s11, 16
        %v2410 = vld [vmem:[%s2409] sm:$0xf]
        %v2411 = vld [vmem:[%s2409 + $0x4] sm:$0xf]
        %v2412 = vld [vmem:[%s2409 + $0x8] sm:$0xf]
        %v2413 = vld [vmem:[%s2409 + $0xc] sm:$0xf]
        %s2414 = scalar_lea.vmem %s12, 1
        %v2415 = vld [vmem:[%s2414] sm:$0x1]
        %v2417 = vlaneseq
        %v2418 = vshrl.u32 %v2417, 7
        %v2419 = vsub.s32 0, %v2418
        %v2420 = vrot.slane %v2415, %v2419
        %v2426 = vunpack.c.l.b16 %v2410
        %v2427 = vunpack.c.l.b16 %v2411
        %v2428 = vunpack.c.l.b16 %v2412
        %v2429 = vunpack.c.l.b16 %v2413
        %v2430 = vpack.c.b16 %v2427, %v2426
        %v2431 = vpack.c.b16 %v2429, %v2428
        %v2435 = vsel %vm700, %v2408, 0
        %2437 = vmatprep.subr.bf16.mxu0 0
        %2438 = vmatpush1.bf16.msra.mxu0 %v2430
        %2439 = vmatprep.subr.bf16.mxu0 0
        %2440 = vmatpush1.bf16.msra.mxu0 %v2431
        %2441 = vmatprep.subr.bf16.mxu0 0
        %2442 = vmatpush1.bf16.msra.mxu0 0
        %2443 = vmatprep.subr.bf16.mxu0 0
        %2444 = vmatpush1.bf16.msra.mxu0 0
        %2445 = vmatprep.subr.bf16.mxu0 0
        %2446 = vmatpush1.bf16.msra.mxu0 0
        %2447 = vmatprep.subr.bf16.mxu0 0
        %2448 = vmatpush1.bf16.msra.mxu0 0
        %2449 = vmatprep.subr.bf16.mxu0 0
        %2450 = vmatpush1.bf16.msra.mxu0 0
        %2451 = vmatprep.subr.bf16.mxu0 0
        %2452 = vmatpush1.bf16.msra.mxu0 0
        %2453 = vmatprep.subr.bf16.mxu0 0
        %2454 = vmatpush1.bf16.msra.mxu0 0
        %2455 = vmatprep.subr.bf16.mxu0 0
        %2456 = vmatpush1.bf16.msra.mxu0 0
        %2457 = vmatprep.subr.bf16.mxu0 0
        %2458 = vmatpush1.bf16.msra.mxu0 0
        %2459 = vmatprep.subr.bf16.mxu0 0
        %2460 = vmatpush1.bf16.msra.mxu0 0
        %2461 = vmatprep.subr.bf16.mxu0 0
        %2462 = vmatpush1.bf16.msra.mxu0 0
        %2463 = vmatprep.subr.bf16.mxu0 0
        %2464 = vmatpush1.bf16.msra.mxu0 0
        %2465 = vmatprep.subr.bf16.mxu0 0
        %2466 = vmatpush1.bf16.msra.mxu0 0
        %2467 = vmatprep.subr.bf16.mxu0 0
        %2468 = vmatpush1.bf16.msra.mxu0 0
        %2469 = vmatprep.mubr.bf16.mxu0 0
        %2470 = vmatmul.mubr.bf16.gmra.mrb[0].mxu0 %v2435
        %v2471 = vpop.f32.mrb[0].mxu0
        %v2472 = vadd.f32 %v2420, %v2471
        %v2473 = vpop.f32.mrb[0].mxu0
        %v2474 = vpop.f32.mrb[0].mxu0
        %v2475 = vadd.f32 %v2420, %v2474
        %v2476 = vpop.f32.mrb[0].mxu0
        %2477 = vdwg.mxu0
        %v2478 = vmul.f32 %v2472, %v2472
        %v2479 = vmul.f32 %v2475, %v2475
        %v2480 = vmul.f32 %v2472, %v2478
        %v2481 = vmul.f32 %v2475, %v2479
        %v2482 = vmul.f32 %v2480, 0.044715
        %v2483 = vmul.f32 %v2481, 0.044715
        %v2484 = vadd.f32 %v2472, %v2482
        %v2485 = vadd.f32 %v2475, %v2483
        %v2486 = vmul.f32 %v2484, 0.7978846
        %v2487 = vmul.f32 %v2485, 0.7978846
        %v2488 = vtanh.pop %v2486
        %v2489 = vtanh.pop %v2487
        %v2490 = vadd.f32 %v2488, 1.0
        %v2491 = vadd.f32 %v2489, 1.0
        %v2492 = vmul.f32 %v2490, 0.5
        %v2493 = vmul.f32 %v2491, 0.5
        %v2494 = vmul.f32 %v2472, %v2492
        %v2495 = vmul.f32 %v2475, %v2493
        %v2496 = vpack.c.bf16 %v2495, %v2494
        %s2497 = scalar_lea.vmem %s13, 64
        %v2498 = vld [vmem:[%s2497] sm:$0xf]
        %v2499 = vld [vmem:[%s2497 + $0x4] sm:$0xf]
        %v2500 = vld [vmem:[%s2497 + $0x8] sm:$0xf]
        %v2501 = vld [vmem:[%s2497 + $0xc] sm:$0xf]
        %v2502 = vld [vmem:[%s2497 + $0x10] sm:$0xf]
        %v2503 = vld [vmem:[%s2497 + $0x14] sm:$0xf]
        %v2504 = vld [vmem:[%s2497 + $0x18] sm:$0xf]
        %v2505 = vld [vmem:[%s2497 + $0x1c] sm:$0xf]
        %v2506 = vld [vmem:[%s2497 + $0x20] sm:$0xf]
        %v2507 = vld [vmem:[%s2497 + $0x24] sm:$0xf]
        %v2508 = vld [vmem:[%s2497 + $0x28] sm:$0xf]
        %v2509 = vld [vmem:[%s2497 + $0x2c] sm:$0xf]
        %v2510 = vld [vmem:[%s2497 + $0x30] sm:$0xf]
        %v2511 = vld [vmem:[%s2497 + $0x34] sm:$0xf]
        %v2512 = vld [vmem:[%s2497 + $0x38] sm:$0xf]
        %v2513 = vld [vmem:[%s2497 + $0x3c] sm:$0xf]
        %s2514 = scalar_lea.vmem %s14, 1
        %v2515 = vld [vmem:[%s2514] sm:$0x1]
        %v2517 = vlaneseq
        %v2518 = vshrl.u32 %v2517, 7
        %v2519 = vsub.s32 0, %v2518
        %v2520 = vrot.slane %v2515, %v2519
        %v2538 = vunpack.c.l.b16 %v2498
        %v2539 = vunpack.c.l.b16 %v2499
        %v2540 = vunpack.c.l.b16 %v2500
        %v2541 = vunpack.c.l.b16 %v2501
        %v2542 = vunpack.c.l.b16 %v2502
        %v2543 = vunpack.c.l.b16 %v2503
        %v2544 = vunpack.c.l.b16 %v2504
        %v2545 = vunpack.c.l.b16 %v2505
        %v2546 = vunpack.c.l.b16 %v2506
        %v2547 = vunpack.c.l.b16 %v2507
        %v2548 = vunpack.c.l.b16 %v2508
        %v2549 = vunpack.c.l.b16 %v2509
        %v2550 = vunpack.c.l.b16 %v2510
        %v2551 = vunpack.c.l.b16 %v2511
        %v2552 = vunpack.c.l.b16 %v2512
        %v2553 = vunpack.c.l.b16 %v2513
        %v2554 = vpack.c.b16 %v2539, %v2538
        %v2555 = vpack.c.b16 %v2541, %v2540
        %v2556 = vpack.c.b16 %v2543, %v2542
        %v2557 = vpack.c.b16 %v2545, %v2544
        %v2558 = vpack.c.b16 %v2547, %v2546
        %v2559 = vpack.c.b16 %v2549, %v2548
        %v2560 = vpack.c.b16 %v2551, %v2550
        %v2561 = vpack.c.b16 %v2553, %v2552
        %2570 = vmatprep.subr.bf16.mxu0 0
        %2571 = vmatpush1.bf16.msra.mxu0 %v2554
        %2572 = vmatprep.subr.bf16.mxu0 0
        %2573 = vmatpush1.bf16.msra.mxu0 %v2555
        %2574 = vmatprep.subr.bf16.mxu0 0
        %2575 = vmatpush1.bf16.msra.mxu0 %v2556
        %2576 = vmatprep.subr.bf16.mxu0 0
        %2577 = vmatpush1.bf16.msra.mxu0 %v2557
        %2578 = vmatprep.subr.bf16.mxu0 0
        %2579 = vmatpush1.bf16.msra.mxu0 %v2558
        %2580 = vmatprep.subr.bf16.mxu0 0
        %2581 = vmatpush1.bf16.msra.mxu0 %v2559
        %2582 = vmatprep.subr.bf16.mxu0 0
        %2583 = vmatpush1.bf16.msra.mxu0 %v2560
        %2584 = vmatprep.subr.bf16.mxu0 0
        %2585 = vmatpush1.bf16.msra.mxu0 %v2561
        %2586 = vmatprep.subr.bf16.mxu0 0
        %2587 = vmatpush1.bf16.msra.mxu0 0
        %2588 = vmatprep.subr.bf16.mxu0 0
        %2589 = vmatpush1.bf16.msra.mxu0 0
        %2590 = vmatprep.subr.bf16.mxu0 0
        %2591 = vmatpush1.bf16.msra.mxu0 0
        %2592 = vmatprep.subr.bf16.mxu0 0
        %2593 = vmatpush1.bf16.msra.mxu0 0
        %2594 = vmatprep.subr.bf16.mxu0 0
        %2595 = vmatpush1.bf16.msra.mxu0 0
        %2596 = vmatprep.subr.bf16.mxu0 0
        %2597 = vmatpush1.bf16.msra.mxu0 0
        %2598 = vmatprep.subr.bf16.mxu0 0
        %2599 = vmatpush1.bf16.msra.mxu0 0
        %2600 = vmatprep.subr.bf16.mxu0 0
        %2601 = vmatpush1.bf16.msra.mxu0 0
        %2602 = vmatprep.mubr.bf16.mxu0 0
        %2603 = vmatmul.mubr.bf16.gmra.mrb[0].mxu0 %v2496
        %v2604 = vpop.f32.mrb[0].mxu0
        %v2605 = vadd.f32 %v2520, %v2604
        %v2606 = vpop.f32.mrb[0].mxu0
        %v2607 = vpop.f32.mrb[0].mxu0
        %v2608 = vadd.f32 %v2520, %v2607
        %v2609 = vpop.f32.mrb[0].mxu0
        %2610 = vdwg.mxu0
        %v2611 = vadd.f32 %v2360, %v2605
        %v2612 = vadd.f32 %v2361, %v2608
        %v2613 = vld [vmem:[%s15] sm:$0x1]
        %v2614 = vld [vmem:[%s16] sm:$0x1]
        %v2615 = vsel %vm700, %v2611, 0.0
        %2616 = vadd.xlane.f32.xlu0 %v2615
        %v2617 = vpop.xlane.xlu0 %2616
        %v2618 = vsel %vm700, %v2612, 0.0
        %2619 = vadd.xlane.f32.xlu0 %v2618
        %v2620 = vpop.xlane.xlu0 %2619
        %v2621 = vmul.f32 %v2617, %v707
        %v2622 = vmul.f32 %v2620, %v707
        %v2623 = vsub.f32 %v2611, %v2621
        %v2624 = vsub.f32 %v2612, %v2622
        %v2625 = vmul.f32 %v2623, %v2623
        %v2626 = vmul.f32 %v2624, %v2624
        %v2627 = vsel %vm700, %v2625, 0.0
        %2628 = vadd.xlane.f32.xlu0 %v2627
        %v2629 = vpop.xlane.xlu0 %2628
        %v2630 = vsel %vm700, %v2626, 0.0
        %2631 = vadd.xlane.f32.xlu0 %v2630
        %v2632 = vpop.xlane.xlu0 %2631
        %v2633 = vmul.f32 %v2629, %v707
        %v2634 = vmul.f32 %v2632, %v707
        %v2635 = vadd.f32 %v2633, 1e-05
        %v2636 = vadd.f32 %v2634, 1e-05
        %v2637 = vrsqrt.pop %v2635
        %v2638 = vrsqrt.pop %v2636
        %v2639 = vmul.f32 %v2623, %v2637
        %v2640 = vmul.f32 %v2624, %v2638
        %v2642 = vlaneseq
        %v2643 = vshrl.u32 %v2642, 7
        %v2644 = vsub.s32 0, %v2643
        %v2645 = vrot.slane %v2613, %v2644
        %v2647 = vmul.f32 %v2639, %v2645
        %v2648 = vmul.f32 %v2640, %v2645
        %v2650 = vlaneseq
        %v2651 = vshrl.u32 %v2650, 7
        %v2652 = vsub.s32 0, %v2651
        %v2653 = vrot.slane %v2614, %v2652
        %v2655 = vadd.f32 %v2647, %v2653
        %v2656 = vadd.f32 %v2648, %v2653
        %v2657 = vpack.c.bf16 %v2656, %v2655
        %v2658 = vld [vmem:[%s17] sm:$0xf]
        %v2659 = vld [vmem:[%s17 + $0x4] sm:$0xf]
        %v2660 = vld [vmem:[%s17 + $0x8] sm:$0xf]
        %v2661 = vld [vmem:[%s17 + $0xc] sm:$0xf]
        %v2662 = vld [vmem:[%s18] sm:$0x1]
        %v2664 = vlaneseq
        %v2665 = vshrl.u32 %v2664, 7
        %v2666 = vsub.s32 0, %v2665
        %v2667 = vrot.slane %v2662, %v2666
        %v2673 = vunpack.c.l.b16 %v2658
        %v2674 = vunpack.c.l.b16 %v2659
        %v2675 = vunpack.c.l.b16 %v2660
        %v2676 = vunpack.c.l.b16 %v2661
        %v2677 = vpack.c.b16 %v2674, %v2673
        %v2678 = vpack.c.b16 %v2676, %v2675
        %v2682 = vsel %vm700, %v2657, 0
        %2684 = vmatprep.subr.bf16.mxu0 0
        %2685 = vmatpush1.bf16.msra.mxu0 %v2677
        %2686 = vmatprep.subr.bf16.mxu0 0
        %2687 = vmatpush1.bf16.msra.mxu0 %v2678
        %2688 = vmatprep.subr.bf16.mxu0 0
        %2689 = vmatpush1.bf16.msra.mxu0 0
        %2690 = vmatprep.subr.bf16.mxu0 0
        %2691 = vmatpush1.bf16.msra.mxu0 0
        %2692 = vmatprep.subr.bf16.mxu0 0
        %2693 = vmatpush1.bf16.msra.mxu0 0
        %2694 = vmatprep.subr.bf16.mxu0 0
        %2695 = vmatpush1.bf16.msra.mxu0 0
        %2696 = vmatprep.subr.bf16.mxu0 0
        %2697 = vmatpush1.bf16.msra.mxu0 0
        %2698 = vmatprep.subr.bf16.mxu0 0
        %2699 = vmatpush1.bf16.msra.mxu0 0
        %2700 = vmatprep.subr.bf16.mxu0 0
        %2701 = vmatpush1.bf16.msra.mxu0 0
        %2702 = vmatprep.subr.bf16.mxu0 0
        %2703 = vmatpush1.bf16.msra.mxu0 0
        %2704 = vmatprep.subr.bf16.mxu0 0
        %2705 = vmatpush1.bf16.msra.mxu0 0
        %2706 = vmatprep.subr.bf16.mxu0 0
        %2707 = vmatpush1.bf16.msra.mxu0 0
        %2708 = vmatprep.subr.bf16.mxu0 0
        %2709 = vmatpush1.bf16.msra.mxu0 0
        %2710 = vmatprep.subr.bf16.mxu0 0
        %2711 = vmatpush1.bf16.msra.mxu0 0
        %2712 = vmatprep.subr.bf16.mxu0 0
        %2713 = vmatpush1.bf16.msra.mxu0 0
        %2714 = vmatprep.subr.bf16.mxu0 0
        %2715 = vmatpush1.bf16.msra.mxu0 0
        %2716 = vmatprep.mubr.bf16.mxu0 0
        %2717 = vmatmul.mubr.bf16.gmra.mrb[0].mxu0 %v2682
        %v2718 = vpop.f32.mrb[0].mxu0
        %v2719 = vadd.f32 %v2667, %v2718
        %v2720 = vpop.f32.mrb[0].mxu0
        %v2721 = vpop.f32.mrb[0].mxu0
        %v2722 = vadd.f32 %v2667, %v2721
        %v2723 = vpop.f32.mrb[0].mxu0
        %2724 = vdwg.mxu0
        %v2725 = vmax.f32 %v2719, 0.0
        %v2726 = vmax.f32 %v2722, 0.0
        %v2727 = vand.u32 2147483647, %v2719
        %v2728 = vand.u32 2147483647, %v2722
        %v2729 = vsub.f32 0.0, %v2727
        %v2730 = vsub.f32 0.0, %v2728
        %v2731 = vmul.f32 %v2729, 1.442695
        %v2732 = vpow.pop %v2731
        %v2733 = vmul.f32 %v2730, 1.442695
        %v2734 = vpow.pop %v2733
        %v2735 = vadd.f32 %v2732, 1.0
        %v2736 = vlog2.pop %v2735
        %v2737 = vmul.f32 %v2736, 0.6931472
        %v2738 = vmul.f32 -0.5, %v2732
        %v2739 = vadd.f32 %v2738, 1.0
        %v2740 = vmul.f32 %v2739, %v2732
        %v2741 = vand.u32 2147483647, %v2732
        %vm2742 = vcmp.lt.f32.partialorder %v2741, 0.0004427343
        %v2743 = vsel %vm2742, %v2740, %v2737
        %v2744 = vadd.f32 %v2734, 1.0
        %v2745 = vlog2.pop %v2744
        %v2746 = vmul.f32 %v2745, 0.6931472
        %v2747 = vmul.f32 -0.5, %v2734
        %v2748 = vadd.f32 %v2747, 1.0
        %v2749 = vmul.f32 %v2748, %v2734
        %v2750 = vand.u32 2147483647, %v2734
        %vm2751 = vcmp.lt.f32.partialorder %v2750, 0.0004427343
        %v2752 = vsel %vm2751, %v2749, %v2746
        %v2753 = vadd.f32 %v2725, %v2743
        %v2754 = vadd.f32 %v2726, %v2752
        %v2755 = vmul.f32 %v2753, 0.99
        %v2756 = vmul.f32 %v2754, 0.99
        %v2757 = vadd.f32 %v2755, 0.01
        %v2758 = vadd.f32 %v2756, 0.01
        %v2759 = vlaneseq
        %v2760 = vand.u32 %v2759, 127
        %vm2761 = vcmp.ge.s32.totalorder %v2760, 2
        %vm2762 = vcmp.lt.s32.totalorder %v2760, 4
        %vm2763 = vmand %vm2761, %vm2762
        %v2764 = vsel %vm2763, %v2757, %v2719
        %v2765 = vsel %vm2763, %v2758, %v2722
        %2766 = vst [vmem:[%s595] sm:$0xff] %v2764
        %2767 = vst [vmem:[%s595 + $0x8] sm:$0xff] %v2765
        %s2768 = sand.u32 %s445, 1
        %s2769 = scalar_lea.sflag [#allocation3], %s2768
        %s2770 = sand.u32 %s445, 1
        %s2771 = smul.addr %s2770, 16
        %s2772 = scalar_lea.vmem [#allocation2], %s2771
        // Predicated region
        $region97: #{tpu_custom_call.1} parent=95 // pred_check
          %p2773 = pneg %p455
        $region98: #{tpu_custom_call.1} parent=95 // pred_check_branch
          %2775 = sbr.rel (%p2773) target = $region100
        $region99: #{tpu_custom_call.1} parent=95 // pred_region
          %s2777 = ssub.s32 256, 256
          %2778 = vsyncadd %s2769, %s2777
          %s2779 = smul.addr %s33, 2
          %s2780 = smul.addr %s2779, 128
          %s2781 = scalar_lea.hbm %s19, %s2780
          %s2782 = sshll.u32 %s2772, 4
          %s2783 = int_to_ptr.vmem [resolvable:$true] %s2782
          %2788 = dma.vmem_to_hbm [thread:$0]  %s2783, 256, %s2781, %s2769, 128, 128, 8
        $region100: #{tpu_custom_call.1} parent=95 // pred_fallthru
          _
      $region96: #{tpu_custom_call.1} parent=5 // pred_fallthru
        _
      %p2789 = scmp.le.s32.totalorder 2, %s28
      // Predicated region
      $region101: #{tpu_custom_call.1} parent=5 // pred_check
        %p2790 = pneg %p2789
      $region102: #{tpu_custom_call.1} parent=5 // pred_check_branch
        %2792 = sbr.rel (%p2790) target = $region104
      $region103: #{tpu_custom_call.1} parent=5 // pred_region
        %s2793 = ssub.s32 %s28, 2
        // Predicated region
        $region105: #{tpu_custom_call.1} parent=103 // pred_check
          %p2794 = pneg %p461
        $region106: #{tpu_custom_call.1} parent=103 // pred_check_branch
          %2796 = sbr.rel (%p2794) target = $region108
        $region107: #{tpu_custom_call.1} parent=103 // pred_region
          %s2797 = sand.u32 %s446, 1
          %s2798 = scalar_lea.sflag [#allocation3], %s2797
          %s2799 = sand.u32 %s446, 1
          %s2800 = smul.addr %s2799, 16
          %s2801 = scalar_lea.vmem [#allocation2], %s2800
          %2802 = dma.done %s2798, 256
        $region108: #{tpu_custom_call.1} parent=103 // pred_fallthru
          _
      $region104: #{tpu_custom_call.1} parent=5 // pred_fallthru
        _
    $region6: #{tpu_custom_call.1} parent=1 // loop_footer
      %s32 = sadd.s32 1, %s28
    $region7: #{tpu_custom_call.1} parent=1 // loop_footer_branch
      %27 = sbr.rel target = $region3
    $region8: #{tpu_custom_call.1} parent=1 // loop_exit
      _
    %2803 = vsyncpa [#allocation3], 1
    %s2804 = scalar_lea.sflag [#allocation3], 1
    %2805 = vsyncpa %s2804, 1

</llo_original>
